<compile_context>
chip_gen: v5e
topology: v5e:2x2
jax: 0.10.0
libtpu: 0.0.40
codegen_flags: <defaults>
</compile_context>

<pallas_src>
import functools

import jax
import jax.numpy as jnp
from jax.experimental import pallas as pl
from jax.experimental.pallas import tpu as pltpu

BP = 8  # batch rows padded to one sublane tile


def _vmem_specs(n):
    return [pl.BlockSpec(memory_space=pltpu.MemorySpace.VMEM) for _ in range(n)]


# ----------------------------------------------------------------------------- in-kernel helpers
def _highway(x, w_ref, b_ref, E):
    """2-layer highway on a [rows, E] slab. One fused [E, 3E->128] matmul per layer,
    lane-sliced into gate / relu / linear branches (XLU work, otherwise idle)."""
    n_layers = w_ref.shape[0]
    for l in range(n_layers):  # static unroll over layers
        r = jnp.dot(x, w_ref[l], preferred_element_type=jnp.float32) + b_ref[l]
        gate = jax.nn.sigmoid(r[:, 0:E])
        nonlin = jnp.maximum(r[:, E:2 * E], 0.0)
        lin = r[:, 2 * E:3 * E]
        x = gate * nonlin + (1.0 - gate) * lin
    return x


def _lstm_step(zt, c, H):
    """One LSTM cell update given pre-activations zt = x@Wih + h@Whh + b (gate order i,f,g,o)."""
    sg = jax.nn.sigmoid(zt)      # full 4H-lane vreg through the EUP once
    th = jnp.tanh(zt)
    i = sg[:, 0:H]
    f = sg[:, H:2 * H]
    g = th[:, 2 * H:3 * H]
    o = sg[:, 3 * H:4 * H]
    c_new = f * c + i * g
    h_new = o * jnp.tanh(c_new)
    return h_new, c_new


# ----------------------------------------------------------------------------- fused kernel
def paraphraser_kernel(x_all_ref, eps_ref, *refs,
                       T, Td, B, He, Hd, L, E, apply_dropout):
    """Fused forward:
      highway over [enc_src;enc_tgt;dec_src;dec_tgt]      (one pass, shared weights)
      -> encoder LSTM over [src;tgt] at padded batch 16   (shared weights)
      -> fused mu|logvar projection -> z = eps*std + mu, KLD
      -> dec_src LSTM (initial state) and decoder LSTM over [highway(dec_tgt); z]
      -> hoisted vocab projection (single lane-dense [Td*BP, 128] store).
    All intermediates (z, h, c, per-step hidden states) stay in VMEM."""
    if apply_dropout:
        mask_ref, *rest = refs
    else:
        mask_ref, rest = None, list(refs)
    (w_hw_ref, b_hw_ref,
     wih_e_ref, whh_e_ref, b_e_ref, w_mv_ref, b_mv_ref,
     wih_sd_ref, b_sd_ref, whh_s_ref, w_z_ref, whh_d_ref,
     w_out_ref, b_out_ref,
     logits_ref, hT_ref, cT_ref, kld_ref,
     h_buf_ref) = rest

    B2P = 2 * BP
    r_enc = T * B2P
    r_dec_half = Td * BP
    H4 = 4 * Hd

    # ---- shared highway over the whole embedded slab (one pass, weights loaded once) ----
    xh = _highway(x_all_ref[...], w_hw_ref, b_hw_ref, E)
    xh_enc = xh[0:r_enc, :]
    xh_dec = xh[r_enc:r_enc + 2 * r_dec_half, :]

    # ---- encoder LSTM: src & tgt stacked on the (padded) batch axis, hoisted x-projection ----
    zx_e = jnp.dot(xh_enc, wih_e_ref[...], preferred_element_type=jnp.float32) + b_e_ref[...]
    whh_e = whh_e_ref[...]
    h = jnp.zeros((B2P, He), jnp.float32)
    c = jnp.zeros((B2P, He), jnp.float32)
    for t in range(T):  # fully unrolled; per-step slab is a clean (16, 4He) tile
        zt = zx_e[t * B2P:(t + 1) * B2P, :] + jnp.dot(
            h, whh_e, preferred_element_type=jnp.float32)
        h, c = _lstm_step(zt, c, He)

    # ---- fused mu|logvar projection, reparameterized z and KLD (valid rows only) ----
    mv = (jnp.dot(h[0:BP, :], w_mv_ref[0:He, :], preferred_element_type=jnp.float32)
          + jnp.dot(h[BP:B2P, :], w_mv_ref[He:2 * He, :], preferred_element_type=jnp.float32)
          + b_mv_ref[...])                                   # [BP, 2L]
    mu = mv[:, 0:L]
    logvar = mv[:, L:2 * L]
    std = jnp.exp(0.5 * logvar)
    z = eps_ref[...] * std + mu                              # [BP, L]  (stays in VMEM)
    per_b = -0.5 * jnp.sum(logvar - mu * mu - jnp.exp(logvar) + 1.0,
                           axis=1, keepdims=True)            # [BP, 1]
    valid = jax.lax.broadcasted_iota(jnp.int32, (BP, 1), 0) < B
    kld_ref[...] = jnp.sum(jnp.where(valid, per_b, 0.0),
                           axis=0, keepdims=True) * (1.0 / B)

    # ---- decoder: dropout only on highway(dec_tgt); fused 256-lane input projection ----
    if apply_dropout:
        xh_dec = jnp.concatenate(
            [xh_dec[0:r_dec_half, :], xh_dec[r_dec_half:, :] * mask_ref[...]], axis=0)
    # columns 0:4Hd -> dec_src LSTM (+b_s); columns 4Hd:8Hd -> decoder LSTM x-part (+b_d).
    zx_sd = jnp.dot(xh_dec, wih_sd_ref[...],
                    preferred_element_type=jnp.float32) + b_sd_ref[...]

    # build_initial_state: LSTM over dec_src
    whh_s = whh_s_ref[...]
    h = jnp.zeros((BP, Hd), jnp.float32)
    c = jnp.zeros((BP, Hd), jnp.float32)
    for t in range(Td):
        zt = zx_sd[t * BP:(t + 1) * BP, 0:H4] + jnp.dot(
            h, whh_s, preferred_element_type=jnp.float32)
        h, c = _lstm_step(zt, c, Hd)
    # TODO(synk): on v7x the encoder LSTM above and this dec_src LSTM are independent and
    # could run on the two TensorCores via pl.core_map + VMEM_SHARED; single-core here.

    # decoder LSTM over [highway(dec_tgt); z]; the z-part of the input projection is
    # constant over time so it is computed once (bias b_d already folded into zx_sd).
    z_part = jnp.dot(z, w_z_ref[...], preferred_element_type=jnp.float32)    # [BP, 4Hd]
    whh_d = whh_d_ref[...]
    for t in range(Td):
        zt = (zx_sd[(Td + t) * BP:(Td + t + 1) * BP, H4:2 * H4] + z_part
              + jnp.dot(h, whh_d, preferred_element_type=jnp.float32))
        h, c = _lstm_step(zt, c, Hd)
        h_buf_ref[t * BP:(t + 1) * BP, :] = h        # stash for the hoisted vocab matmul
    hT_ref[...] = h
    cT_ref[...] = c

    # ---- hoisted vocab projection: one matmul + one lane/sublane-dense store ----
    logits_ref[...] = (jnp.dot(h_buf_ref[...], w_out_ref[...],
                               preferred_element_type=jnp.float32) + b_out_ref[...])


# ----------------------------------------------------------------------------- model / weights
class Params:
    word_embed_size = 32
    encoder_rnn_size = 32
    decoder_rnn_size = 32
    latent_variable_size = 16
    vocab_size = 64
    highway_layers = 2


def _lstm_weights(key, din, h, scale=0.08):
    k1, k2, k3 = jax.random.split(key, 3)
    # NOTE: single fused bias == (b_ih + b_hh) of a PyTorch LSTM — sum them when porting.
    return (jax.random.normal(k1, (din, 4 * h), jnp.float32) * scale,
            jax.random.normal(k2, (h, 4 * h), jnp.float32) * scale,
            jax.random.normal(k3, (1, 4 * h), jnp.float32) * scale)


def init_weights(params, key):
    E, He, Hd = params.word_embed_size, params.encoder_rnn_size, params.decoder_rnn_size
    L, V, NL = params.latent_variable_size, params.vocab_size, params.highway_layers
    Vp = ((V + 127) // 128) * 128            # lane-dense (128-padded) vocab projection
    E3p = ((3 * E + 127) // 128) * 128       # lane-dense fused highway projection
    ks = jax.random.split(key, 12)
    s = 0.08

    # Highway gate / relu / linear weights fused to one [E, 3E] (128-lane padded) matrix/layer.
    wg = jax.random.normal(ks[0], (NL, E, E), jnp.float32) * s
    bg = jax.random.normal(ks[1], (NL, 1, E), jnp.float32) * s
    wn = jax.random.normal(ks[2], (NL, E, E), jnp.float32) * s
    bn = jax.random.normal(ks[3], (NL, 1, E), jnp.float32) * s
    wl = jax.random.normal(ks[4], (NL, E, E), jnp.float32) * s
    bl = jax.random.normal(ks[5], (NL, 1, E), jnp.float32) * s
    w_hw = jnp.pad(jnp.concatenate([wg, wn, wl], axis=2),
                   ((0, 0), (0, 0), (0, E3p - 3 * E)))
    b_hw = jnp.pad(jnp.concatenate([bg, bn, bl], axis=2),
                   ((0, 0), (0, 0), (0, E3p - 3 * E)))

    wih_e, whh_e, b_e = _lstm_weights(ks[6], E, He)

    # to_mu / to_logvar fused into one [2He, 2L] projection (mu lanes first).
    w_mu = jax.random.normal(ks[7], (2 * He, L), jnp.float32) * s
    w_lv = jax.random.normal(ks[8], (2 * He, L), jnp.float32) * s

    # Decoder: dec_src (initial-state) LSTM and decoder LSTM; their x-input projections are
    # fused to one [E, 8Hd] = [32, 256] matrix; the z-part of the decoder projection stays
    # separate (time-invariant, applied once in-kernel).
    wih_s, whh_s, b_s = _lstm_weights(ks[9], E, Hd)
    wih_d, whh_d, b_d = _lstm_weights(ks[10], E + L, Hd)
    wih_sd = jnp.concatenate([wih_s, wih_d[0:E]], axis=1)      # [E, 8Hd]
    b_sd = jnp.concatenate([b_s, b_d], axis=1)                 # [1, 8Hd]
    w_z = wih_d[E:E + L]                                       # [L, 4Hd]

    # Vocab projection padded to 128 lanes; padded logits are sliced off in the wrapper.
    w_out = jax.random.normal(ks[11], (Hd, V), jnp.float32) * s
    return {
        "hw_w": w_hw, "hw_b": b_hw,
        "enc_lstm": (wih_e, whh_e, b_e),
        "to_mulogvar": (jnp.concatenate([w_mu, w_lv], axis=1),
                        jnp.zeros((1, 2 * L), jnp.float32)),
        "dec_wih_sd": wih_sd, "dec_b_sd": b_sd,
        "dec_whh_s": whh_s, "dec_w_z": w_z, "dec_whh_d": whh_d,
        "out": (jnp.pad(w_out, ((0, 0), (0, Vp - V))), jnp.zeros((1, Vp), jnp.float32)),
    }


# ----------------------------------------------------------------------------- forward wrapper
def _time_major_pad(x):
    """[B, T, E] -> time-major [T, BP, E] with batch rows zero-padded to the sublane tile."""
    B = x.shape[0]
    xt = jnp.transpose(x, (1, 0, 2))
    return jnp.pad(xt, ((0, 0), (0, BP - B), (0, 0)))


@functools.partial(jax.jit, static_argnames=("params", "drop_prob"))
def paraphraser_forward(weights, encoder_input, decoder_input, rng, *, params, drop_prob):
    """Returns (logits [B, Td, vocab], (h_n, c_n) each [1, B, Hd], kld scalar)."""
    E = params.word_embed_size
    He, Hd = params.encoder_rnn_size, params.decoder_rnn_size
    L, V = params.latent_variable_size, params.vocab_size
    src, tgt = encoder_input
    dec_src, dec_tgt = decoder_input
    B, T, _ = src.shape
    Td = dec_src.shape[1]
    assert B <= BP
    k_eps, k_drop = jax.random.split(rng)

    # One embedded slab [enc_src; enc_tgt; dec_src; dec_tgt], time-major, batch padded to 8
    # sublanes so every per-step slice inside the kernel is a clean (8/16, lanes) tile.
    enc = jnp.concatenate([_time_major_pad(src), _time_major_pad(tgt)], axis=1)       # [T,16,E]
    dec = jnp.concatenate([_time_major_pad(dec_src), _time_major_pad(dec_tgt)], axis=0)  # [2Td,8,E]
    x_all = jnp.concatenate([enc.reshape(T * 2 * BP, E), dec.reshape(2 * Td * BP, E)], axis=0)

    eps = jax.random.normal(k_eps, (B, L), jnp.float32)
    eps = jnp.pad(eps, ((0, BP - B), (0, 0)))

    apply_dropout = drop_prob > 0.0
    inputs = [x_all, eps]
    if apply_dropout:
        # TODO(synk): eps / dropout mask could be drawn in-kernel via pltpu.prng_seed +
        # prng_random_bits (seed via SMEM); kept in the wrapper since the PyTorch RNG stream
        # is not reproducible anyway. Only the dec_tgt half gets a mask input.
        keep = jax.random.bernoulli(k_drop, 1.0 - drop_prob, (Td * BP, E))
        inputs.append(keep.astype(jnp.float32) / (1.0 - drop_prob))

    Vp = weights["out"][0].shape[1]
    kern = functools.partial(paraphraser_kernel, T=T, Td=Td, B=B,
                             He=He, Hd=Hd, L=L, E=E, apply_dropout=apply_dropout)
    w_args = (weights["hw_w"], weights["hw_b"],
              *weights["enc_lstm"], *weights["to_mulogvar"],
              weights["dec_wih_sd"], weights["dec_b_sd"], weights["dec_whh_s"],
              weights["dec_w_z"], weights["dec_whh_d"],
              *weights["out"])
    logits_flat, hT, cT, kld = pl.pallas_call(
        kern,
        out_shape=(jax.ShapeDtypeStruct((Td * BP, Vp), jnp.float32),
                   jax.ShapeDtypeStruct((BP, Hd), jnp.float32),
                   jax.ShapeDtypeStruct((BP, Hd), jnp.float32),
                   jax.ShapeDtypeStruct((1, 1), jnp.float32)),
        in_specs=_vmem_specs(len(inputs) + len(w_args)),
        out_specs=tuple(_vmem_specs(4)),
        scratch_shapes=[pltpu.VMEM((Td * BP, Hd), jnp.float32)],
    )(*inputs, *w_args)

    logits = jnp.transpose(logits_flat.reshape(Td, BP, Vp)[:, :B, :V], (1, 0, 2))  # [B,Td,V]
    final_state = (hT[None, :B, :], cT[None, :B, :])          # [num_layers=1, B, Hd]
    return logits, final_state, kld[0, 0]


# ----------------------------------------------------------------------------- main
if __name__ == "__main__":
    params = Params()
    B, T = 2, 8
    Td = T + 1  # decoder sees max_seq_len + 1

    key = jax.random.PRNGKey(0)
    k_w, k_es, k_et, k_ds, k_dt, k_fwd = jax.random.split(key, 6)
    weights = init_weights(params, k_w)

    enc_src = jax.random.normal(k_es, (B, T, params.word_embed_size), jnp.float32)
    enc_tgt = jax.random.normal(k_et, (B, T, params.word_embed_size), jnp.float32)
    dec_src = jax.random.normal(k_ds, (B, Td, params.word_embed_size), jnp.float32)
    dec_tgt = jax.random.normal(k_dt, (B, Td, params.word_embed_size), jnp.float32)

    # inference path (no dropout)
    logits, (h_n, c_n), kld = paraphraser_forward(
        weights, (enc_src, enc_tgt), (dec_src, dec_tgt), k_fwd,
        params=params, drop_prob=0.0)
    jax.block_until_ready((logits, h_n, c_n, kld))
    assert logits.shape == (B, Td, params.vocab_size)
    assert h_n.shape == (1, B, params.decoder_rnn_size)
    assert c_n.shape == (1, B, params.decoder_rnn_size)
    assert kld.shape == ()
    assert bool(jnp.isfinite(kld)) and bool(jnp.all(jnp.isfinite(logits)))

    # training path (dropout on the decoder-target highway output)
    logits_d, _, kld_d = paraphraser_forward(
        weights, (enc_src, enc_tgt), (dec_src, dec_tgt), k_fwd,
        params=params, drop_prob=0.3)
    jax.block_until_ready((logits_d, kld_d))
    assert logits_d.shape == (B, Td, params.vocab_size)
    assert bool(jnp.isfinite(kld_d))

    print("KERNEL_OK")
</pallas_src>

<mosaic_0001>
module attributes {stable_mosaic.version = 11 : i64} {
  func.func @paraphraser_kernel(%arg0: memref<272x32xf32, #tpu.memory_space<vmem>>, %arg1: memref<8x16xf32, #tpu.memory_space<vmem>>, %arg2: memref<2x32x128xf32, #tpu.memory_space<vmem>>, %arg3: memref<2x1x128xf32, #tpu.memory_space<vmem>>, %arg4: memref<32x128xf32, #tpu.memory_space<vmem>>, %arg5: memref<32x128xf32, #tpu.memory_space<vmem>>, %arg6: memref<1x128xf32, #tpu.memory_space<vmem>>, %arg7: memref<64x32xf32, #tpu.memory_space<vmem>>, %arg8: memref<1x32xf32, #tpu.memory_space<vmem>>, %arg9: memref<32x256xf32, #tpu.memory_space<vmem>>, %arg10: memref<1x256xf32, #tpu.memory_space<vmem>>, %arg11: memref<32x128xf32, #tpu.memory_space<vmem>>, %arg12: memref<16x128xf32, #tpu.memory_space<vmem>>, %arg13: memref<32x128xf32, #tpu.memory_space<vmem>>, %arg14: memref<32x128xf32, #tpu.memory_space<vmem>>, %arg15: memref<1x128xf32, #tpu.memory_space<vmem>>, %arg16: memref<72x128xf32, #tpu.memory_space<vmem>>, %arg17: memref<8x32xf32, #tpu.memory_space<vmem>>, %arg18: memref<8x32xf32, #tpu.memory_space<vmem>>, %arg19: memref<1x1xf32, #tpu.memory_space<vmem>>, %arg20: memref<72x32xf32, #tpu.memory_space<vmem>>) attributes {dimension_semantics = [], scalar_prefetch = 0 : i64, scratch_operands = 1 : i64, tpu.core_type = #tpu.core_type<tc>} {
    %c0 = arith.constant 0 : index
    %c0_0 = arith.constant 0 : index
    %0 = vector.load %arg0[%c0, %c0_0] : memref<272x32xf32, #tpu.memory_space<vmem>>, vector<272x32xf32>
    %c0_1 = arith.constant 0 : index
    %c0_2 = arith.constant 0 : index
    %c0_3 = arith.constant 0 : index
    %1 = vector.load %arg2[%c0_1, %c0_2, %c0_3] : memref<2x32x128xf32, #tpu.memory_space<vmem>>, vector<1x32x128xf32>
    %2 = vector.shape_cast %1 : vector<1x32x128xf32> to vector<32x128xf32>
    %cst = arith.constant dense<0.000000e+00> : vector<272x128xf32>
    %3 = tpu.matmul %0, %2, %cst {dimension_numbers = #tpu.dot_dimension_numbers<[1], [0], [0], [1], [0, 0, 1, 1], [], []>} : vector<272x32xf32>, vector<32x128xf32>, vector<272x128xf32> -> vector<272x128xf32>
    %c0_4 = arith.constant 0 : index
    %c0_5 = arith.constant 0 : index
    %c0_6 = arith.constant 0 : index
    %4 = vector.load %arg3[%c0_4, %c0_5, %c0_6] : memref<2x1x128xf32, #tpu.memory_space<vmem>>, vector<1x1x128xf32>
    %5 = vector.shape_cast %4 : vector<1x1x128xf32> to vector<1x128xf32>
    %6 = vector.broadcast %5 : vector<1x128xf32> to vector<272x128xf32>
    %7 = arith.addf %3, %6 : vector<272x128xf32>
    %8 = vector.extract_strided_slice %7 {offsets = [0, 0], sizes = [272, 32], strides = [1, 1]} : vector<272x128xf32> to vector<272x32xf32>
    %9 = arith.negf %8 : vector<272x32xf32>
    %10 = math.exp %9 : vector<272x32xf32>
    %cst_7 = arith.constant 1.000000e+00 : f32
    %11 = vector.broadcast %cst_7 : f32 to vector<272x32xf32>
    %12 = arith.addf %11, %10 : vector<272x32xf32>
    %13 = arith.divf %11, %12 : vector<272x32xf32>
    %14 = vector.extract_strided_slice %7 {offsets = [0, 32], sizes = [272, 32], strides = [1, 1]} : vector<272x128xf32> to vector<272x32xf32>
    %cst_8 = arith.constant 0.000000e+00 : f32
    %15 = vector.broadcast %cst_8 : f32 to vector<272x32xf32>
    %16 = arith.maximumf %14, %15 : vector<272x32xf32>
    %17 = vector.extract_strided_slice %7 {offsets = [0, 64], sizes = [272, 32], strides = [1, 1]} : vector<272x128xf32> to vector<272x32xf32>
    %18 = arith.mulf %13, %16 : vector<272x32xf32>
    %cst_9 = arith.constant 1.000000e+00 : f32
    %19 = vector.broadcast %cst_9 : f32 to vector<272x32xf32>
    %20 = arith.subf %19, %13 : vector<272x32xf32>
    %21 = arith.mulf %20, %17 : vector<272x32xf32>
    %22 = arith.addf %18, %21 : vector<272x32xf32>
    %c1 = arith.constant 1 : index
    %c0_10 = arith.constant 0 : index
    %c0_11 = arith.constant 0 : index
    %23 = vector.load %arg2[%c1, %c0_10, %c0_11] : memref<2x32x128xf32, #tpu.memory_space<vmem>>, vector<1x32x128xf32>
    %24 = vector.shape_cast %23 : vector<1x32x128xf32> to vector<32x128xf32>
    %cst_12 = arith.constant dense<0.000000e+00> : vector<272x128xf32>
    %25 = tpu.matmul %22, %24, %cst_12 {dimension_numbers = #tpu.dot_dimension_numbers<[1], [0], [0], [1], [0, 0, 1, 1], [], []>} : vector<272x32xf32>, vector<32x128xf32>, vector<272x128xf32> -> vector<272x128xf32>
    %c1_13 = arith.constant 1 : index
    %c0_14 = arith.constant 0 : index
    %c0_15 = arith.constant 0 : index
    %26 = vector.load %arg3[%c1_13, %c0_14, %c0_15] : memref<2x1x128xf32, #tpu.memory_space<vmem>>, vector<1x1x128xf32>
    %27 = vector.shape_cast %26 : vector<1x1x128xf32> to vector<1x128xf32>
    %28 = vector.broadcast %27 : vector<1x128xf32> to vector<272x128xf32>
    %29 = arith.addf %25, %28 : vector<272x128xf32>
    %30 = vector.extract_strided_slice %29 {offsets = [0, 0], sizes = [272, 32], strides = [1, 1]} : vector<272x128xf32> to vector<272x32xf32>
    %31 = arith.negf %30 : vector<272x32xf32>
    %32 = math.exp %31 : vector<272x32xf32>
    %cst_16 = arith.constant 1.000000e+00 : f32
    %33 = vector.broadcast %cst_16 : f32 to vector<272x32xf32>
    %34 = arith.addf %33, %32 : vector<272x32xf32>
    %35 = arith.divf %33, %34 : vector<272x32xf32>
    %36 = vector.extract_strided_slice %29 {offsets = [0, 32], sizes = [272, 32], strides = [1, 1]} : vector<272x128xf32> to vector<272x32xf32>
    %cst_17 = arith.constant 0.000000e+00 : f32
    %37 = vector.broadcast %cst_17 : f32 to vector<272x32xf32>
    %38 = arith.maximumf %36, %37 : vector<272x32xf32>
    %39 = vector.extract_strided_slice %29 {offsets = [0, 64], sizes = [272, 32], strides = [1, 1]} : vector<272x128xf32> to vector<272x32xf32>
    %40 = arith.mulf %35, %38 : vector<272x32xf32>
    %cst_18 = arith.constant 1.000000e+00 : f32
    %41 = vector.broadcast %cst_18 : f32 to vector<272x32xf32>
    %42 = arith.subf %41, %35 : vector<272x32xf32>
    %43 = arith.mulf %42, %39 : vector<272x32xf32>
    %44 = arith.addf %40, %43 : vector<272x32xf32>
    %45 = vector.extract_strided_slice %44 {offsets = [0, 0], sizes = [128, 32], strides = [1, 1]} : vector<272x32xf32> to vector<128x32xf32>
    %46 = vector.extract_strided_slice %44 {offsets = [128, 0], sizes = [144, 32], strides = [1, 1]} : vector<272x32xf32> to vector<144x32xf32>
    %c0_19 = arith.constant 0 : index
    %c0_20 = arith.constant 0 : index
    %47 = vector.load %arg4[%c0_19, %c0_20] : memref<32x128xf32, #tpu.memory_space<vmem>>, vector<32x128xf32>
    %cst_21 = arith.constant dense<0.000000e+00> : vector<128x128xf32>
    %48 = tpu.matmul %45, %47, %cst_21 {dimension_numbers = #tpu.dot_dimension_numbers<[1], [0], [0], [1], [0, 0, 1, 1], [], []>} : vector<128x32xf32>, vector<32x128xf32>, vector<128x128xf32> -> vector<128x128xf32>
    %c0_22 = arith.constant 0 : index
    %c0_23 = arith.constant 0 : index
    %49 = vector.load %arg6[%c0_22, %c0_23] : memref<1x128xf32, #tpu.memory_space<vmem>>, vector<1x128xf32>
    %50 = vector.broadcast %49 : vector<1x128xf32> to vector<128x128xf32>
    %51 = arith.addf %48, %50 : vector<128x128xf32>
    %c0_24 = arith.constant 0 : index
    %c0_25 = arith.constant 0 : index
    %52 = vector.load %arg5[%c0_24, %c0_25] : memref<32x128xf32, #tpu.memory_space<vmem>>, vector<32x128xf32>
    %cst_26 = arith.constant 0.000000e+00 : f32
    %53 = vector.broadcast %cst_26 : f32 to vector<16x32xf32>
    %cst_27 = arith.constant 0.000000e+00 : f32
    %54 = vector.broadcast %cst_27 : f32 to vector<16x32xf32>
    %55 = vector.extract_strided_slice %51 {offsets = [0, 0], sizes = [16, 128], strides = [1, 1]} : vector<128x128xf32> to vector<16x128xf32>
    %cst_28 = arith.constant dense<0.000000e+00> : vector<16x128xf32>
    %56 = tpu.matmul %53, %52, %cst_28 {dimension_numbers = #tpu.dot_dimension_numbers<[1], [0], [0], [1], [0, 0, 1, 1], [], []>} : vector<16x32xf32>, vector<32x128xf32>, vector<16x128xf32> -> vector<16x128xf32>
    %57 = arith.addf %55, %56 : vector<16x128xf32>
    %58 = arith.negf %57 : vector<16x128xf32>
    %59 = math.exp %58 : vector<16x128xf32>
    %cst_29 = arith.constant 1.000000e+00 : f32
    %60 = vector.broadcast %cst_29 : f32 to vector<16x128xf32>
    %61 = arith.addf %60, %59 : vector<16x128xf32>
    %62 = arith.divf %60, %61 : vector<16x128xf32>
    %63 = math.tanh %57 : vector<16x128xf32>
    %64 = vector.extract_strided_slice %62 {offsets = [0, 0], sizes = [16, 32], strides = [1, 1]} : vector<16x128xf32> to vector<16x32xf32>
    %65 = vector.extract_strided_slice %62 {offsets = [0, 32], sizes = [16, 32], strides = [1, 1]} : vector<16x128xf32> to vector<16x32xf32>
    %66 = vector.extract_strided_slice %63 {offsets = [0, 64], sizes = [16, 32], strides = [1, 1]} : vector<16x128xf32> to vector<16x32xf32>
    %67 = vector.extract_strided_slice %62 {offsets = [0, 96], sizes = [16, 32], strides = [1, 1]} : vector<16x128xf32> to vector<16x32xf32>
    %68 = arith.mulf %65, %54 : vector<16x32xf32>
    %69 = arith.mulf %64, %66 : vector<16x32xf32>
    %70 = arith.addf %68, %69 : vector<16x32xf32>
    %71 = math.tanh %70 : vector<16x32xf32>
    %72 = arith.mulf %67, %71 : vector<16x32xf32>
    %73 = vector.extract_strided_slice %51 {offsets = [16, 0], sizes = [16, 128], strides = [1, 1]} : vector<128x128xf32> to vector<16x128xf32>
    %cst_30 = arith.constant dense<0.000000e+00> : vector<16x128xf32>
    %74 = tpu.matmul %72, %52, %cst_30 {dimension_numbers = #tpu.dot_dimension_numbers<[1], [0], [0], [1], [0, 0, 1, 1], [], []>} : vector<16x32xf32>, vector<32x128xf32>, vector<16x128xf32> -> vector<16x128xf32>
    %75 = arith.addf %73, %74 : vector<16x128xf32>
    %76 = arith.negf %75 : vector<16x128xf32>
    %77 = math.exp %76 : vector<16x128xf32>
    %cst_31 = arith.constant 1.000000e+00 : f32
    %78 = vector.broadcast %cst_31 : f32 to vector<16x128xf32>
    %79 = arith.addf %78, %77 : vector<16x128xf32>
    %80 = arith.divf %78, %79 : vector<16x128xf32>
    %81 = math.tanh %75 : vector<16x128xf32>
    %82 = vector.extract_strided_slice %80 {offsets = [0, 0], sizes = [16, 32], strides = [1, 1]} : vector<16x128xf32> to vector<16x32xf32>
    %83 = vector.extract_strided_slice %80 {offsets = [0, 32], sizes = [16, 32], strides = [1, 1]} : vector<16x128xf32> to vector<16x32xf32>
    %84 = vector.extract_strided_slice %81 {offsets = [0, 64], sizes = [16, 32], strides = [1, 1]} : vector<16x128xf32> to vector<16x32xf32>
    %85 = vector.extract_strided_slice %80 {offsets = [0, 96], sizes = [16, 32], strides = [1, 1]} : vector<16x128xf32> to vector<16x32xf32>
    %86 = arith.mulf %83, %70 : vector<16x32xf32>
    %87 = arith.mulf %82, %84 : vector<16x32xf32>
    %88 = arith.addf %86, %87 : vector<16x32xf32>
    %89 = math.tanh %88 : vector<16x32xf32>
    %90 = arith.mulf %85, %89 : vector<16x32xf32>
    %91 = vector.extract_strided_slice %51 {offsets = [32, 0], sizes = [16, 128], strides = [1, 1]} : vector<128x128xf32> to vector<16x128xf32>
    %cst_32 = arith.constant dense<0.000000e+00> : vector<16x128xf32>
    %92 = tpu.matmul %90, %52, %cst_32 {dimension_numbers = #tpu.dot_dimension_numbers<[1], [0], [0], [1], [0, 0, 1, 1], [], []>} : vector<16x32xf32>, vector<32x128xf32>, vector<16x128xf32> -> vector<16x128xf32>
    %93 = arith.addf %91, %92 : vector<16x128xf32>
    %94 = arith.negf %93 : vector<16x128xf32>
    %95 = math.exp %94 : vector<16x128xf32>
    %cst_33 = arith.constant 1.000000e+00 : f32
    %96 = vector.broadcast %cst_33 : f32 to vector<16x128xf32>
    %97 = arith.addf %96, %95 : vector<16x128xf32>
    %98 = arith.divf %96, %97 : vector<16x128xf32>
    %99 = math.tanh %93 : vector<16x128xf32>
    %100 = vector.extract_strided_slice %98 {offsets = [0, 0], sizes = [16, 32], strides = [1, 1]} : vector<16x128xf32> to vector<16x32xf32>
    %101 = vector.extract_strided_slice %98 {offsets = [0, 32], sizes = [16, 32], strides = [1, 1]} : vector<16x128xf32> to vector<16x32xf32>
    %102 = vector.extract_strided_slice %99 {offsets = [0, 64], sizes = [16, 32], strides = [1, 1]} : vector<16x128xf32> to vector<16x32xf32>
    %103 = vector.extract_strided_slice %98 {offsets = [0, 96], sizes = [16, 32], strides = [1, 1]} : vector<16x128xf32> to vector<16x32xf32>
    %104 = arith.mulf %101, %88 : vector<16x32xf32>
    %105 = arith.mulf %100, %102 : vector<16x32xf32>
    %106 = arith.addf %104, %105 : vector<16x32xf32>
    %107 = math.tanh %106 : vector<16x32xf32>
    %108 = arith.mulf %103, %107 : vector<16x32xf32>
    %109 = vector.extract_strided_slice %51 {offsets = [48, 0], sizes = [16, 128], strides = [1, 1]} : vector<128x128xf32> to vector<16x128xf32>
    %cst_34 = arith.constant dense<0.000000e+00> : vector<16x128xf32>
    %110 = tpu.matmul %108, %52, %cst_34 {dimension_numbers = #tpu.dot_dimension_numbers<[1], [0], [0], [1], [0, 0, 1, 1], [], []>} : vector<16x32xf32>, vector<32x128xf32>, vector<16x128xf32> -> vector<16x128xf32>
    %111 = arith.addf %109, %110 : vector<16x128xf32>
    %112 = arith.negf %111 : vector<16x128xf32>
    %113 = math.exp %112 : vector<16x128xf32>
    %cst_35 = arith.constant 1.000000e+00 : f32
    %114 = vector.broadcast %cst_35 : f32 to vector<16x128xf32>
    %115 = arith.addf %114, %113 : vector<16x128xf32>
    %116 = arith.divf %114, %115 : vector<16x128xf32>
    %117 = math.tanh %111 : vector<16x128xf32>
    %118 = vector.extract_strided_slice %116 {offsets = [0, 0], sizes = [16, 32], strides = [1, 1]} : vector<16x128xf32> to vector<16x32xf32>
    %119 = vector.extract_strided_slice %116 {offsets = [0, 32], sizes = [16, 32], strides = [1, 1]} : vector<16x128xf32> to vector<16x32xf32>
    %120 = vector.extract_strided_slice %117 {offsets = [0, 64], sizes = [16, 32], strides = [1, 1]} : vector<16x128xf32> to vector<16x32xf32>
    %121 = vector.extract_strided_slice %116 {offsets = [0, 96], sizes = [16, 32], strides = [1, 1]} : vector<16x128xf32> to vector<16x32xf32>
    %122 = arith.mulf %119, %106 : vector<16x32xf32>
    %123 = arith.mulf %118, %120 : vector<16x32xf32>
    %124 = arith.addf %122, %123 : vector<16x32xf32>
    %125 = math.tanh %124 : vector<16x32xf32>
    %126 = arith.mulf %121, %125 : vector<16x32xf32>
    %127 = vector.extract_strided_slice %51 {offsets = [64, 0], sizes = [16, 128], strides = [1, 1]} : vector<128x128xf32> to vector<16x128xf32>
    %cst_36 = arith.constant dense<0.000000e+00> : vector<16x128xf32>
    %128 = tpu.matmul %126, %52, %cst_36 {dimension_numbers = #tpu.dot_dimension_numbers<[1], [0], [0], [1], [0, 0, 1, 1], [], []>} : vector<16x32xf32>, vector<32x128xf32>, vector<16x128xf32> -> vector<16x128xf32>
    %129 = arith.addf %127, %128 : vector<16x128xf32>
    %130 = arith.negf %129 : vector<16x128xf32>
    %131 = math.exp %130 : vector<16x128xf32>
    %cst_37 = arith.constant 1.000000e+00 : f32
    %132 = vector.broadcast %cst_37 : f32 to vector<16x128xf32>
    %133 = arith.addf %132, %131 : vector<16x128xf32>
    %134 = arith.divf %132, %133 : vector<16x128xf32>
    %135 = math.tanh %129 : vector<16x128xf32>
    %136 = vector.extract_strided_slice %134 {offsets = [0, 0], sizes = [16, 32], strides = [1, 1]} : vector<16x128xf32> to vector<16x32xf32>
    %137 = vector.extract_strided_slice %134 {offsets = [0, 32], sizes = [16, 32], strides = [1, 1]} : vector<16x128xf32> to vector<16x32xf32>
    %138 = vector.extract_strided_slice %135 {offsets = [0, 64], sizes = [16, 32], strides = [1, 1]} : vector<16x128xf32> to vector<16x32xf32>
    %139 = vector.extract_strided_slice %134 {offsets = [0, 96], sizes = [16, 32], strides = [1, 1]} : vector<16x128xf32> to vector<16x32xf32>
    %140 = arith.mulf %137, %124 : vector<16x32xf32>
    %141 = arith.mulf %136, %138 : vector<16x32xf32>
    %142 = arith.addf %140, %141 : vector<16x32xf32>
    %143 = math.tanh %142 : vector<16x32xf32>
    %144 = arith.mulf %139, %143 : vector<16x32xf32>
    %145 = vector.extract_strided_slice %51 {offsets = [80, 0], sizes = [16, 128], strides = [1, 1]} : vector<128x128xf32> to vector<16x128xf32>
    %cst_38 = arith.constant dense<0.000000e+00> : vector<16x128xf32>
    %146 = tpu.matmul %144, %52, %cst_38 {dimension_numbers = #tpu.dot_dimension_numbers<[1], [0], [0], [1], [0, 0, 1, 1], [], []>} : vector<16x32xf32>, vector<32x128xf32>, vector<16x128xf32> -> vector<16x128xf32>
    %147 = arith.addf %145, %146 : vector<16x128xf32>
    %148 = arith.negf %147 : vector<16x128xf32>
    %149 = math.exp %148 : vector<16x128xf32>
    %cst_39 = arith.constant 1.000000e+00 : f32
    %150 = vector.broadcast %cst_39 : f32 to vector<16x128xf32>
    %151 = arith.addf %150, %149 : vector<16x128xf32>
    %152 = arith.divf %150, %151 : vector<16x128xf32>
    %153 = math.tanh %147 : vector<16x128xf32>
    %154 = vector.extract_strided_slice %152 {offsets = [0, 0], sizes = [16, 32], strides = [1, 1]} : vector<16x128xf32> to vector<16x32xf32>
    %155 = vector.extract_strided_slice %152 {offsets = [0, 32], sizes = [16, 32], strides = [1, 1]} : vector<16x128xf32> to vector<16x32xf32>
    %156 = vector.extract_strided_slice %153 {offsets = [0, 64], sizes = [16, 32], strides = [1, 1]} : vector<16x128xf32> to vector<16x32xf32>
    %157 = vector.extract_strided_slice %152 {offsets = [0, 96], sizes = [16, 32], strides = [1, 1]} : vector<16x128xf32> to vector<16x32xf32>
    %158 = arith.mulf %155, %142 : vector<16x32xf32>
    %159 = arith.mulf %154, %156 : vector<16x32xf32>
    %160 = arith.addf %158, %159 : vector<16x32xf32>
    %161 = math.tanh %160 : vector<16x32xf32>
    %162 = arith.mulf %157, %161 : vector<16x32xf32>
    %163 = vector.extract_strided_slice %51 {offsets = [96, 0], sizes = [16, 128], strides = [1, 1]} : vector<128x128xf32> to vector<16x128xf32>
    %cst_40 = arith.constant dense<0.000000e+00> : vector<16x128xf32>
    %164 = tpu.matmul %162, %52, %cst_40 {dimension_numbers = #tpu.dot_dimension_numbers<[1], [0], [0], [1], [0, 0, 1, 1], [], []>} : vector<16x32xf32>, vector<32x128xf32>, vector<16x128xf32> -> vector<16x128xf32>
    %165 = arith.addf %163, %164 : vector<16x128xf32>
    %166 = arith.negf %165 : vector<16x128xf32>
    %167 = math.exp %166 : vector<16x128xf32>
    %cst_41 = arith.constant 1.000000e+00 : f32
    %168 = vector.broadcast %cst_41 : f32 to vector<16x128xf32>
    %169 = arith.addf %168, %167 : vector<16x128xf32>
    %170 = arith.divf %168, %169 : vector<16x128xf32>
    %171 = math.tanh %165 : vector<16x128xf32>
    %172 = vector.extract_strided_slice %170 {offsets = [0, 0], sizes = [16, 32], strides = [1, 1]} : vector<16x128xf32> to vector<16x32xf32>
    %173 = vector.extract_strided_slice %170 {offsets = [0, 32], sizes = [16, 32], strides = [1, 1]} : vector<16x128xf32> to vector<16x32xf32>
    %174 = vector.extract_strided_slice %171 {offsets = [0, 64], sizes = [16, 32], strides = [1, 1]} : vector<16x128xf32> to vector<16x32xf32>
    %175 = vector.extract_strided_slice %170 {offsets = [0, 96], sizes = [16, 32], strides = [1, 1]} : vector<16x128xf32> to vector<16x32xf32>
    %176 = arith.mulf %173, %160 : vector<16x32xf32>
    %177 = arith.mulf %172, %174 : vector<16x32xf32>
    %178 = arith.addf %176, %177 : vector<16x32xf32>
    %179 = math.tanh %178 : vector<16x32xf32>
    %180 = arith.mulf %175, %179 : vector<16x32xf32>
    %181 = vector.extract_strided_slice %51 {offsets = [112, 0], sizes = [16, 128], strides = [1, 1]} : vector<128x128xf32> to vector<16x128xf32>
    %cst_42 = arith.constant dense<0.000000e+00> : vector<16x128xf32>
    %182 = tpu.matmul %180, %52, %cst_42 {dimension_numbers = #tpu.dot_dimension_numbers<[1], [0], [0], [1], [0, 0, 1, 1], [], []>} : vector<16x32xf32>, vector<32x128xf32>, vector<16x128xf32> -> vector<16x128xf32>
    %183 = arith.addf %181, %182 : vector<16x128xf32>
    %184 = arith.negf %183 : vector<16x128xf32>
    %185 = math.exp %184 : vector<16x128xf32>
    %cst_43 = arith.constant 1.000000e+00 : f32
    %186 = vector.broadcast %cst_43 : f32 to vector<16x128xf32>
    %187 = arith.addf %186, %185 : vector<16x128xf32>
    %188 = arith.divf %186, %187 : vector<16x128xf32>
    %189 = math.tanh %183 : vector<16x128xf32>
    %190 = vector.extract_strided_slice %188 {offsets = [0, 0], sizes = [16, 32], strides = [1, 1]} : vector<16x128xf32> to vector<16x32xf32>
    %191 = vector.extract_strided_slice %188 {offsets = [0, 32], sizes = [16, 32], strides = [1, 1]} : vector<16x128xf32> to vector<16x32xf32>
    %192 = vector.extract_strided_slice %189 {offsets = [0, 64], sizes = [16, 32], strides = [1, 1]} : vector<16x128xf32> to vector<16x32xf32>
    %193 = vector.extract_strided_slice %188 {offsets = [0, 96], sizes = [16, 32], strides = [1, 1]} : vector<16x128xf32> to vector<16x32xf32>
    %194 = arith.mulf %191, %178 : vector<16x32xf32>
    %195 = arith.mulf %190, %192 : vector<16x32xf32>
    %196 = arith.addf %194, %195 : vector<16x32xf32>
    %197 = math.tanh %196 : vector<16x32xf32>
    %198 = arith.mulf %193, %197 : vector<16x32xf32>
    %199 = vector.extract_strided_slice %198 {offsets = [0, 0], sizes = [8, 32], strides = [1, 1]} : vector<16x32xf32> to vector<8x32xf32>
    %c0_44 = arith.constant 0 : index
    %c0_45 = arith.constant 0 : index
    %200 = vector.load %arg7[%c0_44, %c0_45] : memref<64x32xf32, #tpu.memory_space<vmem>>, vector<32x32xf32>
    %cst_46 = arith.constant dense<0.000000e+00> : vector<8x32xf32>
    %201 = tpu.matmul %199, %200, %cst_46 {dimension_numbers = #tpu.dot_dimension_numbers<[1], [0], [0], [1], [0, 0, 1, 1], [], []>} : vector<8x32xf32>, vector<32x32xf32>, vector<8x32xf32> -> vector<8x32xf32>
    %202 = vector.extract_strided_slice %198 {offsets = [8, 0], sizes = [8, 32], strides = [1, 1]} : vector<16x32xf32> to vector<8x32xf32>
    %c32 = arith.constant 32 : index
    %c0_47 = arith.constant 0 : index
    %203 = vector.load %arg7[%c32, %c0_47] : memref<64x32xf32, #tpu.memory_space<vmem>>, vector<32x32xf32>
    %cst_48 = arith.constant dense<0.000000e+00> : vector<8x32xf32>
    %204 = tpu.matmul %202, %203, %cst_48 {dimension_numbers = #tpu.dot_dimension_numbers<[1], [0], [0], [1], [0, 0, 1, 1], [], []>} : vector<8x32xf32>, vector<32x32xf32>, vector<8x32xf32> -> vector<8x32xf32>
    %205 = arith.addf %201, %204 : vector<8x32xf32>
    %c0_49 = arith.constant 0 : index
    %c0_50 = arith.constant 0 : index
    %206 = vector.load %arg8[%c0_49, %c0_50] : memref<1x32xf32, #tpu.memory_space<vmem>>, vector<1x32xf32>
    %207 = vector.broadcast %206 : vector<1x32xf32> to vector<8x32xf32>
    %208 = arith.addf %205, %207 : vector<8x32xf32>
    %209 = vector.extract_strided_slice %208 {offsets = [0, 0], sizes = [8, 16], strides = [1, 1]} : vector<8x32xf32> to vector<8x16xf32>
    %210 = vector.extract_strided_slice %208 {offsets = [0, 16], sizes = [8, 16], strides = [1, 1]} : vector<8x32xf32> to vector<8x16xf32>
    %cst_51 = arith.constant 5.000000e-01 : f32
    %211 = vector.broadcast %cst_51 : f32 to vector<8x16xf32>
    %212 = arith.mulf %211, %210 : vector<8x16xf32>
    %213 = math.exp %212 : vector<8x16xf32>
    %c0_52 = arith.constant 0 : index
    %c0_53 = arith.constant 0 : index
    %214 = vector.load %arg1[%c0_52, %c0_53] : memref<8x16xf32, #tpu.memory_space<vmem>>, vector<8x16xf32>
    %215 = arith.mulf %214, %213 : vector<8x16xf32>
    %216 = arith.addf %215, %209 : vector<8x16xf32>
    %217 = arith.mulf %209, %209 : vector<8x16xf32>
    %218 = arith.subf %210, %217 : vector<8x16xf32>
    %219 = math.exp %210 : vector<8x16xf32>
    %220 = arith.subf %218, %219 : vector<8x16xf32>
    %cst_54 = arith.constant 1.000000e+00 : f32
    %221 = vector.broadcast %cst_54 : f32 to vector<8x16xf32>
    %222 = arith.addf %220, %221 : vector<8x16xf32>
    %cst_55 = arith.constant dense<0.000000e+00> : vector<8xf32>
    %223 = vector.multi_reduction <add>, %222, %cst_55 [1] : vector<8x16xf32> to vector<8xf32>
    %224 = vector.shape_cast %223 : vector<8xf32> to vector<8x1xf32>
    %cst_56 = arith.constant -5.000000e-01 : f32
    %225 = vector.broadcast %cst_56 : f32 to vector<8x1xf32>
    %226 = arith.mulf %225, %224 : vector<8x1xf32>
    %227 = tpu.iota {dimensions = array<i32: 0>} : vector<8x1xi32>
    %c2_i32 = arith.constant 2 : i32
    %228 = vector.broadcast %c2_i32 : i32 to vector<8x1xi32>
    %229 = arith.cmpi slt, %227, %228 : vector<8x1xi32>
    %cst_57 = arith.constant 0.000000e+00 : f32
    %230 = vector.broadcast %cst_57 : f32 to vector<8x1xf32>
    %231 = arith.select %229, %226, %230 : vector<8x1xi1>, vector<8x1xf32>
    %cst_58 = arith.constant dense<0.000000e+00> : vector<1xf32>
    %232 = vector.multi_reduction <add>, %231, %cst_58 [0] : vector<8x1xf32> to vector<1xf32>
    %233 = vector.shape_cast %232 : vector<1xf32> to vector<1x1xf32>
    %cst_59 = arith.constant 5.000000e-01 : f32
    %234 = vector.broadcast %cst_59 : f32 to vector<1x1xf32>
    %235 = arith.mulf %233, %234 : vector<1x1xf32>
    %c0_60 = arith.constant 0 : index
    %c0_61 = arith.constant 0 : index
    %236 = vector.load %arg19[%c0_60, %c0_61] : memref<1x1xf32, #tpu.memory_space<vmem>>, vector<1x1xf32>
    tpu.vector_store %arg19[%c0_60, %c0_61], %235 {strides = array<i32>} : memref<1x1xf32, #tpu.memory_space<vmem>>, vector<1x1xf32>,
    %c0_62 = arith.constant 0 : index
    %c0_63 = arith.constant 0 : index
    %237 = vector.load %arg9[%c0_62, %c0_63] : memref<32x256xf32, #tpu.memory_space<vmem>>, vector<32x256xf32>
    %cst_64 = arith.constant dense<0.000000e+00> : vector<144x256xf32>
    %238 = tpu.matmul %46, %237, %cst_64 {dimension_numbers = #tpu.dot_dimension_numbers<[1], [0], [0], [1], [0, 0, 1, 1], [], []>} : vector<144x32xf32>, vector<32x256xf32>, vector<144x256xf32> -> vector<144x256xf32>
    %c0_65 = arith.constant 0 : index
    %c0_66 = arith.constant 0 : index
    %239 = vector.load %arg10[%c0_65, %c0_66] : memref<1x256xf32, #tpu.memory_space<vmem>>, vector<1x256xf32>
    %240 = vector.broadcast %239 : vector<1x256xf32> to vector<144x256xf32>
    %241 = arith.addf %238, %240 : vector<144x256xf32>
    %c0_67 = arith.constant 0 : index
    %c0_68 = arith.constant 0 : index
    %242 = vector.load %arg11[%c0_67, %c0_68] : memref<32x128xf32, #tpu.memory_space<vmem>>, vector<32x128xf32>
    %cst_69 = arith.constant 0.000000e+00 : f32
    %243 = vector.broadcast %cst_69 : f32 to vector<8x32xf32>
    %cst_70 = arith.constant 0.000000e+00 : f32
    %244 = vector.broadcast %cst_70 : f32 to vector<8x32xf32>
    %245 = vector.extract_strided_slice %241 {offsets = [0, 0], sizes = [8, 128], strides = [1, 1]} : vector<144x256xf32> to vector<8x128xf32>
    %cst_71 = arith.constant dense<0.000000e+00> : vector<8x128xf32>
    %246 = tpu.matmul %243, %242, %cst_71 {dimension_numbers = #tpu.dot_dimension_numbers<[1], [0], [0], [1], [0, 0, 1, 1], [], []>} : vector<8x32xf32>, vector<32x128xf32>, vector<8x128xf32> -> vector<8x128xf32>
    %247 = arith.addf %245, %246 : vector<8x128xf32>
    %248 = arith.negf %247 : vector<8x128xf32>
    %249 = math.exp %248 : vector<8x128xf32>
    %cst_72 = arith.constant 1.000000e+00 : f32
    %250 = vector.broadcast %cst_72 : f32 to vector<8x128xf32>
    %251 = arith.addf %250, %249 : vector<8x128xf32>
    %252 = arith.divf %250, %251 : vector<8x128xf32>
    %253 = math.tanh %247 : vector<8x128xf32>
    %254 = vector.extract_strided_slice %252 {offsets = [0, 0], sizes = [8, 32], strides = [1, 1]} : vector<8x128xf32> to vector<8x32xf32>
    %255 = vector.extract_strided_slice %252 {offsets = [0, 32], sizes = [8, 32], strides = [1, 1]} : vector<8x128xf32> to vector<8x32xf32>
    %256 = vector.extract_strided_slice %253 {offsets = [0, 64], sizes = [8, 32], strides = [1, 1]} : vector<8x128xf32> to vector<8x32xf32>
    %257 = vector.extract_strided_slice %252 {offsets = [0, 96], sizes = [8, 32], strides = [1, 1]} : vector<8x128xf32> to vector<8x32xf32>
    %258 = arith.mulf %255, %244 : vector<8x32xf32>
    %259 = arith.mulf %254, %256 : vector<8x32xf32>
    %260 = arith.addf %258, %259 : vector<8x32xf32>
    %261 = math.tanh %260 : vector<8x32xf32>
    %262 = arith.mulf %257, %261 : vector<8x32xf32>
    %263 = vector.extract_strided_slice %241 {offsets = [8, 0], sizes = [8, 128], strides = [1, 1]} : vector<144x256xf32> to vector<8x128xf32>
    %cst_73 = arith.constant dense<0.000000e+00> : vector<8x128xf32>
    %264 = tpu.matmul %262, %242, %cst_73 {dimension_numbers = #tpu.dot_dimension_numbers<[1], [0], [0], [1], [0, 0, 1, 1], [], []>} : vector<8x32xf32>, vector<32x128xf32>, vector<8x128xf32> -> vector<8x128xf32>
    %265 = arith.addf %263, %264 : vector<8x128xf32>
    %266 = arith.negf %265 : vector<8x128xf32>
    %267 = math.exp %266 : vector<8x128xf32>
    %cst_74 = arith.constant 1.000000e+00 : f32
    %268 = vector.broadcast %cst_74 : f32 to vector<8x128xf32>
    %269 = arith.addf %268, %267 : vector<8x128xf32>
    %270 = arith.divf %268, %269 : vector<8x128xf32>
    %271 = math.tanh %265 : vector<8x128xf32>
    %272 = vector.extract_strided_slice %270 {offsets = [0, 0], sizes = [8, 32], strides = [1, 1]} : vector<8x128xf32> to vector<8x32xf32>
    %273 = vector.extract_strided_slice %270 {offsets = [0, 32], sizes = [8, 32], strides = [1, 1]} : vector<8x128xf32> to vector<8x32xf32>
    %274 = vector.extract_strided_slice %271 {offsets = [0, 64], sizes = [8, 32], strides = [1, 1]} : vector<8x128xf32> to vector<8x32xf32>
    %275 = vector.extract_strided_slice %270 {offsets = [0, 96], sizes = [8, 32], strides = [1, 1]} : vector<8x128xf32> to vector<8x32xf32>
    %276 = arith.mulf %273, %260 : vector<8x32xf32>
    %277 = arith.mulf %272, %274 : vector<8x32xf32>
    %278 = arith.addf %276, %277 : vector<8x32xf32>
    %279 = math.tanh %278 : vector<8x32xf32>
    %280 = arith.mulf %275, %279 : vector<8x32xf32>
    %281 = vector.extract_strided_slice %241 {offsets = [16, 0], sizes = [8, 128], strides = [1, 1]} : vector<144x256xf32> to vector<8x128xf32>
    %cst_75 = arith.constant dense<0.000000e+00> : vector<8x128xf32>
    %282 = tpu.matmul %280, %242, %cst_75 {dimension_numbers = #tpu.dot_dimension_numbers<[1], [0], [0], [1], [0, 0, 1, 1], [], []>} : vector<8x32xf32>, vector<32x128xf32>, vector<8x128xf32> -> vector<8x128xf32>
    %283 = arith.addf %281, %282 : vector<8x128xf32>
    %284 = arith.negf %283 : vector<8x128xf32>
    %285 = math.exp %284 : vector<8x128xf32>
    %cst_76 = arith.constant 1.000000e+00 : f32
    %286 = vector.broadcast %cst_76 : f32 to vector<8x128xf32>
    %287 = arith.addf %286, %285 : vector<8x128xf32>
    %288 = arith.divf %286, %287 : vector<8x128xf32>
    %289 = math.tanh %283 : vector<8x128xf32>
    %290 = vector.extract_strided_slice %288 {offsets = [0, 0], sizes = [8, 32], strides = [1, 1]} : vector<8x128xf32> to vector<8x32xf32>
    %291 = vector.extract_strided_slice %288 {offsets = [0, 32], sizes = [8, 32], strides = [1, 1]} : vector<8x128xf32> to vector<8x32xf32>
    %292 = vector.extract_strided_slice %289 {offsets = [0, 64], sizes = [8, 32], strides = [1, 1]} : vector<8x128xf32> to vector<8x32xf32>
    %293 = vector.extract_strided_slice %288 {offsets = [0, 96], sizes = [8, 32], strides = [1, 1]} : vector<8x128xf32> to vector<8x32xf32>
    %294 = arith.mulf %291, %278 : vector<8x32xf32>
    %295 = arith.mulf %290, %292 : vector<8x32xf32>
    %296 = arith.addf %294, %295 : vector<8x32xf32>
    %297 = math.tanh %296 : vector<8x32xf32>
    %298 = arith.mulf %293, %297 : vector<8x32xf32>
    %299 = vector.extract_strided_slice %241 {offsets = [24, 0], sizes = [8, 128], strides = [1, 1]} : vector<144x256xf32> to vector<8x128xf32>
    %cst_77 = arith.constant dense<0.000000e+00> : vector<8x128xf32>
    %300 = tpu.matmul %298, %242, %cst_77 {dimension_numbers = #tpu.dot_dimension_numbers<[1], [0], [0], [1], [0, 0, 1, 1], [], []>} : vector<8x32xf32>, vector<32x128xf32>, vector<8x128xf32> -> vector<8x128xf32>
    %301 = arith.addf %299, %300 : vector<8x128xf32>
    %302 = arith.negf %301 : vector<8x128xf32>
    %303 = math.exp %302 : vector<8x128xf32>
    %cst_78 = arith.constant 1.000000e+00 : f32
    %304 = vector.broadcast %cst_78 : f32 to vector<8x128xf32>
    %305 = arith.addf %304, %303 : vector<8x128xf32>
    %306 = arith.divf %304, %305 : vector<8x128xf32>
    %307 = math.tanh %301 : vector<8x128xf32>
    %308 = vector.extract_strided_slice %306 {offsets = [0, 0], sizes = [8, 32], strides = [1, 1]} : vector<8x128xf32> to vector<8x32xf32>
    %309 = vector.extract_strided_slice %306 {offsets = [0, 32], sizes = [8, 32], strides = [1, 1]} : vector<8x128xf32> to vector<8x32xf32>
    %310 = vector.extract_strided_slice %307 {offsets = [0, 64], sizes = [8, 32], strides = [1, 1]} : vector<8x128xf32> to vector<8x32xf32>
    %311 = vector.extract_strided_slice %306 {offsets = [0, 96], sizes = [8, 32], strides = [1, 1]} : vector<8x128xf32> to vector<8x32xf32>
    %312 = arith.mulf %309, %296 : vector<8x32xf32>
    %313 = arith.mulf %308, %310 : vector<8x32xf32>
    %314 = arith.addf %312, %313 : vector<8x32xf32>
    %315 = math.tanh %314 : vector<8x32xf32>
    %316 = arith.mulf %311, %315 : vector<8x32xf32>
    %317 = vector.extract_strided_slice %241 {offsets = [32, 0], sizes = [8, 128], strides = [1, 1]} : vector<144x256xf32> to vector<8x128xf32>
    %cst_79 = arith.constant dense<0.000000e+00> : vector<8x128xf32>
    %318 = tpu.matmul %316, %242, %cst_79 {dimension_numbers = #tpu.dot_dimension_numbers<[1], [0], [0], [1], [0, 0, 1, 1], [], []>} : vector<8x32xf32>, vector<32x128xf32>, vector<8x128xf32> -> vector<8x128xf32>
    %319 = arith.addf %317, %318 : vector<8x128xf32>
    %320 = arith.negf %319 : vector<8x128xf32>
    %321 = math.exp %320 : vector<8x128xf32>
    %cst_80 = arith.constant 1.000000e+00 : f32
    %322 = vector.broadcast %cst_80 : f32 to vector<8x128xf32>
    %323 = arith.addf %322, %321 : vector<8x128xf32>
    %324 = arith.divf %322, %323 : vector<8x128xf32>
    %325 = math.tanh %319 : vector<8x128xf32>
    %326 = vector.extract_strided_slice %324 {offsets = [0, 0], sizes = [8, 32], strides = [1, 1]} : vector<8x128xf32> to vector<8x32xf32>
    %327 = vector.extract_strided_slice %324 {offsets = [0, 32], sizes = [8, 32], strides = [1, 1]} : vector<8x128xf32> to vector<8x32xf32>
    %328 = vector.extract_strided_slice %325 {offsets = [0, 64], sizes = [8, 32], strides = [1, 1]} : vector<8x128xf32> to vector<8x32xf32>
    %329 = vector.extract_strided_slice %324 {offsets = [0, 96], sizes = [8, 32], strides = [1, 1]} : vector<8x128xf32> to vector<8x32xf32>
    %330 = arith.mulf %327, %314 : vector<8x32xf32>
    %331 = arith.mulf %326, %328 : vector<8x32xf32>
    %332 = arith.addf %330, %331 : vector<8x32xf32>
    %333 = math.tanh %332 : vector<8x32xf32>
    %334 = arith.mulf %329, %333 : vector<8x32xf32>
    %335 = vector.extract_strided_slice %241 {offsets = [40, 0], sizes = [8, 128], strides = [1, 1]} : vector<144x256xf32> to vector<8x128xf32>
    %cst_81 = arith.constant dense<0.000000e+00> : vector<8x128xf32>
    %336 = tpu.matmul %334, %242, %cst_81 {dimension_numbers = #tpu.dot_dimension_numbers<[1], [0], [0], [1], [0, 0, 1, 1], [], []>} : vector<8x32xf32>, vector<32x128xf32>, vector<8x128xf32> -> vector<8x128xf32>
    %337 = arith.addf %335, %336 : vector<8x128xf32>
    %338 = arith.negf %337 : vector<8x128xf32>
    %339 = math.exp %338 : vector<8x128xf32>
    %cst_82 = arith.constant 1.000000e+00 : f32
    %340 = vector.broadcast %cst_82 : f32 to vector<8x128xf32>
    %341 = arith.addf %340, %339 : vector<8x128xf32>
    %342 = arith.divf %340, %341 : vector<8x128xf32>
    %343 = math.tanh %337 : vector<8x128xf32>
    %344 = vector.extract_strided_slice %342 {offsets = [0, 0], sizes = [8, 32], strides = [1, 1]} : vector<8x128xf32> to vector<8x32xf32>
    %345 = vector.extract_strided_slice %342 {offsets = [0, 32], sizes = [8, 32], strides = [1, 1]} : vector<8x128xf32> to vector<8x32xf32>
    %346 = vector.extract_strided_slice %343 {offsets = [0, 64], sizes = [8, 32], strides = [1, 1]} : vector<8x128xf32> to vector<8x32xf32>
    %347 = vector.extract_strided_slice %342 {offsets = [0, 96], sizes = [8, 32], strides = [1, 1]} : vector<8x128xf32> to vector<8x32xf32>
    %348 = arith.mulf %345, %332 : vector<8x32xf32>
    %349 = arith.mulf %344, %346 : vector<8x32xf32>
    %350 = arith.addf %348, %349 : vector<8x32xf32>
    %351 = math.tanh %350 : vector<8x32xf32>
    %352 = arith.mulf %347, %351 : vector<8x32xf32>
    %353 = vector.extract_strided_slice %241 {offsets = [48, 0], sizes = [8, 128], strides = [1, 1]} : vector<144x256xf32> to vector<8x128xf32>
    %cst_83 = arith.constant dense<0.000000e+00> : vector<8x128xf32>
    %354 = tpu.matmul %352, %242, %cst_83 {dimension_numbers = #tpu.dot_dimension_numbers<[1], [0], [0], [1], [0, 0, 1, 1], [], []>} : vector<8x32xf32>, vector<32x128xf32>, vector<8x128xf32> -> vector<8x128xf32>
    %355 = arith.addf %353, %354 : vector<8x128xf32>
    %356 = arith.negf %355 : vector<8x128xf32>
    %357 = math.exp %356 : vector<8x128xf32>
    %cst_84 = arith.constant 1.000000e+00 : f32
    %358 = vector.broadcast %cst_84 : f32 to vector<8x128xf32>
    %359 = arith.addf %358, %357 : vector<8x128xf32>
    %360 = arith.divf %358, %359 : vector<8x128xf32>
    %361 = math.tanh %355 : vector<8x128xf32>
    %362 = vector.extract_strided_slice %360 {offsets = [0, 0], sizes = [8, 32], strides = [1, 1]} : vector<8x128xf32> to vector<8x32xf32>
    %363 = vector.extract_strided_slice %360 {offsets = [0, 32], sizes = [8, 32], strides = [1, 1]} : vector<8x128xf32> to vector<8x32xf32>
    %364 = vector.extract_strided_slice %361 {offsets = [0, 64], sizes = [8, 32], strides = [1, 1]} : vector<8x128xf32> to vector<8x32xf32>
    %365 = vector.extract_strided_slice %360 {offsets = [0, 96], sizes = [8, 32], strides = [1, 1]} : vector<8x128xf32> to vector<8x32xf32>
    %366 = arith.mulf %363, %350 : vector<8x32xf32>
    %367 = arith.mulf %362, %364 : vector<8x32xf32>
    %368 = arith.addf %366, %367 : vector<8x32xf32>
    %369 = math.tanh %368 : vector<8x32xf32>
    %370 = arith.mulf %365, %369 : vector<8x32xf32>
    %371 = vector.extract_strided_slice %241 {offsets = [56, 0], sizes = [8, 128], strides = [1, 1]} : vector<144x256xf32> to vector<8x128xf32>
    %cst_85 = arith.constant dense<0.000000e+00> : vector<8x128xf32>
    %372 = tpu.matmul %370, %242, %cst_85 {dimension_numbers = #tpu.dot_dimension_numbers<[1], [0], [0], [1], [0, 0, 1, 1], [], []>} : vector<8x32xf32>, vector<32x128xf32>, vector<8x128xf32> -> vector<8x128xf32>
    %373 = arith.addf %371, %372 : vector<8x128xf32>
    %374 = arith.negf %373 : vector<8x128xf32>
    %375 = math.exp %374 : vector<8x128xf32>
    %cst_86 = arith.constant 1.000000e+00 : f32
    %376 = vector.broadcast %cst_86 : f32 to vector<8x128xf32>
    %377 = arith.addf %376, %375 : vector<8x128xf32>
    %378 = arith.divf %376, %377 : vector<8x128xf32>
    %379 = math.tanh %373 : vector<8x128xf32>
    %380 = vector.extract_strided_slice %378 {offsets = [0, 0], sizes = [8, 32], strides = [1, 1]} : vector<8x128xf32> to vector<8x32xf32>
    %381 = vector.extract_strided_slice %378 {offsets = [0, 32], sizes = [8, 32], strides = [1, 1]} : vector<8x128xf32> to vector<8x32xf32>
    %382 = vector.extract_strided_slice %379 {offsets = [0, 64], sizes = [8, 32], strides = [1, 1]} : vector<8x128xf32> to vector<8x32xf32>
    %383 = vector.extract_strided_slice %378 {offsets = [0, 96], sizes = [8, 32], strides = [1, 1]} : vector<8x128xf32> to vector<8x32xf32>
    %384 = arith.mulf %381, %368 : vector<8x32xf32>
    %385 = arith.mulf %380, %382 : vector<8x32xf32>
    %386 = arith.addf %384, %385 : vector<8x32xf32>
    %387 = math.tanh %386 : vector<8x32xf32>
    %388 = arith.mulf %383, %387 : vector<8x32xf32>
    %389 = vector.extract_strided_slice %241 {offsets = [64, 0], sizes = [8, 128], strides = [1, 1]} : vector<144x256xf32> to vector<8x128xf32>
    %cst_87 = arith.constant dense<0.000000e+00> : vector<8x128xf32>
    %390 = tpu.matmul %388, %242, %cst_87 {dimension_numbers = #tpu.dot_dimension_numbers<[1], [0], [0], [1], [0, 0, 1, 1], [], []>} : vector<8x32xf32>, vector<32x128xf32>, vector<8x128xf32> -> vector<8x128xf32>
    %391 = arith.addf %389, %390 : vector<8x128xf32>
    %392 = arith.negf %391 : vector<8x128xf32>
    %393 = math.exp %392 : vector<8x128xf32>
    %cst_88 = arith.constant 1.000000e+00 : f32
    %394 = vector.broadcast %cst_88 : f32 to vector<8x128xf32>
    %395 = arith.addf %394, %393 : vector<8x128xf32>
    %396 = arith.divf %394, %395 : vector<8x128xf32>
    %397 = math.tanh %391 : vector<8x128xf32>
    %398 = vector.extract_strided_slice %396 {offsets = [0, 0], sizes = [8, 32], strides = [1, 1]} : vector<8x128xf32> to vector<8x32xf32>
    %399 = vector.extract_strided_slice %396 {offsets = [0, 32], sizes = [8, 32], strides = [1, 1]} : vector<8x128xf32> to vector<8x32xf32>
    %400 = vector.extract_strided_slice %397 {offsets = [0, 64], sizes = [8, 32], strides = [1, 1]} : vector<8x128xf32> to vector<8x32xf32>
    %401 = vector.extract_strided_slice %396 {offsets = [0, 96], sizes = [8, 32], strides = [1, 1]} : vector<8x128xf32> to vector<8x32xf32>
    %402 = arith.mulf %399, %386 : vector<8x32xf32>
    %403 = arith.mulf %398, %400 : vector<8x32xf32>
    %404 = arith.addf %402, %403 : vector<8x32xf32>
    %405 = math.tanh %404 : vector<8x32xf32>
    %406 = arith.mulf %401, %405 : vector<8x32xf32>
    %c0_89 = arith.constant 0 : index
    %c0_90 = arith.constant 0 : index
    %407 = vector.load %arg12[%c0_89, %c0_90] : memref<16x128xf32, #tpu.memory_space<vmem>>, vector<16x128xf32>
    %cst_91 = arith.constant dense<0.000000e+00> : vector<8x128xf32>
    %408 = tpu.matmul %216, %407, %cst_91 {dimension_numbers = #tpu.dot_dimension_numbers<[1], [0], [0], [1], [0, 0, 1, 1], [], []>} : vector<8x16xf32>, vector<16x128xf32>, vector<8x128xf32> -> vector<8x128xf32>
    %c0_92 = arith.constant 0 : index
    %c0_93 = arith.constant 0 : index
    %409 = vector.load %arg13[%c0_92, %c0_93] : memref<32x128xf32, #tpu.memory_space<vmem>>, vector<32x128xf32>
    %410 = vector.extract_strided_slice %241 {offsets = [72, 128], sizes = [8, 128], strides = [1, 1]} : vector<144x256xf32> to vector<8x128xf32>
    %411 = arith.addf %410, %408 : vector<8x128xf32>
    %cst_94 = arith.constant dense<0.000000e+00> : vector<8x128xf32>
    %412 = tpu.matmul %406, %409, %cst_94 {dimension_numbers = #tpu.dot_dimension_numbers<[1], [0], [0], [1], [0, 0, 1, 1], [], []>} : vector<8x32xf32>, vector<32x128xf32>, vector<8x128xf32> -> vector<8x128xf32>
    %413 = arith.addf %411, %412 : vector<8x128xf32>
    %414 = arith.negf %413 : vector<8x128xf32>
    %415 = math.exp %414 : vector<8x128xf32>
    %cst_95 = arith.constant 1.000000e+00 : f32
    %416 = vector.broadcast %cst_95 : f32 to vector<8x128xf32>
    %417 = arith.addf %416, %415 : vector<8x128xf32>
    %418 = arith.divf %416, %417 : vector<8x128xf32>
    %419 = math.tanh %413 : vector<8x128xf32>
    %420 = vector.extract_strided_slice %418 {offsets = [0, 0], sizes = [8, 32], strides = [1, 1]} : vector<8x128xf32> to vector<8x32xf32>
    %421 = vector.extract_strided_slice %418 {offsets = [0, 32], sizes = [8, 32], strides = [1, 1]} : vector<8x128xf32> to vector<8x32xf32>
    %422 = vector.extract_strided_slice %419 {offsets = [0, 64], sizes = [8, 32], strides = [1, 1]} : vector<8x128xf32> to vector<8x32xf32>
    %423 = vector.extract_strided_slice %418 {offsets = [0, 96], sizes = [8, 32], strides = [1, 1]} : vector<8x128xf32> to vector<8x32xf32>
    %424 = arith.mulf %421, %404 : vector<8x32xf32>
    %425 = arith.mulf %420, %422 : vector<8x32xf32>
    %426 = arith.addf %424, %425 : vector<8x32xf32>
    %427 = math.tanh %426 : vector<8x32xf32>
    %428 = arith.mulf %423, %427 : vector<8x32xf32>
    %c0_96 = arith.constant 0 : index
    %c0_97 = arith.constant 0 : index
    %429 = vector.load %arg20[%c0_96, %c0_97] : memref<72x32xf32, #tpu.memory_space<vmem>>, vector<8x32xf32>
    tpu.vector_store %arg20[%c0_96, %c0_97], %428 {strides = array<i32>} : memref<72x32xf32, #tpu.memory_space<vmem>>, vector<8x32xf32>,
    %430 = vector.extract_strided_slice %241 {offsets = [80, 128], sizes = [8, 128], strides = [1, 1]} : vector<144x256xf32> to vector<8x128xf32>
    %431 = arith.addf %430, %408 : vector<8x128xf32>
    %cst_98 = arith.constant dense<0.000000e+00> : vector<8x128xf32>
    %432 = tpu.matmul %428, %409, %cst_98 {dimension_numbers = #tpu.dot_dimension_numbers<[1], [0], [0], [1], [0, 0, 1, 1], [], []>} : vector<8x32xf32>, vector<32x128xf32>, vector<8x128xf32> -> vector<8x128xf32>
    %433 = arith.addf %431, %432 : vector<8x128xf32>
    %434 = arith.negf %433 : vector<8x128xf32>
    %435 = math.exp %434 : vector<8x128xf32>
    %cst_99 = arith.constant 1.000000e+00 : f32
    %436 = vector.broadcast %cst_99 : f32 to vector<8x128xf32>
    %437 = arith.addf %436, %435 : vector<8x128xf32>
    %438 = arith.divf %436, %437 : vector<8x128xf32>
    %439 = math.tanh %433 : vector<8x128xf32>
    %440 = vector.extract_strided_slice %438 {offsets = [0, 0], sizes = [8, 32], strides = [1, 1]} : vector<8x128xf32> to vector<8x32xf32>
    %441 = vector.extract_strided_slice %438 {offsets = [0, 32], sizes = [8, 32], strides = [1, 1]} : vector<8x128xf32> to vector<8x32xf32>
    %442 = vector.extract_strided_slice %439 {offsets = [0, 64], sizes = [8, 32], strides = [1, 1]} : vector<8x128xf32> to vector<8x32xf32>
    %443 = vector.extract_strided_slice %438 {offsets = [0, 96], sizes = [8, 32], strides = [1, 1]} : vector<8x128xf32> to vector<8x32xf32>
    %444 = arith.mulf %441, %426 : vector<8x32xf32>
    %445 = arith.mulf %440, %442 : vector<8x32xf32>
    %446 = arith.addf %444, %445 : vector<8x32xf32>
    %447 = math.tanh %446 : vector<8x32xf32>
    %448 = arith.mulf %443, %447 : vector<8x32xf32>
    %c8 = arith.constant 8 : index
    %c0_100 = arith.constant 0 : index
    %449 = vector.load %arg20[%c8, %c0_100] : memref<72x32xf32, #tpu.memory_space<vmem>>, vector<8x32xf32>
    tpu.vector_store %arg20[%c8, %c0_100], %448 {strides = array<i32>} : memref<72x32xf32, #tpu.memory_space<vmem>>, vector<8x32xf32>,
    %450 = vector.extract_strided_slice %241 {offsets = [88, 128], sizes = [8, 128], strides = [1, 1]} : vector<144x256xf32> to vector<8x128xf32>
    %451 = arith.addf %450, %408 : vector<8x128xf32>
    %cst_101 = arith.constant dense<0.000000e+00> : vector<8x128xf32>
    %452 = tpu.matmul %448, %409, %cst_101 {dimension_numbers = #tpu.dot_dimension_numbers<[1], [0], [0], [1], [0, 0, 1, 1], [], []>} : vector<8x32xf32>, vector<32x128xf32>, vector<8x128xf32> -> vector<8x128xf32>
    %453 = arith.addf %451, %452 : vector<8x128xf32>
    %454 = arith.negf %453 : vector<8x128xf32>
    %455 = math.exp %454 : vector<8x128xf32>
    %cst_102 = arith.constant 1.000000e+00 : f32
    %456 = vector.broadcast %cst_102 : f32 to vector<8x128xf32>
    %457 = arith.addf %456, %455 : vector<8x128xf32>
    %458 = arith.divf %456, %457 : vector<8x128xf32>
    %459 = math.tanh %453 : vector<8x128xf32>
    %460 = vector.extract_strided_slice %458 {offsets = [0, 0], sizes = [8, 32], strides = [1, 1]} : vector<8x128xf32> to vector<8x32xf32>
    %461 = vector.extract_strided_slice %458 {offsets = [0, 32], sizes = [8, 32], strides = [1, 1]} : vector<8x128xf32> to vector<8x32xf32>
    %462 = vector.extract_strided_slice %459 {offsets = [0, 64], sizes = [8, 32], strides = [1, 1]} : vector<8x128xf32> to vector<8x32xf32>
    %463 = vector.extract_strided_slice %458 {offsets = [0, 96], sizes = [8, 32], strides = [1, 1]} : vector<8x128xf32> to vector<8x32xf32>
    %464 = arith.mulf %461, %446 : vector<8x32xf32>
    %465 = arith.mulf %460, %462 : vector<8x32xf32>
    %466 = arith.addf %464, %465 : vector<8x32xf32>
    %467 = math.tanh %466 : vector<8x32xf32>
    %468 = arith.mulf %463, %467 : vector<8x32xf32>
    %c16 = arith.constant 16 : index
    %c0_103 = arith.constant 0 : index
    %469 = vector.load %arg20[%c16, %c0_103] : memref<72x32xf32, #tpu.memory_space<vmem>>, vector<8x32xf32>
    tpu.vector_store %arg20[%c16, %c0_103], %468 {strides = array<i32>} : memref<72x32xf32, #tpu.memory_space<vmem>>, vector<8x32xf32>,
    %470 = vector.extract_strided_slice %241 {offsets = [96, 128], sizes = [8, 128], strides = [1, 1]} : vector<144x256xf32> to vector<8x128xf32>
    %471 = arith.addf %470, %408 : vector<8x128xf32>
    %cst_104 = arith.constant dense<0.000000e+00> : vector<8x128xf32>
    %472 = tpu.matmul %468, %409, %cst_104 {dimension_numbers = #tpu.dot_dimension_numbers<[1], [0], [0], [1], [0, 0, 1, 1], [], []>} : vector<8x32xf32>, vector<32x128xf32>, vector<8x128xf32> -> vector<8x128xf32>
    %473 = arith.addf %471, %472 : vector<8x128xf32>
    %474 = arith.negf %473 : vector<8x128xf32>
    %475 = math.exp %474 : vector<8x128xf32>
    %cst_105 = arith.constant 1.000000e+00 : f32
    %476 = vector.broadcast %cst_105 : f32 to vector<8x128xf32>
    %477 = arith.addf %476, %475 : vector<8x128xf32>
    %478 = arith.divf %476, %477 : vector<8x128xf32>
    %479 = math.tanh %473 : vector<8x128xf32>
    %480 = vector.extract_strided_slice %478 {offsets = [0, 0], sizes = [8, 32], strides = [1, 1]} : vector<8x128xf32> to vector<8x32xf32>
    %481 = vector.extract_strided_slice %478 {offsets = [0, 32], sizes = [8, 32], strides = [1, 1]} : vector<8x128xf32> to vector<8x32xf32>
    %482 = vector.extract_strided_slice %479 {offsets = [0, 64], sizes = [8, 32], strides = [1, 1]} : vector<8x128xf32> to vector<8x32xf32>
    %483 = vector.extract_strided_slice %478 {offsets = [0, 96], sizes = [8, 32], strides = [1, 1]} : vector<8x128xf32> to vector<8x32xf32>
    %484 = arith.mulf %481, %466 : vector<8x32xf32>
    %485 = arith.mulf %480, %482 : vector<8x32xf32>
    %486 = arith.addf %484, %485 : vector<8x32xf32>
    %487 = math.tanh %486 : vector<8x32xf32>
    %488 = arith.mulf %483, %487 : vector<8x32xf32>
    %c24 = arith.constant 24 : index
    %c0_106 = arith.constant 0 : index
    %489 = vector.load %arg20[%c24, %c0_106] : memref<72x32xf32, #tpu.memory_space<vmem>>, vector<8x32xf32>
    tpu.vector_store %arg20[%c24, %c0_106], %488 {strides = array<i32>} : memref<72x32xf32, #tpu.memory_space<vmem>>, vector<8x32xf32>,
    %490 = vector.extract_strided_slice %241 {offsets = [104, 128], sizes = [8, 128], strides = [1, 1]} : vector<144x256xf32> to vector<8x128xf32>
    %491 = arith.addf %490, %408 : vector<8x128xf32>
    %cst_107 = arith.constant dense<0.000000e+00> : vector<8x128xf32>
    %492 = tpu.matmul %488, %409, %cst_107 {dimension_numbers = #tpu.dot_dimension_numbers<[1], [0], [0], [1], [0, 0, 1, 1], [], []>} : vector<8x32xf32>, vector<32x128xf32>, vector<8x128xf32> -> vector<8x128xf32>
    %493 = arith.addf %491, %492 : vector<8x128xf32>
    %494 = arith.negf %493 : vector<8x128xf32>
    %495 = math.exp %494 : vector<8x128xf32>
    %cst_108 = arith.constant 1.000000e+00 : f32
    %496 = vector.broadcast %cst_108 : f32 to vector<8x128xf32>
    %497 = arith.addf %496, %495 : vector<8x128xf32>
    %498 = arith.divf %496, %497 : vector<8x128xf32>
    %499 = math.tanh %493 : vector<8x128xf32>
    %500 = vector.extract_strided_slice %498 {offsets = [0, 0], sizes = [8, 32], strides = [1, 1]} : vector<8x128xf32> to vector<8x32xf32>
    %501 = vector.extract_strided_slice %498 {offsets = [0, 32], sizes = [8, 32], strides = [1, 1]} : vector<8x128xf32> to vector<8x32xf32>
    %502 = vector.extract_strided_slice %499 {offsets = [0, 64], sizes = [8, 32], strides = [1, 1]} : vector<8x128xf32> to vector<8x32xf32>
    %503 = vector.extract_strided_slice %498 {offsets = [0, 96], sizes = [8, 32], strides = [1, 1]} : vector<8x128xf32> to vector<8x32xf32>
    %504 = arith.mulf %501, %486 : vector<8x32xf32>
    %505 = arith.mulf %500, %502 : vector<8x32xf32>
    %506 = arith.addf %504, %505 : vector<8x32xf32>
    %507 = math.tanh %506 : vector<8x32xf32>
    %508 = arith.mulf %503, %507 : vector<8x32xf32>
    %c32_109 = arith.constant 32 : index
    %c0_110 = arith.constant 0 : index
    %509 = vector.load %arg20[%c32_109, %c0_110] : memref<72x32xf32, #tpu.memory_space<vmem>>, vector<8x32xf32>
    tpu.vector_store %arg20[%c32_109, %c0_110], %508 {strides = array<i32>} : memref<72x32xf32, #tpu.memory_space<vmem>>, vector<8x32xf32>,
    %510 = vector.extract_strided_slice %241 {offsets = [112, 128], sizes = [8, 128], strides = [1, 1]} : vector<144x256xf32> to vector<8x128xf32>
    %511 = arith.addf %510, %408 : vector<8x128xf32>
    %cst_111 = arith.constant dense<0.000000e+00> : vector<8x128xf32>
    %512 = tpu.matmul %508, %409, %cst_111 {dimension_numbers = #tpu.dot_dimension_numbers<[1], [0], [0], [1], [0, 0, 1, 1], [], []>} : vector<8x32xf32>, vector<32x128xf32>, vector<8x128xf32> -> vector<8x128xf32>
    %513 = arith.addf %511, %512 : vector<8x128xf32>
    %514 = arith.negf %513 : vector<8x128xf32>
    %515 = math.exp %514 : vector<8x128xf32>
    %cst_112 = arith.constant 1.000000e+00 : f32
    %516 = vector.broadcast %cst_112 : f32 to vector<8x128xf32>
    %517 = arith.addf %516, %515 : vector<8x128xf32>
    %518 = arith.divf %516, %517 : vector<8x128xf32>
    %519 = math.tanh %513 : vector<8x128xf32>
    %520 = vector.extract_strided_slice %518 {offsets = [0, 0], sizes = [8, 32], strides = [1, 1]} : vector<8x128xf32> to vector<8x32xf32>
    %521 = vector.extract_strided_slice %518 {offsets = [0, 32], sizes = [8, 32], strides = [1, 1]} : vector<8x128xf32> to vector<8x32xf32>
    %522 = vector.extract_strided_slice %519 {offsets = [0, 64], sizes = [8, 32], strides = [1, 1]} : vector<8x128xf32> to vector<8x32xf32>
    %523 = vector.extract_strided_slice %518 {offsets = [0, 96], sizes = [8, 32], strides = [1, 1]} : vector<8x128xf32> to vector<8x32xf32>
    %524 = arith.mulf %521, %506 : vector<8x32xf32>
    %525 = arith.mulf %520, %522 : vector<8x32xf32>
    %526 = arith.addf %524, %525 : vector<8x32xf32>
    %527 = math.tanh %526 : vector<8x32xf32>
    %528 = arith.mulf %523, %527 : vector<8x32xf32>
    %c40 = arith.constant 40 : index
    %c0_113 = arith.constant 0 : index
    %529 = vector.load %arg20[%c40, %c0_113] : memref<72x32xf32, #tpu.memory_space<vmem>>, vector<8x32xf32>
    tpu.vector_store %arg20[%c40, %c0_113], %528 {strides = array<i32>} : memref<72x32xf32, #tpu.memory_space<vmem>>, vector<8x32xf32>,
    %530 = vector.extract_strided_slice %241 {offsets = [120, 128], sizes = [8, 128], strides = [1, 1]} : vector<144x256xf32> to vector<8x128xf32>
    %531 = arith.addf %530, %408 : vector<8x128xf32>
    %cst_114 = arith.constant dense<0.000000e+00> : vector<8x128xf32>
    %532 = tpu.matmul %528, %409, %cst_114 {dimension_numbers = #tpu.dot_dimension_numbers<[1], [0], [0], [1], [0, 0, 1, 1], [], []>} : vector<8x32xf32>, vector<32x128xf32>, vector<8x128xf32> -> vector<8x128xf32>
    %533 = arith.addf %531, %532 : vector<8x128xf32>
    %534 = arith.negf %533 : vector<8x128xf32>
    %535 = math.exp %534 : vector<8x128xf32>
    %cst_115 = arith.constant 1.000000e+00 : f32
    %536 = vector.broadcast %cst_115 : f32 to vector<8x128xf32>
    %537 = arith.addf %536, %535 : vector<8x128xf32>
    %538 = arith.divf %536, %537 : vector<8x128xf32>
    %539 = math.tanh %533 : vector<8x128xf32>
    %540 = vector.extract_strided_slice %538 {offsets = [0, 0], sizes = [8, 32], strides = [1, 1]} : vector<8x128xf32> to vector<8x32xf32>
    %541 = vector.extract_strided_slice %538 {offsets = [0, 32], sizes = [8, 32], strides = [1, 1]} : vector<8x128xf32> to vector<8x32xf32>
    %542 = vector.extract_strided_slice %539 {offsets = [0, 64], sizes = [8, 32], strides = [1, 1]} : vector<8x128xf32> to vector<8x32xf32>
    %543 = vector.extract_strided_slice %538 {offsets = [0, 96], sizes = [8, 32], strides = [1, 1]} : vector<8x128xf32> to vector<8x32xf32>
    %544 = arith.mulf %541, %526 : vector<8x32xf32>
    %545 = arith.mulf %540, %542 : vector<8x32xf32>
    %546 = arith.addf %544, %545 : vector<8x32xf32>
    %547 = math.tanh %546 : vector<8x32xf32>
    %548 = arith.mulf %543, %547 : vector<8x32xf32>
    %c48 = arith.constant 48 : index
    %c0_116 = arith.constant 0 : index
    %549 = vector.load %arg20[%c48, %c0_116] : memref<72x32xf32, #tpu.memory_space<vmem>>, vector<8x32xf32>
    tpu.vector_store %arg20[%c48, %c0_116], %548 {strides = array<i32>} : memref<72x32xf32, #tpu.memory_space<vmem>>, vector<8x32xf32>,
    %550 = vector.extract_strided_slice %241 {offsets = [128, 128], sizes = [8, 128], strides = [1, 1]} : vector<144x256xf32> to vector<8x128xf32>
    %551 = arith.addf %550, %408 : vector<8x128xf32>
    %cst_117 = arith.constant dense<0.000000e+00> : vector<8x128xf32>
    %552 = tpu.matmul %548, %409, %cst_117 {dimension_numbers = #tpu.dot_dimension_numbers<[1], [0], [0], [1], [0, 0, 1, 1], [], []>} : vector<8x32xf32>, vector<32x128xf32>, vector<8x128xf32> -> vector<8x128xf32>
    %553 = arith.addf %551, %552 : vector<8x128xf32>
    %554 = arith.negf %553 : vector<8x128xf32>
    %555 = math.exp %554 : vector<8x128xf32>
    %cst_118 = arith.constant 1.000000e+00 : f32
    %556 = vector.broadcast %cst_118 : f32 to vector<8x128xf32>
    %557 = arith.addf %556, %555 : vector<8x128xf32>
    %558 = arith.divf %556, %557 : vector<8x128xf32>
    %559 = math.tanh %553 : vector<8x128xf32>
    %560 = vector.extract_strided_slice %558 {offsets = [0, 0], sizes = [8, 32], strides = [1, 1]} : vector<8x128xf32> to vector<8x32xf32>
    %561 = vector.extract_strided_slice %558 {offsets = [0, 32], sizes = [8, 32], strides = [1, 1]} : vector<8x128xf32> to vector<8x32xf32>
    %562 = vector.extract_strided_slice %559 {offsets = [0, 64], sizes = [8, 32], strides = [1, 1]} : vector<8x128xf32> to vector<8x32xf32>
    %563 = vector.extract_strided_slice %558 {offsets = [0, 96], sizes = [8, 32], strides = [1, 1]} : vector<8x128xf32> to vector<8x32xf32>
    %564 = arith.mulf %561, %546 : vector<8x32xf32>
    %565 = arith.mulf %560, %562 : vector<8x32xf32>
    %566 = arith.addf %564, %565 : vector<8x32xf32>
    %567 = math.tanh %566 : vector<8x32xf32>
    %568 = arith.mulf %563, %567 : vector<8x32xf32>
    %c56 = arith.constant 56 : index
    %c0_119 = arith.constant 0 : index
    %569 = vector.load %arg20[%c56, %c0_119] : memref<72x32xf32, #tpu.memory_space<vmem>>, vector<8x32xf32>
    tpu.vector_store %arg20[%c56, %c0_119], %568 {strides = array<i32>} : memref<72x32xf32, #tpu.memory_space<vmem>>, vector<8x32xf32>,
    %570 = vector.extract_strided_slice %241 {offsets = [136, 128], sizes = [8, 128], strides = [1, 1]} : vector<144x256xf32> to vector<8x128xf32>
    %571 = arith.addf %570, %408 : vector<8x128xf32>
    %cst_120 = arith.constant dense<0.000000e+00> : vector<8x128xf32>
    %572 = tpu.matmul %568, %409, %cst_120 {dimension_numbers = #tpu.dot_dimension_numbers<[1], [0], [0], [1], [0, 0, 1, 1], [], []>} : vector<8x32xf32>, vector<32x128xf32>, vector<8x128xf32> -> vector<8x128xf32>
    %573 = arith.addf %571, %572 : vector<8x128xf32>
    %574 = arith.negf %573 : vector<8x128xf32>
    %575 = math.exp %574 : vector<8x128xf32>
    %cst_121 = arith.constant 1.000000e+00 : f32
    %576 = vector.broadcast %cst_121 : f32 to vector<8x128xf32>
    %577 = arith.addf %576, %575 : vector<8x128xf32>
    %578 = arith.divf %576, %577 : vector<8x128xf32>
    %579 = math.tanh %573 : vector<8x128xf32>
    %580 = vector.extract_strided_slice %578 {offsets = [0, 0], sizes = [8, 32], strides = [1, 1]} : vector<8x128xf32> to vector<8x32xf32>
    %581 = vector.extract_strided_slice %578 {offsets = [0, 32], sizes = [8, 32], strides = [1, 1]} : vector<8x128xf32> to vector<8x32xf32>
    %582 = vector.extract_strided_slice %579 {offsets = [0, 64], sizes = [8, 32], strides = [1, 1]} : vector<8x128xf32> to vector<8x32xf32>
    %583 = vector.extract_strided_slice %578 {offsets = [0, 96], sizes = [8, 32], strides = [1, 1]} : vector<8x128xf32> to vector<8x32xf32>
    %584 = arith.mulf %581, %566 : vector<8x32xf32>
    %585 = arith.mulf %580, %582 : vector<8x32xf32>
    %586 = arith.addf %584, %585 : vector<8x32xf32>
    %587 = math.tanh %586 : vector<8x32xf32>
    %588 = arith.mulf %583, %587 : vector<8x32xf32>
    %c64 = arith.constant 64 : index
    %c0_122 = arith.constant 0 : index
    %589 = vector.load %arg20[%c64, %c0_122] : memref<72x32xf32, #tpu.memory_space<vmem>>, vector<8x32xf32>
    tpu.vector_store %arg20[%c64, %c0_122], %588 {strides = array<i32>} : memref<72x32xf32, #tpu.memory_space<vmem>>, vector<8x32xf32>,
    %c0_123 = arith.constant 0 : index
    %c0_124 = arith.constant 0 : index
    %590 = vector.load %arg17[%c0_123, %c0_124] : memref<8x32xf32, #tpu.memory_space<vmem>>, vector<8x32xf32>
    tpu.vector_store %arg17[%c0_123, %c0_124], %588 {strides = array<i32>} : memref<8x32xf32, #tpu.memory_space<vmem>>, vector<8x32xf32>,
    %c0_125 = arith.constant 0 : index
    %c0_126 = arith.constant 0 : index
    %591 = vector.load %arg18[%c0_125, %c0_126] : memref<8x32xf32, #tpu.memory_space<vmem>>, vector<8x32xf32>
    tpu.vector_store %arg18[%c0_125, %c0_126], %586 {strides = array<i32>} : memref<8x32xf32, #tpu.memory_space<vmem>>, vector<8x32xf32>,
    %c0_127 = arith.constant 0 : index
    %c0_128 = arith.constant 0 : index
    %592 = vector.load %arg20[%c0_127, %c0_128] : memref<72x32xf32, #tpu.memory_space<vmem>>, vector<72x32xf32>
    %c0_129 = arith.constant 0 : index
    %c0_130 = arith.constant 0 : index
    %593 = vector.load %arg14[%c0_129, %c0_130] : memref<32x128xf32, #tpu.memory_space<vmem>>, vector<32x128xf32>
    %cst_131 = arith.constant dense<0.000000e+00> : vector<72x128xf32>
    %594 = tpu.matmul %592, %593, %cst_131 {dimension_numbers = #tpu.dot_dimension_numbers<[1], [0], [0], [1], [0, 0, 1, 1], [], []>} : vector<72x32xf32>, vector<32x128xf32>, vector<72x128xf32> -> vector<72x128xf32>
    %c0_132 = arith.constant 0 : index
    %c0_133 = arith.constant 0 : index
    %595 = vector.load %arg15[%c0_132, %c0_133] : memref<1x128xf32, #tpu.memory_space<vmem>>, vector<1x128xf32>
    %596 = vector.broadcast %595 : vector<1x128xf32> to vector<72x128xf32>
    %597 = arith.addf %594, %596 : vector<72x128xf32>
    %c0_134 = arith.constant 0 : index
    %c0_135 = arith.constant 0 : index
    %598 = vector.load %arg16[%c0_134, %c0_135] : memref<72x128xf32, #tpu.memory_space<vmem>>, vector<72x128xf32>
    tpu.vector_store %arg16[%c0_134, %c0_135], %597 {strides = array<i32>} : memref<72x128xf32, #tpu.memory_space<vmem>>, vector<72x128xf32>,
    return
  }
}

</mosaic_0001>

<llo_original>
// kernel: paraphraser_forward.3
$region0: #{paraphraser_forward.3}
  #allocation0 [shape = 'u32[]', space=smem, size = 0x4, offset = 0x4, fixed_abs, tag = 'smem constant byte address 0x4 - core index']
  #allocation1 [shape = 'u32[72,128]{1,0:T(1,128)}', space=vmem, size = 0x9000, scoped, tag = 'internal scratch']
  #allocation2 [shape = 'f32[72,32]{1,0:T(8,128)}', space=vmem, size = 0x9000, scoped, tag = 'scratch operand']
  %s0 = inlined_call_operand.vmem [shape: f32[272,32], index: 0, kind: input, shape index: {}]
  %s1 = inlined_call_operand.vmem [shape: f32[8,16], index: 1, kind: input, shape index: {}]
  %s2 = inlined_call_operand.vmem [shape: f32[2,32,128], index: 2, kind: input, shape index: {}]
  %s3 = inlined_call_operand.vmem [shape: f32[2,1,128], index: 3, kind: input, shape index: {}]
  %s4 = inlined_call_operand.vmem [shape: f32[32,128], index: 4, kind: input, shape index: {}]
  %s5 = inlined_call_operand.vmem [shape: f32[32,128], index: 5, kind: input, shape index: {}]
  %s6 = inlined_call_operand.vmem [shape: f32[1,128], index: 6, kind: input, shape index: {}]
  %s7 = inlined_call_operand.vmem [shape: f32[64,32], index: 7, kind: input, shape index: {}]
  %s8 = inlined_call_operand.vmem [shape: f32[1,32], index: 8, kind: input, shape index: {}]
  %s9 = inlined_call_operand.vmem [shape: f32[32,256], index: 9, kind: input, shape index: {}]
  %s10 = inlined_call_operand.vmem [shape: f32[1,256], index: 10, kind: input, shape index: {}]
  %s11 = inlined_call_operand.vmem [shape: f32[32,128], index: 11, kind: input, shape index: {}]
  %s12 = inlined_call_operand.vmem [shape: f32[16,128], index: 12, kind: input, shape index: {}]
  %s13 = inlined_call_operand.vmem [shape: f32[32,128], index: 13, kind: input, shape index: {}]
  %s14 = inlined_call_operand.vmem [shape: f32[32,128], index: 14, kind: input, shape index: {}]
  %s15 = inlined_call_operand.vmem [shape: f32[1,128], index: 15, kind: input, shape index: {}]
  %s16 = inlined_call_operand.vmem [shape: f32[72,128], index: 16, kind: output, shape index: {0}]
  %s17 = inlined_call_operand.vmem [shape: f32[8,32], index: 17, kind: output, shape index: {1}]
  %s18 = inlined_call_operand.vmem [shape: f32[8,32], index: 18, kind: output, shape index: {2}]
  %s19 = inlined_call_operand.hbm [shape: f32[1,1], index: 19, kind: output, shape index: {3}]
  %20 = xla_tuple %s16, %s17, %s18, %s19
  %s21 = sld [smem:[#allocation0]]
  $region98: #{paraphraser_forward.3} parent=0
    _
  %s23 = ssub.s32 1, %s21
  %s24 = scalar_select 0, %s23, %s21
  $region1: #{paraphraser_forward.3} parent=0
    #allocation3 [shape = 'u8[512]{0}', space=vmem, size = 0x400, scoped, tag = 'output window, operand 3, single buffered']
    #allocation4 [shape = 's32[1]{0}', space=sflag, size = 0x4, scoped, tag = 'scoped memory for paraphraser_forward.3']
    %25 = vsyncpa [#allocation4], 0
    // Predicated region
    $region2: #{paraphraser_forward.3} parent=1 // pred_check
      _
    $region3: #{paraphraser_forward.3} parent=1 // pred_check_branch
      %27 = sbr.rel (0) target = $region5
    $region4: #{paraphraser_forward.3} parent=1 // pred_region
      _
    $region5: #{paraphraser_forward.3} parent=1 // pred_fallthru
      _
    // Predicated region
    $region6: #{paraphraser_forward.3} parent=1 // pred_check
      _
    $region7: #{paraphraser_forward.3} parent=1 // pred_check_branch
      %29 = sbr.rel (0) target = $region9
    $region8: #{paraphraser_forward.3} parent=1 // pred_region
      _
    $region9: #{paraphraser_forward.3} parent=1 // pred_fallthru
      _
    // Predicated region
    $region10: #{paraphraser_forward.3} parent=1 // pred_check
      _
    $region11: #{paraphraser_forward.3} parent=1 // pred_check_branch
      %31 = sbr.rel (0) target = $region13
    $region12: #{paraphraser_forward.3} parent=1 // pred_region
      _
    $region13: #{paraphraser_forward.3} parent=1 // pred_fallthru
      _
    // Predicated region
    $region14: #{paraphraser_forward.3} parent=1 // pred_check
      _
    $region15: #{paraphraser_forward.3} parent=1 // pred_check_branch
      %33 = sbr.rel (0) target = $region17
    $region16: #{paraphraser_forward.3} parent=1 // pred_region
      _
    $region17: #{paraphraser_forward.3} parent=1 // pred_fallthru
      _
    // Predicated region
    $region18: #{paraphraser_forward.3} parent=1 // pred_check
      _
    $region19: #{paraphraser_forward.3} parent=1 // pred_check_branch
      %35 = sbr.rel (0) target = $region21
    $region20: #{paraphraser_forward.3} parent=1 // pred_region
      _
    $region21: #{paraphraser_forward.3} parent=1 // pred_fallthru
      _
    // Predicated region
    $region22: #{paraphraser_forward.3} parent=1 // pred_check
      _
    $region23: #{paraphraser_forward.3} parent=1 // pred_check_branch
      %37 = sbr.rel (0) target = $region25
    $region24: #{paraphraser_forward.3} parent=1 // pred_region
      _
    $region25: #{paraphraser_forward.3} parent=1 // pred_fallthru
      _
    // Predicated region
    $region26: #{paraphraser_forward.3} parent=1 // pred_check
      _
    $region27: #{paraphraser_forward.3} parent=1 // pred_check_branch
      %39 = sbr.rel (0) target = $region29
    $region28: #{paraphraser_forward.3} parent=1 // pred_region
      _
    $region29: #{paraphraser_forward.3} parent=1 // pred_fallthru
      _
    // Predicated region
    $region30: #{paraphraser_forward.3} parent=1 // pred_check
      _
    $region31: #{paraphraser_forward.3} parent=1 // pred_check_branch
      %41 = sbr.rel (0) target = $region33
    $region32: #{paraphraser_forward.3} parent=1 // pred_region
      _
    $region33: #{paraphraser_forward.3} parent=1 // pred_fallthru
      _
    // Predicated region
    $region34: #{paraphraser_forward.3} parent=1 // pred_check
      _
    $region35: #{paraphraser_forward.3} parent=1 // pred_check_branch
      %43 = sbr.rel (0) target = $region37
    $region36: #{paraphraser_forward.3} parent=1 // pred_region
      _
    $region37: #{paraphraser_forward.3} parent=1 // pred_fallthru
      _
    // Predicated region
    $region38: #{paraphraser_forward.3} parent=1 // pred_check
      _
    $region39: #{paraphraser_forward.3} parent=1 // pred_check_branch
      %45 = sbr.rel (0) target = $region41
    $region40: #{paraphraser_forward.3} parent=1 // pred_region
      _
    $region41: #{paraphraser_forward.3} parent=1 // pred_fallthru
      _
    // Predicated region
    $region42: #{paraphraser_forward.3} parent=1 // pred_check
      _
    $region43: #{paraphraser_forward.3} parent=1 // pred_check_branch
      %47 = sbr.rel (0) target = $region45
    $region44: #{paraphraser_forward.3} parent=1 // pred_region
      _
    $region45: #{paraphraser_forward.3} parent=1 // pred_fallthru
      _
    // Predicated region
    $region46: #{paraphraser_forward.3} parent=1 // pred_check
      _
    $region47: #{paraphraser_forward.3} parent=1 // pred_check_branch
      %49 = sbr.rel (0) target = $region49
    $region48: #{paraphraser_forward.3} parent=1 // pred_region
      _
    $region49: #{paraphraser_forward.3} parent=1 // pred_fallthru
      _
    // Predicated region
    $region50: #{paraphraser_forward.3} parent=1 // pred_check
      _
    $region51: #{paraphraser_forward.3} parent=1 // pred_check_branch
      %51 = sbr.rel (0) target = $region53
    $region52: #{paraphraser_forward.3} parent=1 // pred_region
      _
    $region53: #{paraphraser_forward.3} parent=1 // pred_fallthru
      _
    // Predicated region
    $region54: #{paraphraser_forward.3} parent=1 // pred_check
      _
    $region55: #{paraphraser_forward.3} parent=1 // pred_check_branch
      %53 = sbr.rel (0) target = $region57
    $region56: #{paraphraser_forward.3} parent=1 // pred_region
      _
    $region57: #{paraphraser_forward.3} parent=1 // pred_fallthru
      _
    // Predicated region
    $region58: #{paraphraser_forward.3} parent=1 // pred_check
      _
    $region59: #{paraphraser_forward.3} parent=1 // pred_check_branch
      %55 = sbr.rel (0) target = $region61
    $region60: #{paraphraser_forward.3} parent=1 // pred_region
      _
    $region61: #{paraphraser_forward.3} parent=1 // pred_fallthru
      _
    // Predicated region
    $region62: #{paraphraser_forward.3} parent=1 // pred_check
      _
    $region63: #{paraphraser_forward.3} parent=1 // pred_check_branch
      %57 = sbr.rel (0) target = $region65
    $region64: #{paraphraser_forward.3} parent=1 // pred_region
      _
    $region65: #{paraphraser_forward.3} parent=1 // pred_fallthru
      _
    %v58 = vld [vmem:[%s0] sm:$0xff]
    %v59 = vld [vmem:[%s0 + $0x8] sm:$0xff]
    %v60 = vld [vmem:[%s0 + $0x10] sm:$0xff]
    %v61 = vld [vmem:[%s0 + $0x18] sm:$0xff]
    %v62 = vld [vmem:[%s0 + $0x20] sm:$0xff]
    %v63 = vld [vmem:[%s0 + $0x28] sm:$0xff]
    %v64 = vld [vmem:[%s0 + $0x30] sm:$0xff]
    %v65 = vld [vmem:[%s0 + $0x38] sm:$0xff]
    %v66 = vld [vmem:[%s0 + $0x40] sm:$0xff]
    %v67 = vld [vmem:[%s0 + $0x48] sm:$0xff]
    %v68 = vld [vmem:[%s0 + $0x50] sm:$0xff]
    %v69 = vld [vmem:[%s0 + $0x58] sm:$0xff]
    %v70 = vld [vmem:[%s0 + $0x60] sm:$0xff]
    %v71 = vld [vmem:[%s0 + $0x68] sm:$0xff]
    %v72 = vld [vmem:[%s0 + $0x70] sm:$0xff]
    %v73 = vld [vmem:[%s0 + $0x78] sm:$0xff]
    %v74 = vld [vmem:[%s0 + $0x80] sm:$0xff]
    %v75 = vld [vmem:[%s0 + $0x88] sm:$0xff]
    %v76 = vld [vmem:[%s0 + $0x90] sm:$0xff]
    %v77 = vld [vmem:[%s0 + $0x98] sm:$0xff]
    %v78 = vld [vmem:[%s0 + $0xa0] sm:$0xff]
    %v79 = vld [vmem:[%s0 + $0xa8] sm:$0xff]
    %v80 = vld [vmem:[%s0 + $0xb0] sm:$0xff]
    %v81 = vld [vmem:[%s0 + $0xb8] sm:$0xff]
    %v82 = vld [vmem:[%s0 + $0xc0] sm:$0xff]
    %v83 = vld [vmem:[%s0 + $0xc8] sm:$0xff]
    %v84 = vld [vmem:[%s0 + $0xd0] sm:$0xff]
    %v85 = vld [vmem:[%s0 + $0xd8] sm:$0xff]
    %v86 = vld [vmem:[%s0 + $0xe0] sm:$0xff]
    %v87 = vld [vmem:[%s0 + $0xe8] sm:$0xff]
    %v88 = vld [vmem:[%s0 + $0xf0] sm:$0xff]
    %v89 = vld [vmem:[%s0 + $0xf8] sm:$0xff]
    %v90 = vld [vmem:[%s0 + $0x100] sm:$0xff]
    %v91 = vld [vmem:[%s0 + $0x108] sm:$0xff]
    %v92 = vld [vmem:[%s2] sm:$0xff]
    %v93 = vld [vmem:[%s2 + $0x8] sm:$0xff]
    %v94 = vld [vmem:[%s2 + $0x10] sm:$0xff]
    %v95 = vld [vmem:[%s2 + $0x18] sm:$0xff]
    %v96 = vld [vmem:[%s3] sm:$0x1]
    %v98 = vperm.slane %v96, 0
    %vm100 = vcmask 261120
    %v102 = vsel %vm100, %v58, 0
    %v105 = vsel %vm100, %v59, 0
    %v108 = vsel %vm100, %v60, 0
    %v111 = vsel %vm100, %v61, 0
    %v114 = vsel %vm100, %v62, 0
    %v117 = vsel %vm100, %v63, 0
    %v120 = vsel %vm100, %v64, 0
    %v123 = vsel %vm100, %v65, 0
    %v126 = vsel %vm100, %v66, 0
    %v129 = vsel %vm100, %v67, 0
    %v132 = vsel %vm100, %v68, 0
    %v135 = vsel %vm100, %v69, 0
    %v138 = vsel %vm100, %v70, 0
    %v141 = vsel %vm100, %v71, 0
    %v144 = vsel %vm100, %v72, 0
    %v147 = vsel %vm100, %v73, 0
    %v150 = vsel %vm100, %v74, 0
    %v153 = vsel %vm100, %v75, 0
    %v156 = vsel %vm100, %v76, 0
    %v159 = vsel %vm100, %v77, 0
    %v162 = vsel %vm100, %v78, 0
    %v165 = vsel %vm100, %v79, 0
    %v168 = vsel %vm100, %v80, 0
    %v171 = vsel %vm100, %v81, 0
    %v174 = vsel %vm100, %v82, 0
    %v177 = vsel %vm100, %v83, 0
    %v180 = vsel %vm100, %v84, 0
    %v183 = vsel %vm100, %v85, 0
    %v186 = vsel %vm100, %v86, 0
    %v189 = vsel %vm100, %v87, 0
    %v192 = vsel %vm100, %v88, 0
    %v195 = vsel %vm100, %v89, 0
    %v198 = vsel %vm100, %v90, 0
    %v201 = vsel %vm100, %v91, 0
    %203 = vmatpush.msra.mxu0 0.0
    %204 = vmatpush.msra.mxu0 0.0
    %205 = vmatpush.msra.mxu0 0.0
    %206 = vmatpush.msra.mxu0 0.0
    %207 = vmatpush.msra.mxu0 0.0
    %208 = vmatpush.msra.mxu0 0.0
    %209 = vmatpush.msra.mxu0 0.0
    %210 = vmatpush.msra.mxu0 0.0
    %211 = vmatpush.msra.mxu0 0.0
    %212 = vmatpush.msra.mxu0 0.0
    %213 = vmatpush.msra.mxu0 0.0
    %214 = vmatpush.msra.mxu0 0.0
    %215 = vmatpush.msra.mxu0 %v95
    %216 = vmatpush.msra.mxu0 %v94
    %217 = vmatpush.msra.mxu0 %v93
    %218 = vmatpush.msra.mxu0 %v92
    %219 = vmatmul.f32.gmra.mxu0 %v102
    %v220 = vpop.f32.mrf.mxu0
    %v221 = vadd.f32 %v98, %v220
    %222 = vmatmul.f32.gmra.mxu0 %v105
    %v223 = vpop.f32.mrf.mxu0
    %v224 = vadd.f32 %v98, %v223
    %225 = vmatmul.f32.gmra.mxu0 %v108
    %v226 = vpop.f32.mrf.mxu0
    %v227 = vadd.f32 %v98, %v226
    %228 = vmatmul.f32.gmra.mxu0 %v111
    %v229 = vpop.f32.mrf.mxu0
    %v230 = vadd.f32 %v98, %v229
    %231 = vmatmul.f32.gmra.mxu0 %v114
    %v232 = vpop.f32.mrf.mxu0
    %v233 = vadd.f32 %v98, %v232
    %234 = vmatmul.f32.gmra.mxu0 %v117
    %v235 = vpop.f32.mrf.mxu0
    %v236 = vadd.f32 %v98, %v235
    %237 = vmatmul.f32.gmra.mxu0 %v120
    %v238 = vpop.f32.mrf.mxu0
    %v239 = vadd.f32 %v98, %v238
    %240 = vmatmul.f32.gmra.mxu0 %v123
    %v241 = vpop.f32.mrf.mxu0
    %v242 = vadd.f32 %v98, %v241
    %243 = vmatmul.f32.gmra.mxu0 %v126
    %v244 = vpop.f32.mrf.mxu0
    %v245 = vadd.f32 %v98, %v244
    %246 = vmatmul.f32.gmra.mxu0 %v129
    %v247 = vpop.f32.mrf.mxu0
    %v248 = vadd.f32 %v98, %v247
    %249 = vmatmul.f32.gmra.mxu0 %v132
    %v250 = vpop.f32.mrf.mxu0
    %v251 = vadd.f32 %v98, %v250
    %252 = vmatmul.f32.gmra.mxu0 %v135
    %v253 = vpop.f32.mrf.mxu0
    %v254 = vadd.f32 %v98, %v253
    %255 = vmatmul.f32.gmra.mxu0 %v138
    %v256 = vpop.f32.mrf.mxu0
    %v257 = vadd.f32 %v98, %v256
    %258 = vmatmul.f32.gmra.mxu0 %v141
    %v259 = vpop.f32.mrf.mxu0
    %v260 = vadd.f32 %v98, %v259
    %261 = vmatmul.f32.gmra.mxu0 %v144
    %v262 = vpop.f32.mrf.mxu0
    %v263 = vadd.f32 %v98, %v262
    %264 = vmatmul.f32.gmra.mxu0 %v147
    %v265 = vpop.f32.mrf.mxu0
    %v266 = vadd.f32 %v98, %v265
    %267 = vmatmul.f32.gmra.mxu0 %v150
    %v268 = vpop.f32.mrf.mxu0
    %v269 = vadd.f32 %v98, %v268
    %270 = vmatmul.f32.gmra.mxu0 %v153
    %v271 = vpop.f32.mrf.mxu0
    %v272 = vadd.f32 %v98, %v271
    %273 = vmatmul.f32.gmra.mxu0 %v156
    %v274 = vpop.f32.mrf.mxu0
    %v275 = vadd.f32 %v98, %v274
    %276 = vmatmul.f32.gmra.mxu0 %v159
    %v277 = vpop.f32.mrf.mxu0
    %v278 = vadd.f32 %v98, %v277
    %279 = vmatmul.f32.gmra.mxu0 %v162
    %v280 = vpop.f32.mrf.mxu0
    %v281 = vadd.f32 %v98, %v280
    %282 = vmatmul.f32.gmra.mxu0 %v165
    %v283 = vpop.f32.mrf.mxu0
    %v284 = vadd.f32 %v98, %v283
    %285 = vmatmul.f32.gmra.mxu0 %v168
    %v286 = vpop.f32.mrf.mxu0
    %v287 = vadd.f32 %v98, %v286
    %288 = vmatmul.f32.gmra.mxu0 %v171
    %v289 = vpop.f32.mrf.mxu0
    %v290 = vadd.f32 %v98, %v289
    %291 = vmatmul.f32.gmra.mxu0 %v174
    %v292 = vpop.f32.mrf.mxu0
    %v293 = vadd.f32 %v98, %v292
    %294 = vmatmul.f32.gmra.mxu0 %v177
    %v295 = vpop.f32.mrf.mxu0
    %v296 = vadd.f32 %v98, %v295
    %297 = vmatmul.f32.gmra.mxu0 %v180
    %v298 = vpop.f32.mrf.mxu0
    %v299 = vadd.f32 %v98, %v298
    %300 = vmatmul.f32.gmra.mxu0 %v183
    %v301 = vpop.f32.mrf.mxu0
    %v302 = vadd.f32 %v98, %v301
    %303 = vmatmul.f32.gmra.mxu0 %v186
    %v304 = vpop.f32.mrf.mxu0
    %v305 = vadd.f32 %v98, %v304
    %306 = vmatmul.f32.gmra.mxu0 %v189
    %v307 = vpop.f32.mrf.mxu0
    %v308 = vadd.f32 %v98, %v307
    %309 = vmatmul.f32.gmra.mxu0 %v192
    %v310 = vpop.f32.mrf.mxu0
    %v311 = vadd.f32 %v98, %v310
    %312 = vmatmul.f32.gmra.mxu0 %v195
    %v313 = vpop.f32.mrf.mxu0
    %v314 = vadd.f32 %v98, %v313
    %315 = vmatmul.f32.gmra.mxu0 %v198
    %v316 = vpop.f32.mrf.mxu0
    %v317 = vadd.f32 %v98, %v316
    %318 = vmatmul.f32.gmra.mxu0 %v201
    %v319 = vpop.f32.mrf.mxu0
    %v320 = vadd.f32 %v98, %v319
    %321 = vdwg.mxu0
    %v322 = vxor.u32 %v221, 2147483648
    %v323 = vxor.u32 %v224, 2147483648
    %v324 = vxor.u32 %v227, 2147483648
    %v325 = vxor.u32 %v230, 2147483648
    %v326 = vxor.u32 %v233, 2147483648
    %v327 = vxor.u32 %v236, 2147483648
    %v328 = vxor.u32 %v239, 2147483648
    %v329 = vxor.u32 %v242, 2147483648
    %v330 = vxor.u32 %v245, 2147483648
    %v331 = vxor.u32 %v248, 2147483648
    %v332 = vxor.u32 %v251, 2147483648
    %v333 = vxor.u32 %v254, 2147483648
    %v334 = vxor.u32 %v257, 2147483648
    %v335 = vxor.u32 %v260, 2147483648
    %v336 = vxor.u32 %v263, 2147483648
    %v337 = vxor.u32 %v266, 2147483648
    %v338 = vxor.u32 %v269, 2147483648
    %v339 = vxor.u32 %v272, 2147483648
    %v340 = vxor.u32 %v275, 2147483648
    %v341 = vxor.u32 %v278, 2147483648
    %v342 = vxor.u32 %v281, 2147483648
    %v343 = vxor.u32 %v284, 2147483648
    %v344 = vxor.u32 %v287, 2147483648
    %v345 = vxor.u32 %v290, 2147483648
    %v346 = vxor.u32 %v293, 2147483648
    %v347 = vxor.u32 %v296, 2147483648
    %v348 = vxor.u32 %v299, 2147483648
    %v349 = vxor.u32 %v302, 2147483648
    %v350 = vxor.u32 %v305, 2147483648
    %v351 = vxor.u32 %v308, 2147483648
    %v352 = vxor.u32 %v311, 2147483648
    %v353 = vxor.u32 %v314, 2147483648
    %v354 = vxor.u32 %v317, 2147483648
    %v355 = vxor.u32 %v320, 2147483648
    %v356 = vmul.f32 %v322, 1.442695
    %v357 = vpow.pop %v356
    %v358 = vmul.f32 %v323, 1.442695
    %v359 = vpow.pop %v358
    %v360 = vmul.f32 %v324, 1.442695
    %v361 = vpow.pop %v360
    %v362 = vmul.f32 %v325, 1.442695
    %v363 = vpow.pop %v362
    %v364 = vmul.f32 %v326, 1.442695
    %v365 = vpow.pop %v364
    %v366 = vmul.f32 %v327, 1.442695
    %v367 = vpow.pop %v366
    %v368 = vmul.f32 %v328, 1.442695
    %v369 = vpow.pop %v368
    %v370 = vmul.f32 %v329, 1.442695
    %v371 = vpow.pop %v370
    %v372 = vmul.f32 %v330, 1.442695
    %v373 = vpow.pop %v372
    %v374 = vmul.f32 %v331, 1.442695
    %v375 = vpow.pop %v374
    %v376 = vmul.f32 %v332, 1.442695
    %v377 = vpow.pop %v376
    %v378 = vmul.f32 %v333, 1.442695
    %v379 = vpow.pop %v378
    %v380 = vmul.f32 %v334, 1.442695
    %v381 = vpow.pop %v380
    %v382 = vmul.f32 %v335, 1.442695
    %v383 = vpow.pop %v382
    %v384 = vmul.f32 %v336, 1.442695
    %v385 = vpow.pop %v384
    %v386 = vmul.f32 %v337, 1.442695
    %v387 = vpow.pop %v386
    %v388 = vmul.f32 %v338, 1.442695
    %v389 = vpow.pop %v388
    %v390 = vmul.f32 %v339, 1.442695
    %v391 = vpow.pop %v390
    %v392 = vmul.f32 %v340, 1.442695
    %v393 = vpow.pop %v392
    %v394 = vmul.f32 %v341, 1.442695
    %v395 = vpow.pop %v394
    %v396 = vmul.f32 %v342, 1.442695
    %v397 = vpow.pop %v396
    %v398 = vmul.f32 %v343, 1.442695
    %v399 = vpow.pop %v398
    %v400 = vmul.f32 %v344, 1.442695
    %v401 = vpow.pop %v400
    %v402 = vmul.f32 %v345, 1.442695
    %v403 = vpow.pop %v402
    %v404 = vmul.f32 %v346, 1.442695
    %v405 = vpow.pop %v404
    %v406 = vmul.f32 %v347, 1.442695
    %v407 = vpow.pop %v406
    %v408 = vmul.f32 %v348, 1.442695
    %v409 = vpow.pop %v408
    %v410 = vmul.f32 %v349, 1.442695
    %v411 = vpow.pop %v410
    %v412 = vmul.f32 %v350, 1.442695
    %v413 = vpow.pop %v412
    %v414 = vmul.f32 %v351, 1.442695
    %v415 = vpow.pop %v414
    %v416 = vmul.f32 %v352, 1.442695
    %v417 = vpow.pop %v416
    %v418 = vmul.f32 %v353, 1.442695
    %v419 = vpow.pop %v418
    %v420 = vmul.f32 %v354, 1.442695
    %v421 = vpow.pop %v420
    %v422 = vmul.f32 %v355, 1.442695
    %v423 = vpow.pop %v422
    %v424 = vadd.f32 %v357, 1.0
    %v425 = vadd.f32 %v359, 1.0
    %v426 = vadd.f32 %v361, 1.0
    %v427 = vadd.f32 %v363, 1.0
    %v428 = vadd.f32 %v365, 1.0
    %v429 = vadd.f32 %v367, 1.0
    %v430 = vadd.f32 %v369, 1.0
    %v431 = vadd.f32 %v371, 1.0
    %v432 = vadd.f32 %v373, 1.0
    %v433 = vadd.f32 %v375, 1.0
    %v434 = vadd.f32 %v377, 1.0
    %v435 = vadd.f32 %v379, 1.0
    %v436 = vadd.f32 %v381, 1.0
    %v437 = vadd.f32 %v383, 1.0
    %v438 = vadd.f32 %v385, 1.0
    %v439 = vadd.f32 %v387, 1.0
    %v440 = vadd.f32 %v389, 1.0
    %v441 = vadd.f32 %v391, 1.0
    %v442 = vadd.f32 %v393, 1.0
    %v443 = vadd.f32 %v395, 1.0
    %v444 = vadd.f32 %v397, 1.0
    %v445 = vadd.f32 %v399, 1.0
    %v446 = vadd.f32 %v401, 1.0
    %v447 = vadd.f32 %v403, 1.0
    %v448 = vadd.f32 %v405, 1.0
    %v449 = vadd.f32 %v407, 1.0
    %v450 = vadd.f32 %v409, 1.0
    %v451 = vadd.f32 %v411, 1.0
    %v452 = vadd.f32 %v413, 1.0
    %v453 = vadd.f32 %v415, 1.0
    %v454 = vadd.f32 %v417, 1.0
    %v455 = vadd.f32 %v419, 1.0
    %v456 = vadd.f32 %v421, 1.0
    %v457 = vadd.f32 %v423, 1.0
    %v458 = vrcp.pop %v424
    %v459 = vmul.f32 %v424, %v458
    %v460 = vsub.f32 1.0, %v459
    %v461 = vmul.f32 %v458, %v460
    %v462 = vadd.f32 %v458, %v461
    %vm463 = vweird.f32 %v424
    %vm464 = vweird.f32 %v458
    %vm465 = vmor %vm463, %vm464
    %v466 = vsel %vm465, %v458, %v462
    %v467 = vand.u32 2147483647, %v424
    %vm468 = vcmp.eq.f32.partialorder %v467, 8.507059e+37
    %v469 = vand.u32 %v424, 2147483648
    %v470 = vor.u32 1.1754944e-38, %v469
    %v471 = vsel %vm468, %v470, %v466
    %v472 = vmul.f32 1.0, %v471
    %v473 = vrcp.pop %v425
    %v474 = vmul.f32 %v425, %v473
    %v475 = vsub.f32 1.0, %v474
    %v476 = vmul.f32 %v473, %v475
    %v477 = vadd.f32 %v473, %v476
    %vm478 = vweird.f32 %v425
    %vm479 = vweird.f32 %v473
    %vm480 = vmor %vm478, %vm479
    %v481 = vsel %vm480, %v473, %v477
    %v482 = vand.u32 2147483647, %v425
    %vm483 = vcmp.eq.f32.partialorder %v482, 8.507059e+37
    %v484 = vand.u32 %v425, 2147483648
    %v485 = vor.u32 1.1754944e-38, %v484
    %v486 = vsel %vm483, %v485, %v481
    %v487 = vmul.f32 1.0, %v486
    %v488 = vrcp.pop %v426
    %v489 = vmul.f32 %v426, %v488
    %v490 = vsub.f32 1.0, %v489
    %v491 = vmul.f32 %v488, %v490
    %v492 = vadd.f32 %v488, %v491
    %vm493 = vweird.f32 %v426
    %vm494 = vweird.f32 %v488
    %vm495 = vmor %vm493, %vm494
    %v496 = vsel %vm495, %v488, %v492
    %v497 = vand.u32 2147483647, %v426
    %vm498 = vcmp.eq.f32.partialorder %v497, 8.507059e+37
    %v499 = vand.u32 %v426, 2147483648
    %v500 = vor.u32 1.1754944e-38, %v499
    %v501 = vsel %vm498, %v500, %v496
    %v502 = vmul.f32 1.0, %v501
    %v503 = vrcp.pop %v427
    %v504 = vmul.f32 %v427, %v503
    %v505 = vsub.f32 1.0, %v504
    %v506 = vmul.f32 %v503, %v505
    %v507 = vadd.f32 %v503, %v506
    %vm508 = vweird.f32 %v427
    %vm509 = vweird.f32 %v503
    %vm510 = vmor %vm508, %vm509
    %v511 = vsel %vm510, %v503, %v507
    %v512 = vand.u32 2147483647, %v427
    %vm513 = vcmp.eq.f32.partialorder %v512, 8.507059e+37
    %v514 = vand.u32 %v427, 2147483648
    %v515 = vor.u32 1.1754944e-38, %v514
    %v516 = vsel %vm513, %v515, %v511
    %v517 = vmul.f32 1.0, %v516
    %v518 = vrcp.pop %v428
    %v519 = vmul.f32 %v428, %v518
    %v520 = vsub.f32 1.0, %v519
    %v521 = vmul.f32 %v518, %v520
    %v522 = vadd.f32 %v518, %v521
    %vm523 = vweird.f32 %v428
    %vm524 = vweird.f32 %v518
    %vm525 = vmor %vm523, %vm524
    %v526 = vsel %vm525, %v518, %v522
    %v527 = vand.u32 2147483647, %v428
    %vm528 = vcmp.eq.f32.partialorder %v527, 8.507059e+37
    %v529 = vand.u32 %v428, 2147483648
    %v530 = vor.u32 1.1754944e-38, %v529
    %v531 = vsel %vm528, %v530, %v526
    %v532 = vmul.f32 1.0, %v531
    %v533 = vrcp.pop %v429
    %v534 = vmul.f32 %v429, %v533
    %v535 = vsub.f32 1.0, %v534
    %v536 = vmul.f32 %v533, %v535
    %v537 = vadd.f32 %v533, %v536
    %vm538 = vweird.f32 %v429
    %vm539 = vweird.f32 %v533
    %vm540 = vmor %vm538, %vm539
    %v541 = vsel %vm540, %v533, %v537
    %v542 = vand.u32 2147483647, %v429
    %vm543 = vcmp.eq.f32.partialorder %v542, 8.507059e+37
    %v544 = vand.u32 %v429, 2147483648
    %v545 = vor.u32 1.1754944e-38, %v544
    %v546 = vsel %vm543, %v545, %v541
    %v547 = vmul.f32 1.0, %v546
    %v548 = vrcp.pop %v430
    %v549 = vmul.f32 %v430, %v548
    %v550 = vsub.f32 1.0, %v549
    %v551 = vmul.f32 %v548, %v550
    %v552 = vadd.f32 %v548, %v551
    %vm553 = vweird.f32 %v430
    %vm554 = vweird.f32 %v548
    %vm555 = vmor %vm553, %vm554
    %v556 = vsel %vm555, %v548, %v552
    %v557 = vand.u32 2147483647, %v430
    %vm558 = vcmp.eq.f32.partialorder %v557, 8.507059e+37
    %v559 = vand.u32 %v430, 2147483648
    %v560 = vor.u32 1.1754944e-38, %v559
    %v561 = vsel %vm558, %v560, %v556
    %v562 = vmul.f32 1.0, %v561
    %v563 = vrcp.pop %v431
    %v564 = vmul.f32 %v431, %v563
    %v565 = vsub.f32 1.0, %v564
    %v566 = vmul.f32 %v563, %v565
    %v567 = vadd.f32 %v563, %v566
    %vm568 = vweird.f32 %v431
    %vm569 = vweird.f32 %v563
    %vm570 = vmor %vm568, %vm569
    %v571 = vsel %vm570, %v563, %v567
    %v572 = vand.u32 2147483647, %v431
    %vm573 = vcmp.eq.f32.partialorder %v572, 8.507059e+37
    %v574 = vand.u32 %v431, 2147483648
    %v575 = vor.u32 1.1754944e-38, %v574
    %v576 = vsel %vm573, %v575, %v571
    %v577 = vmul.f32 1.0, %v576
    %v578 = vrcp.pop %v432
    %v579 = vmul.f32 %v432, %v578
    %v580 = vsub.f32 1.0, %v579
    %v581 = vmul.f32 %v578, %v580
    %v582 = vadd.f32 %v578, %v581
    %vm583 = vweird.f32 %v432
    %vm584 = vweird.f32 %v578
    %vm585 = vmor %vm583, %vm584
    %v586 = vsel %vm585, %v578, %v582
    %v587 = vand.u32 2147483647, %v432
    %vm588 = vcmp.eq.f32.partialorder %v587, 8.507059e+37
    %v589 = vand.u32 %v432, 2147483648
    %v590 = vor.u32 1.1754944e-38, %v589
    %v591 = vsel %vm588, %v590, %v586
    %v592 = vmul.f32 1.0, %v591
    %v593 = vrcp.pop %v433
    %v594 = vmul.f32 %v433, %v593
    %v595 = vsub.f32 1.0, %v594
    %v596 = vmul.f32 %v593, %v595
    %v597 = vadd.f32 %v593, %v596
    %vm598 = vweird.f32 %v433
    %vm599 = vweird.f32 %v593
    %vm600 = vmor %vm598, %vm599
    %v601 = vsel %vm600, %v593, %v597
    %v602 = vand.u32 2147483647, %v433
    %vm603 = vcmp.eq.f32.partialorder %v602, 8.507059e+37
    %v604 = vand.u32 %v433, 2147483648
    %v605 = vor.u32 1.1754944e-38, %v604
    %v606 = vsel %vm603, %v605, %v601
    %v607 = vmul.f32 1.0, %v606
    %v608 = vrcp.pop %v434
    %v609 = vmul.f32 %v434, %v608
    %v610 = vsub.f32 1.0, %v609
    %v611 = vmul.f32 %v608, %v610
    %v612 = vadd.f32 %v608, %v611
    %vm613 = vweird.f32 %v434
    %vm614 = vweird.f32 %v608
    %vm615 = vmor %vm613, %vm614
    %v616 = vsel %vm615, %v608, %v612
    %v617 = vand.u32 2147483647, %v434
    %vm618 = vcmp.eq.f32.partialorder %v617, 8.507059e+37
    %v619 = vand.u32 %v434, 2147483648
    %v620 = vor.u32 1.1754944e-38, %v619
    %v621 = vsel %vm618, %v620, %v616
    %v622 = vmul.f32 1.0, %v621
    %v623 = vrcp.pop %v435
    %v624 = vmul.f32 %v435, %v623
    %v625 = vsub.f32 1.0, %v624
    %v626 = vmul.f32 %v623, %v625
    %v627 = vadd.f32 %v623, %v626
    %vm628 = vweird.f32 %v435
    %vm629 = vweird.f32 %v623
    %vm630 = vmor %vm628, %vm629
    %v631 = vsel %vm630, %v623, %v627
    %v632 = vand.u32 2147483647, %v435
    %vm633 = vcmp.eq.f32.partialorder %v632, 8.507059e+37
    %v634 = vand.u32 %v435, 2147483648
    %v635 = vor.u32 1.1754944e-38, %v634
    %v636 = vsel %vm633, %v635, %v631
    %v637 = vmul.f32 1.0, %v636
    %v638 = vrcp.pop %v436
    %v639 = vmul.f32 %v436, %v638
    %v640 = vsub.f32 1.0, %v639
    %v641 = vmul.f32 %v638, %v640
    %v642 = vadd.f32 %v638, %v641
    %vm643 = vweird.f32 %v436
    %vm644 = vweird.f32 %v638
    %vm645 = vmor %vm643, %vm644
    %v646 = vsel %vm645, %v638, %v642
    %v647 = vand.u32 2147483647, %v436
    %vm648 = vcmp.eq.f32.partialorder %v647, 8.507059e+37
    %v649 = vand.u32 %v436, 2147483648
    %v650 = vor.u32 1.1754944e-38, %v649
    %v651 = vsel %vm648, %v650, %v646
    %v652 = vmul.f32 1.0, %v651
    %v653 = vrcp.pop %v437
    %v654 = vmul.f32 %v437, %v653
    %v655 = vsub.f32 1.0, %v654
    %v656 = vmul.f32 %v653, %v655
    %v657 = vadd.f32 %v653, %v656
    %vm658 = vweird.f32 %v437
    %vm659 = vweird.f32 %v653
    %vm660 = vmor %vm658, %vm659
    %v661 = vsel %vm660, %v653, %v657
    %v662 = vand.u32 2147483647, %v437
    %vm663 = vcmp.eq.f32.partialorder %v662, 8.507059e+37
    %v664 = vand.u32 %v437, 2147483648
    %v665 = vor.u32 1.1754944e-38, %v664
    %v666 = vsel %vm663, %v665, %v661
    %v667 = vmul.f32 1.0, %v666
    %v668 = vrcp.pop %v438
    %v669 = vmul.f32 %v438, %v668
    %v670 = vsub.f32 1.0, %v669
    %v671 = vmul.f32 %v668, %v670
    %v672 = vadd.f32 %v668, %v671
    %vm673 = vweird.f32 %v438
    %vm674 = vweird.f32 %v668
    %vm675 = vmor %vm673, %vm674
    %v676 = vsel %vm675, %v668, %v672
    %v677 = vand.u32 2147483647, %v438
    %vm678 = vcmp.eq.f32.partialorder %v677, 8.507059e+37
    %v679 = vand.u32 %v438, 2147483648
    %v680 = vor.u32 1.1754944e-38, %v679
    %v681 = vsel %vm678, %v680, %v676
    %v682 = vmul.f32 1.0, %v681
    %v683 = vrcp.pop %v439
    %v684 = vmul.f32 %v439, %v683
    %v685 = vsub.f32 1.0, %v684
    %v686 = vmul.f32 %v683, %v685
    %v687 = vadd.f32 %v683, %v686
    %vm688 = vweird.f32 %v439
    %vm689 = vweird.f32 %v683
    %vm690 = vmor %vm688, %vm689
    %v691 = vsel %vm690, %v683, %v687
    %v692 = vand.u32 2147483647, %v439
    %vm693 = vcmp.eq.f32.partialorder %v692, 8.507059e+37
    %v694 = vand.u32 %v439, 2147483648
    %v695 = vor.u32 1.1754944e-38, %v694
    %v696 = vsel %vm693, %v695, %v691
    %v697 = vmul.f32 1.0, %v696
    %v698 = vrcp.pop %v440
    %v699 = vmul.f32 %v440, %v698
    %v700 = vsub.f32 1.0, %v699
    %v701 = vmul.f32 %v698, %v700
    %v702 = vadd.f32 %v698, %v701
    %vm703 = vweird.f32 %v440
    %vm704 = vweird.f32 %v698
    %vm705 = vmor %vm703, %vm704
    %v706 = vsel %vm705, %v698, %v702
    %v707 = vand.u32 2147483647, %v440
    %vm708 = vcmp.eq.f32.partialorder %v707, 8.507059e+37
    %v709 = vand.u32 %v440, 2147483648
    %v710 = vor.u32 1.1754944e-38, %v709
    %v711 = vsel %vm708, %v710, %v706
    %v712 = vmul.f32 1.0, %v711
    %v713 = vrcp.pop %v441
    %v714 = vmul.f32 %v441, %v713
    %v715 = vsub.f32 1.0, %v714
    %v716 = vmul.f32 %v713, %v715
    %v717 = vadd.f32 %v713, %v716
    %vm718 = vweird.f32 %v441
    %vm719 = vweird.f32 %v713
    %vm720 = vmor %vm718, %vm719
    %v721 = vsel %vm720, %v713, %v717
    %v722 = vand.u32 2147483647, %v441
    %vm723 = vcmp.eq.f32.partialorder %v722, 8.507059e+37
    %v724 = vand.u32 %v441, 2147483648
    %v725 = vor.u32 1.1754944e-38, %v724
    %v726 = vsel %vm723, %v725, %v721
    %v727 = vmul.f32 1.0, %v726
    %v728 = vrcp.pop %v442
    %v729 = vmul.f32 %v442, %v728
    %v730 = vsub.f32 1.0, %v729
    %v731 = vmul.f32 %v728, %v730
    %v732 = vadd.f32 %v728, %v731
    %vm733 = vweird.f32 %v442
    %vm734 = vweird.f32 %v728
    %vm735 = vmor %vm733, %vm734
    %v736 = vsel %vm735, %v728, %v732
    %v737 = vand.u32 2147483647, %v442
    %vm738 = vcmp.eq.f32.partialorder %v737, 8.507059e+37
    %v739 = vand.u32 %v442, 2147483648
    %v740 = vor.u32 1.1754944e-38, %v739
    %v741 = vsel %vm738, %v740, %v736
    %v742 = vmul.f32 1.0, %v741
    %v743 = vrcp.pop %v443
    %v744 = vmul.f32 %v443, %v743
    %v745 = vsub.f32 1.0, %v744
    %v746 = vmul.f32 %v743, %v745
    %v747 = vadd.f32 %v743, %v746
    %vm748 = vweird.f32 %v443
    %vm749 = vweird.f32 %v743
    %vm750 = vmor %vm748, %vm749
    %v751 = vsel %vm750, %v743, %v747
    %v752 = vand.u32 2147483647, %v443
    %vm753 = vcmp.eq.f32.partialorder %v752, 8.507059e+37
    %v754 = vand.u32 %v443, 2147483648
    %v755 = vor.u32 1.1754944e-38, %v754
    %v756 = vsel %vm753, %v755, %v751
    %v757 = vmul.f32 1.0, %v756
    %v758 = vrcp.pop %v444
    %v759 = vmul.f32 %v444, %v758
    %v760 = vsub.f32 1.0, %v759
    %v761 = vmul.f32 %v758, %v760
    %v762 = vadd.f32 %v758, %v761
    %vm763 = vweird.f32 %v444
    %vm764 = vweird.f32 %v758
    %vm765 = vmor %vm763, %vm764
    %v766 = vsel %vm765, %v758, %v762
    %v767 = vand.u32 2147483647, %v444
    %vm768 = vcmp.eq.f32.partialorder %v767, 8.507059e+37
    %v769 = vand.u32 %v444, 2147483648
    %v770 = vor.u32 1.1754944e-38, %v769
    %v771 = vsel %vm768, %v770, %v766
    %v772 = vmul.f32 1.0, %v771
    %v773 = vrcp.pop %v445
    %v774 = vmul.f32 %v445, %v773
    %v775 = vsub.f32 1.0, %v774
    %v776 = vmul.f32 %v773, %v775
    %v777 = vadd.f32 %v773, %v776
    %vm778 = vweird.f32 %v445
    %vm779 = vweird.f32 %v773
    %vm780 = vmor %vm778, %vm779
    %v781 = vsel %vm780, %v773, %v777
    %v782 = vand.u32 2147483647, %v445
    %vm783 = vcmp.eq.f32.partialorder %v782, 8.507059e+37
    %v784 = vand.u32 %v445, 2147483648
    %v785 = vor.u32 1.1754944e-38, %v784
    %v786 = vsel %vm783, %v785, %v781
    %v787 = vmul.f32 1.0, %v786
    %v788 = vrcp.pop %v446
    %v789 = vmul.f32 %v446, %v788
    %v790 = vsub.f32 1.0, %v789
    %v791 = vmul.f32 %v788, %v790
    %v792 = vadd.f32 %v788, %v791
    %vm793 = vweird.f32 %v446
    %vm794 = vweird.f32 %v788
    %vm795 = vmor %vm793, %vm794
    %v796 = vsel %vm795, %v788, %v792
    %v797 = vand.u32 2147483647, %v446
    %vm798 = vcmp.eq.f32.partialorder %v797, 8.507059e+37
    %v799 = vand.u32 %v446, 2147483648
    %v800 = vor.u32 1.1754944e-38, %v799
    %v801 = vsel %vm798, %v800, %v796
    %v802 = vmul.f32 1.0, %v801
    %v803 = vrcp.pop %v447
    %v804 = vmul.f32 %v447, %v803
    %v805 = vsub.f32 1.0, %v804
    %v806 = vmul.f32 %v803, %v805
    %v807 = vadd.f32 %v803, %v806
    %vm808 = vweird.f32 %v447
    %vm809 = vweird.f32 %v803
    %vm810 = vmor %vm808, %vm809
    %v811 = vsel %vm810, %v803, %v807
    %v812 = vand.u32 2147483647, %v447
    %vm813 = vcmp.eq.f32.partialorder %v812, 8.507059e+37
    %v814 = vand.u32 %v447, 2147483648
    %v815 = vor.u32 1.1754944e-38, %v814
    %v816 = vsel %vm813, %v815, %v811
    %v817 = vmul.f32 1.0, %v816
    %v818 = vrcp.pop %v448
    %v819 = vmul.f32 %v448, %v818
    %v820 = vsub.f32 1.0, %v819
    %v821 = vmul.f32 %v818, %v820
    %v822 = vadd.f32 %v818, %v821
    %vm823 = vweird.f32 %v448
    %vm824 = vweird.f32 %v818
    %vm825 = vmor %vm823, %vm824
    %v826 = vsel %vm825, %v818, %v822
    %v827 = vand.u32 2147483647, %v448
    %vm828 = vcmp.eq.f32.partialorder %v827, 8.507059e+37
    %v829 = vand.u32 %v448, 2147483648
    %v830 = vor.u32 1.1754944e-38, %v829
    %v831 = vsel %vm828, %v830, %v826
    %v832 = vmul.f32 1.0, %v831
    %v833 = vrcp.pop %v449
    %v834 = vmul.f32 %v449, %v833
    %v835 = vsub.f32 1.0, %v834
    %v836 = vmul.f32 %v833, %v835
    %v837 = vadd.f32 %v833, %v836
    %vm838 = vweird.f32 %v449
    %vm839 = vweird.f32 %v833
    %vm840 = vmor %vm838, %vm839
    %v841 = vsel %vm840, %v833, %v837
    %v842 = vand.u32 2147483647, %v449
    %vm843 = vcmp.eq.f32.partialorder %v842, 8.507059e+37
    %v844 = vand.u32 %v449, 2147483648
    %v845 = vor.u32 1.1754944e-38, %v844
    %v846 = vsel %vm843, %v845, %v841
    %v847 = vmul.f32 1.0, %v846
    %v848 = vrcp.pop %v450
    %v849 = vmul.f32 %v450, %v848
    %v850 = vsub.f32 1.0, %v849
    %v851 = vmul.f32 %v848, %v850
    %v852 = vadd.f32 %v848, %v851
    %vm853 = vweird.f32 %v450
    %vm854 = vweird.f32 %v848
    %vm855 = vmor %vm853, %vm854
    %v856 = vsel %vm855, %v848, %v852
    %v857 = vand.u32 2147483647, %v450
    %vm858 = vcmp.eq.f32.partialorder %v857, 8.507059e+37
    %v859 = vand.u32 %v450, 2147483648
    %v860 = vor.u32 1.1754944e-38, %v859
    %v861 = vsel %vm858, %v860, %v856
    %v862 = vmul.f32 1.0, %v861
    %v863 = vrcp.pop %v451
    %v864 = vmul.f32 %v451, %v863
    %v865 = vsub.f32 1.0, %v864
    %v866 = vmul.f32 %v863, %v865
    %v867 = vadd.f32 %v863, %v866
    %vm868 = vweird.f32 %v451
    %vm869 = vweird.f32 %v863
    %vm870 = vmor %vm868, %vm869
    %v871 = vsel %vm870, %v863, %v867
    %v872 = vand.u32 2147483647, %v451
    %vm873 = vcmp.eq.f32.partialorder %v872, 8.507059e+37
    %v874 = vand.u32 %v451, 2147483648
    %v875 = vor.u32 1.1754944e-38, %v874
    %v876 = vsel %vm873, %v875, %v871
    %v877 = vmul.f32 1.0, %v876
    %v878 = vrcp.pop %v452
    %v879 = vmul.f32 %v452, %v878
    %v880 = vsub.f32 1.0, %v879
    %v881 = vmul.f32 %v878, %v880
    %v882 = vadd.f32 %v878, %v881
    %vm883 = vweird.f32 %v452
    %vm884 = vweird.f32 %v878
    %vm885 = vmor %vm883, %vm884
    %v886 = vsel %vm885, %v878, %v882
    %v887 = vand.u32 2147483647, %v452
    %vm888 = vcmp.eq.f32.partialorder %v887, 8.507059e+37
    %v889 = vand.u32 %v452, 2147483648
    %v890 = vor.u32 1.1754944e-38, %v889
    %v891 = vsel %vm888, %v890, %v886
    %v892 = vmul.f32 1.0, %v891
    %v893 = vrcp.pop %v453
    %v894 = vmul.f32 %v453, %v893
    %v895 = vsub.f32 1.0, %v894
    %v896 = vmul.f32 %v893, %v895
    %v897 = vadd.f32 %v893, %v896
    %vm898 = vweird.f32 %v453
    %vm899 = vweird.f32 %v893
    %vm900 = vmor %vm898, %vm899
    %v901 = vsel %vm900, %v893, %v897
    %v902 = vand.u32 2147483647, %v453
    %vm903 = vcmp.eq.f32.partialorder %v902, 8.507059e+37
    %v904 = vand.u32 %v453, 2147483648
    %v905 = vor.u32 1.1754944e-38, %v904
    %v906 = vsel %vm903, %v905, %v901
    %v907 = vmul.f32 1.0, %v906
    %v908 = vrcp.pop %v454
    %v909 = vmul.f32 %v454, %v908
    %v910 = vsub.f32 1.0, %v909
    %v911 = vmul.f32 %v908, %v910
    %v912 = vadd.f32 %v908, %v911
    %vm913 = vweird.f32 %v454
    %vm914 = vweird.f32 %v908
    %vm915 = vmor %vm913, %vm914
    %v916 = vsel %vm915, %v908, %v912
    %v917 = vand.u32 2147483647, %v454
    %vm918 = vcmp.eq.f32.partialorder %v917, 8.507059e+37
    %v919 = vand.u32 %v454, 2147483648
    %v920 = vor.u32 1.1754944e-38, %v919
    %v921 = vsel %vm918, %v920, %v916
    %v922 = vmul.f32 1.0, %v921
    %v923 = vrcp.pop %v455
    %v924 = vmul.f32 %v455, %v923
    %v925 = vsub.f32 1.0, %v924
    %v926 = vmul.f32 %v923, %v925
    %v927 = vadd.f32 %v923, %v926
    %vm928 = vweird.f32 %v455
    %vm929 = vweird.f32 %v923
    %vm930 = vmor %vm928, %vm929
    %v931 = vsel %vm930, %v923, %v927
    %v932 = vand.u32 2147483647, %v455
    %vm933 = vcmp.eq.f32.partialorder %v932, 8.507059e+37
    %v934 = vand.u32 %v455, 2147483648
    %v935 = vor.u32 1.1754944e-38, %v934
    %v936 = vsel %vm933, %v935, %v931
    %v937 = vmul.f32 1.0, %v936
    %v938 = vrcp.pop %v456
    %v939 = vmul.f32 %v456, %v938
    %v940 = vsub.f32 1.0, %v939
    %v941 = vmul.f32 %v938, %v940
    %v942 = vadd.f32 %v938, %v941
    %vm943 = vweird.f32 %v456
    %vm944 = vweird.f32 %v938
    %vm945 = vmor %vm943, %vm944
    %v946 = vsel %vm945, %v938, %v942
    %v947 = vand.u32 2147483647, %v456
    %vm948 = vcmp.eq.f32.partialorder %v947, 8.507059e+37
    %v949 = vand.u32 %v456, 2147483648
    %v950 = vor.u32 1.1754944e-38, %v949
    %v951 = vsel %vm948, %v950, %v946
    %v952 = vmul.f32 1.0, %v951
    %v953 = vrcp.pop %v457
    %v954 = vmul.f32 %v457, %v953
    %v955 = vsub.f32 1.0, %v954
    %v956 = vmul.f32 %v953, %v955
    %v957 = vadd.f32 %v953, %v956
    %vm958 = vweird.f32 %v457
    %vm959 = vweird.f32 %v953
    %vm960 = vmor %vm958, %vm959
    %v961 = vsel %vm960, %v953, %v957
    %v962 = vand.u32 2147483647, %v457
    %vm963 = vcmp.eq.f32.partialorder %v962, 8.507059e+37
    %v964 = vand.u32 %v457, 2147483648
    %v965 = vor.u32 1.1754944e-38, %v964
    %v966 = vsel %vm963, %v965, %v961
    %v967 = vmul.f32 1.0, %v966
    %v968 = vmax.f32 %v221, 0.0
    %v969 = vmax.f32 %v224, 0.0
    %v970 = vmax.f32 %v227, 0.0
    %v971 = vmax.f32 %v230, 0.0
    %v972 = vmax.f32 %v233, 0.0
    %v973 = vmax.f32 %v236, 0.0
    %v974 = vmax.f32 %v239, 0.0
    %v975 = vmax.f32 %v242, 0.0
    %v976 = vmax.f32 %v245, 0.0
    %v977 = vmax.f32 %v248, 0.0
    %v978 = vmax.f32 %v251, 0.0
    %v979 = vmax.f32 %v254, 0.0
    %v980 = vmax.f32 %v257, 0.0
    %v981 = vmax.f32 %v260, 0.0
    %v982 = vmax.f32 %v263, 0.0
    %v983 = vmax.f32 %v266, 0.0
    %v984 = vmax.f32 %v269, 0.0
    %v985 = vmax.f32 %v272, 0.0
    %v986 = vmax.f32 %v275, 0.0
    %v987 = vmax.f32 %v278, 0.0
    %v988 = vmax.f32 %v281, 0.0
    %v989 = vmax.f32 %v284, 0.0
    %v990 = vmax.f32 %v287, 0.0
    %v991 = vmax.f32 %v290, 0.0
    %v992 = vmax.f32 %v293, 0.0
    %v993 = vmax.f32 %v296, 0.0
    %v994 = vmax.f32 %v299, 0.0
    %v995 = vmax.f32 %v302, 0.0
    %v996 = vmax.f32 %v305, 0.0
    %v997 = vmax.f32 %v308, 0.0
    %v998 = vmax.f32 %v311, 0.0
    %v999 = vmax.f32 %v314, 0.0
    %v1000 = vmax.f32 %v317, 0.0
    %v1001 = vmax.f32 %v320, 0.0
    %1036 = vrot.lane.b32.xlu0 %v968, 96
    %v1037 = vpop.permute.xlu0 %1036
    %1038 = vrot.lane.b32.xlu0 %v969, 96
    %v1039 = vpop.permute.xlu0 %1038
    %1040 = vrot.lane.b32.xlu0 %v970, 96
    %v1041 = vpop.permute.xlu0 %1040
    %1042 = vrot.lane.b32.xlu0 %v971, 96
    %v1043 = vpop.permute.xlu0 %1042
    %1044 = vrot.lane.b32.xlu0 %v972, 96
    %v1045 = vpop.permute.xlu0 %1044
    %1046 = vrot.lane.b32.xlu0 %v973, 96
    %v1047 = vpop.permute.xlu0 %1046
    %1048 = vrot.lane.b32.xlu0 %v974, 96
    %v1049 = vpop.permute.xlu0 %1048
    %1050 = vrot.lane.b32.xlu0 %v975, 96
    %v1051 = vpop.permute.xlu0 %1050
    %1052 = vrot.lane.b32.xlu0 %v976, 96
    %v1053 = vpop.permute.xlu0 %1052
    %1054 = vrot.lane.b32.xlu0 %v977, 96
    %v1055 = vpop.permute.xlu0 %1054
    %1056 = vrot.lane.b32.xlu0 %v978, 96
    %v1057 = vpop.permute.xlu0 %1056
    %1058 = vrot.lane.b32.xlu0 %v979, 96
    %v1059 = vpop.permute.xlu0 %1058
    %1060 = vrot.lane.b32.xlu0 %v980, 96
    %v1061 = vpop.permute.xlu0 %1060
    %1062 = vrot.lane.b32.xlu0 %v981, 96
    %v1063 = vpop.permute.xlu0 %1062
    %1064 = vrot.lane.b32.xlu0 %v982, 96
    %v1065 = vpop.permute.xlu0 %1064
    %1066 = vrot.lane.b32.xlu0 %v983, 96
    %v1067 = vpop.permute.xlu0 %1066
    %1068 = vrot.lane.b32.xlu0 %v984, 96
    %v1069 = vpop.permute.xlu0 %1068
    %1070 = vrot.lane.b32.xlu0 %v985, 96
    %v1071 = vpop.permute.xlu0 %1070
    %1072 = vrot.lane.b32.xlu0 %v986, 96
    %v1073 = vpop.permute.xlu0 %1072
    %1074 = vrot.lane.b32.xlu0 %v987, 96
    %v1075 = vpop.permute.xlu0 %1074
    %1076 = vrot.lane.b32.xlu0 %v988, 96
    %v1077 = vpop.permute.xlu0 %1076
    %1078 = vrot.lane.b32.xlu0 %v989, 96
    %v1079 = vpop.permute.xlu0 %1078
    %1080 = vrot.lane.b32.xlu0 %v990, 96
    %v1081 = vpop.permute.xlu0 %1080
    %1082 = vrot.lane.b32.xlu0 %v991, 96
    %v1083 = vpop.permute.xlu0 %1082
    %1084 = vrot.lane.b32.xlu0 %v992, 96
    %v1085 = vpop.permute.xlu0 %1084
    %1086 = vrot.lane.b32.xlu0 %v993, 96
    %v1087 = vpop.permute.xlu0 %1086
    %1088 = vrot.lane.b32.xlu0 %v994, 96
    %v1089 = vpop.permute.xlu0 %1088
    %1090 = vrot.lane.b32.xlu0 %v995, 96
    %v1091 = vpop.permute.xlu0 %1090
    %1092 = vrot.lane.b32.xlu0 %v996, 96
    %v1093 = vpop.permute.xlu0 %1092
    %1094 = vrot.lane.b32.xlu0 %v997, 96
    %v1095 = vpop.permute.xlu0 %1094
    %1096 = vrot.lane.b32.xlu0 %v998, 96
    %v1097 = vpop.permute.xlu0 %1096
    %1098 = vrot.lane.b32.xlu0 %v999, 96
    %v1099 = vpop.permute.xlu0 %1098
    %1100 = vrot.lane.b32.xlu0 %v1000, 96
    %v1101 = vpop.permute.xlu0 %1100
    %1102 = vrot.lane.b32.xlu0 %v1001, 96
    %v1103 = vpop.permute.xlu0 %1102
    %v1138 = vmul.f32 %v472, %v1037
    %v1139 = vmul.f32 %v487, %v1039
    %v1140 = vmul.f32 %v502, %v1041
    %v1141 = vmul.f32 %v517, %v1043
    %v1142 = vmul.f32 %v532, %v1045
    %v1143 = vmul.f32 %v547, %v1047
    %v1144 = vmul.f32 %v562, %v1049
    %v1145 = vmul.f32 %v577, %v1051
    %v1146 = vmul.f32 %v592, %v1053
    %v1147 = vmul.f32 %v607, %v1055
    %v1148 = vmul.f32 %v622, %v1057
    %v1149 = vmul.f32 %v637, %v1059
    %v1150 = vmul.f32 %v652, %v1061
    %v1151 = vmul.f32 %v667, %v1063
    %v1152 = vmul.f32 %v682, %v1065
    %v1153 = vmul.f32 %v697, %v1067
    %v1154 = vmul.f32 %v712, %v1069
    %v1155 = vmul.f32 %v727, %v1071
    %v1156 = vmul.f32 %v742, %v1073
    %v1157 = vmul.f32 %v757, %v1075
    %v1158 = vmul.f32 %v772, %v1077
    %v1159 = vmul.f32 %v787, %v1079
    %v1160 = vmul.f32 %v802, %v1081
    %v1161 = vmul.f32 %v817, %v1083
    %v1162 = vmul.f32 %v832, %v1085
    %v1163 = vmul.f32 %v847, %v1087
    %v1164 = vmul.f32 %v862, %v1089
    %v1165 = vmul.f32 %v877, %v1091
    %v1166 = vmul.f32 %v892, %v1093
    %v1167 = vmul.f32 %v907, %v1095
    %v1168 = vmul.f32 %v922, %v1097
    %v1169 = vmul.f32 %v937, %v1099
    %v1170 = vmul.f32 %v952, %v1101
    %v1171 = vmul.f32 %v967, %v1103
    %v1172 = vsub.f32 1.0, %v472
    %v1173 = vsub.f32 1.0, %v487
    %v1174 = vsub.f32 1.0, %v502
    %v1175 = vsub.f32 1.0, %v517
    %v1176 = vsub.f32 1.0, %v532
    %v1177 = vsub.f32 1.0, %v547
    %v1178 = vsub.f32 1.0, %v562
    %v1179 = vsub.f32 1.0, %v577
    %v1180 = vsub.f32 1.0, %v592
    %v1181 = vsub.f32 1.0, %v607
    %v1182 = vsub.f32 1.0, %v622
    %v1183 = vsub.f32 1.0, %v637
    %v1184 = vsub.f32 1.0, %v652
    %v1185 = vsub.f32 1.0, %v667
    %v1186 = vsub.f32 1.0, %v682
    %v1187 = vsub.f32 1.0, %v697
    %v1188 = vsub.f32 1.0, %v712
    %v1189 = vsub.f32 1.0, %v727
    %v1190 = vsub.f32 1.0, %v742
    %v1191 = vsub.f32 1.0, %v757
    %v1192 = vsub.f32 1.0, %v772
    %v1193 = vsub.f32 1.0, %v787
    %v1194 = vsub.f32 1.0, %v802
    %v1195 = vsub.f32 1.0, %v817
    %v1196 = vsub.f32 1.0, %v832
    %v1197 = vsub.f32 1.0, %v847
    %v1198 = vsub.f32 1.0, %v862
    %v1199 = vsub.f32 1.0, %v877
    %v1200 = vsub.f32 1.0, %v892
    %v1201 = vsub.f32 1.0, %v907
    %v1202 = vsub.f32 1.0, %v922
    %v1203 = vsub.f32 1.0, %v937
    %v1204 = vsub.f32 1.0, %v952
    %v1205 = vsub.f32 1.0, %v967
    %1240 = vrot.lane.b32.xlu0 %v221, 64
    %v1241 = vpop.permute.xlu0 %1240
    %1242 = vrot.lane.b32.xlu0 %v224, 64
    %v1243 = vpop.permute.xlu0 %1242
    %1244 = vrot.lane.b32.xlu0 %v227, 64
    %v1245 = vpop.permute.xlu0 %1244
    %1246 = vrot.lane.b32.xlu0 %v230, 64
    %v1247 = vpop.permute.xlu0 %1246
    %1248 = vrot.lane.b32.xlu0 %v233, 64
    %v1249 = vpop.permute.xlu0 %1248
    %1250 = vrot.lane.b32.xlu0 %v236, 64
    %v1251 = vpop.permute.xlu0 %1250
    %1252 = vrot.lane.b32.xlu0 %v239, 64
    %v1253 = vpop.permute.xlu0 %1252
    %1254 = vrot.lane.b32.xlu0 %v242, 64
    %v1255 = vpop.permute.xlu0 %1254
    %1256 = vrot.lane.b32.xlu0 %v245, 64
    %v1257 = vpop.permute.xlu0 %1256
    %1258 = vrot.lane.b32.xlu0 %v248, 64
    %v1259 = vpop.permute.xlu0 %1258
    %1260 = vrot.lane.b32.xlu0 %v251, 64
    %v1261 = vpop.permute.xlu0 %1260
    %1262 = vrot.lane.b32.xlu0 %v254, 64
    %v1263 = vpop.permute.xlu0 %1262
    %1264 = vrot.lane.b32.xlu0 %v257, 64
    %v1265 = vpop.permute.xlu0 %1264
    %1266 = vrot.lane.b32.xlu0 %v260, 64
    %v1267 = vpop.permute.xlu0 %1266
    %1268 = vrot.lane.b32.xlu0 %v263, 64
    %v1269 = vpop.permute.xlu0 %1268
    %1270 = vrot.lane.b32.xlu0 %v266, 64
    %v1271 = vpop.permute.xlu0 %1270
    %1272 = vrot.lane.b32.xlu0 %v269, 64
    %v1273 = vpop.permute.xlu0 %1272
    %1274 = vrot.lane.b32.xlu0 %v272, 64
    %v1275 = vpop.permute.xlu0 %1274
    %1276 = vrot.lane.b32.xlu0 %v275, 64
    %v1277 = vpop.permute.xlu0 %1276
    %1278 = vrot.lane.b32.xlu0 %v278, 64
    %v1279 = vpop.permute.xlu0 %1278
    %1280 = vrot.lane.b32.xlu0 %v281, 64
    %v1281 = vpop.permute.xlu0 %1280
    %1282 = vrot.lane.b32.xlu0 %v284, 64
    %v1283 = vpop.permute.xlu0 %1282
    %1284 = vrot.lane.b32.xlu0 %v287, 64
    %v1285 = vpop.permute.xlu0 %1284
    %1286 = vrot.lane.b32.xlu0 %v290, 64
    %v1287 = vpop.permute.xlu0 %1286
    %1288 = vrot.lane.b32.xlu0 %v293, 64
    %v1289 = vpop.permute.xlu0 %1288
    %1290 = vrot.lane.b32.xlu0 %v296, 64
    %v1291 = vpop.permute.xlu0 %1290
    %1292 = vrot.lane.b32.xlu0 %v299, 64
    %v1293 = vpop.permute.xlu0 %1292
    %1294 = vrot.lane.b32.xlu0 %v302, 64
    %v1295 = vpop.permute.xlu0 %1294
    %1296 = vrot.lane.b32.xlu0 %v305, 64
    %v1297 = vpop.permute.xlu0 %1296
    %1298 = vrot.lane.b32.xlu0 %v308, 64
    %v1299 = vpop.permute.xlu0 %1298
    %1300 = vrot.lane.b32.xlu0 %v311, 64
    %v1301 = vpop.permute.xlu0 %1300
    %1302 = vrot.lane.b32.xlu0 %v314, 64
    %v1303 = vpop.permute.xlu0 %1302
    %1304 = vrot.lane.b32.xlu0 %v317, 64
    %v1305 = vpop.permute.xlu0 %1304
    %1306 = vrot.lane.b32.xlu0 %v320, 64
    %v1307 = vpop.permute.xlu0 %1306
    %v1342 = vmul.f32 %v1172, %v1241
    %v1343 = vmul.f32 %v1173, %v1243
    %v1344 = vmul.f32 %v1174, %v1245
    %v1345 = vmul.f32 %v1175, %v1247
    %v1346 = vmul.f32 %v1176, %v1249
    %v1347 = vmul.f32 %v1177, %v1251
    %v1348 = vmul.f32 %v1178, %v1253
    %v1349 = vmul.f32 %v1179, %v1255
    %v1350 = vmul.f32 %v1180, %v1257
    %v1351 = vmul.f32 %v1181, %v1259
    %v1352 = vmul.f32 %v1182, %v1261
    %v1353 = vmul.f32 %v1183, %v1263
    %v1354 = vmul.f32 %v1184, %v1265
    %v1355 = vmul.f32 %v1185, %v1267
    %v1356 = vmul.f32 %v1186, %v1269
    %v1357 = vmul.f32 %v1187, %v1271
    %v1358 = vmul.f32 %v1188, %v1273
    %v1359 = vmul.f32 %v1189, %v1275
    %v1360 = vmul.f32 %v1190, %v1277
    %v1361 = vmul.f32 %v1191, %v1279
    %v1362 = vmul.f32 %v1192, %v1281
    %v1363 = vmul.f32 %v1193, %v1283
    %v1364 = vmul.f32 %v1194, %v1285
    %v1365 = vmul.f32 %v1195, %v1287
    %v1366 = vmul.f32 %v1196, %v1289
    %v1367 = vmul.f32 %v1197, %v1291
    %v1368 = vmul.f32 %v1198, %v1293
    %v1369 = vmul.f32 %v1199, %v1295
    %v1370 = vmul.f32 %v1200, %v1297
    %v1371 = vmul.f32 %v1201, %v1299
    %v1372 = vmul.f32 %v1202, %v1301
    %v1373 = vmul.f32 %v1203, %v1303
    %v1374 = vmul.f32 %v1204, %v1305
    %v1375 = vmul.f32 %v1205, %v1307
    %v1376 = vadd.f32 %v1138, %v1342
    %v1377 = vadd.f32 %v1139, %v1343
    %v1378 = vadd.f32 %v1140, %v1344
    %v1379 = vadd.f32 %v1141, %v1345
    %v1380 = vadd.f32 %v1142, %v1346
    %v1381 = vadd.f32 %v1143, %v1347
    %v1382 = vadd.f32 %v1144, %v1348
    %v1383 = vadd.f32 %v1145, %v1349
    %v1384 = vadd.f32 %v1146, %v1350
    %v1385 = vadd.f32 %v1147, %v1351
    %v1386 = vadd.f32 %v1148, %v1352
    %v1387 = vadd.f32 %v1149, %v1353
    %v1388 = vadd.f32 %v1150, %v1354
    %v1389 = vadd.f32 %v1151, %v1355
    %v1390 = vadd.f32 %v1152, %v1356
    %v1391 = vadd.f32 %v1153, %v1357
    %v1392 = vadd.f32 %v1154, %v1358
    %v1393 = vadd.f32 %v1155, %v1359
    %v1394 = vadd.f32 %v1156, %v1360
    %v1395 = vadd.f32 %v1157, %v1361
    %v1396 = vadd.f32 %v1158, %v1362
    %v1397 = vadd.f32 %v1159, %v1363
    %v1398 = vadd.f32 %v1160, %v1364
    %v1399 = vadd.f32 %v1161, %v1365
    %v1400 = vadd.f32 %v1162, %v1366
    %v1401 = vadd.f32 %v1163, %v1367
    %v1402 = vadd.f32 %v1164, %v1368
    %v1403 = vadd.f32 %v1165, %v1369
    %v1404 = vadd.f32 %v1166, %v1370
    %v1405 = vadd.f32 %v1167, %v1371
    %v1406 = vadd.f32 %v1168, %v1372
    %v1407 = vadd.f32 %v1169, %v1373
    %v1408 = vadd.f32 %v1170, %v1374
    %v1409 = vadd.f32 %v1171, %v1375
    %s1410 = scalar_lea.vmem %s2, 32
    %v1411 = vld [vmem:[%s1410] sm:$0xff]
    %v1412 = vld [vmem:[%s1410 + $0x8] sm:$0xff]
    %v1413 = vld [vmem:[%s1410 + $0x10] sm:$0xff]
    %v1414 = vld [vmem:[%s1410 + $0x18] sm:$0xff]
    %s1415 = scalar_lea.vmem %s3, 1
    %v1416 = vld [vmem:[%s1415] sm:$0x1]
    %v1418 = vperm.slane %v1416, 0
    %v1421 = vsel %vm100, %v1376, 0
    %v1424 = vsel %vm100, %v1377, 0
    %v1427 = vsel %vm100, %v1378, 0
    %v1430 = vsel %vm100, %v1379, 0
    %v1433 = vsel %vm100, %v1380, 0
    %v1436 = vsel %vm100, %v1381, 0
    %v1439 = vsel %vm100, %v1382, 0
    %v1442 = vsel %vm100, %v1383, 0
    %v1445 = vsel %vm100, %v1384, 0
    %v1448 = vsel %vm100, %v1385, 0
    %v1451 = vsel %vm100, %v1386, 0
    %v1454 = vsel %vm100, %v1387, 0
    %v1457 = vsel %vm100, %v1388, 0
    %v1460 = vsel %vm100, %v1389, 0
    %v1463 = vsel %vm100, %v1390, 0
    %v1466 = vsel %vm100, %v1391, 0
    %v1469 = vsel %vm100, %v1392, 0
    %v1472 = vsel %vm100, %v1393, 0
    %v1475 = vsel %vm100, %v1394, 0
    %v1478 = vsel %vm100, %v1395, 0
    %v1481 = vsel %vm100, %v1396, 0
    %v1484 = vsel %vm100, %v1397, 0
    %v1487 = vsel %vm100, %v1398, 0
    %v1490 = vsel %vm100, %v1399, 0
    %v1493 = vsel %vm100, %v1400, 0
    %v1496 = vsel %vm100, %v1401, 0
    %v1499 = vsel %vm100, %v1402, 0
    %v1502 = vsel %vm100, %v1403, 0
    %v1505 = vsel %vm100, %v1404, 0
    %v1508 = vsel %vm100, %v1405, 0
    %v1511 = vsel %vm100, %v1406, 0
    %v1514 = vsel %vm100, %v1407, 0
    %v1517 = vsel %vm100, %v1408, 0
    %v1520 = vsel %vm100, %v1409, 0
    %1522 = vmatpush.msra.mxu0 0.0
    %1523 = vmatpush.msra.mxu0 0.0
    %1524 = vmatpush.msra.mxu0 0.0
    %1525 = vmatpush.msra.mxu0 0.0
    %1526 = vmatpush.msra.mxu0 0.0
    %1527 = vmatpush.msra.mxu0 0.0
    %1528 = vmatpush.msra.mxu0 0.0
    %1529 = vmatpush.msra.mxu0 0.0
    %1530 = vmatpush.msra.mxu0 0.0
    %1531 = vmatpush.msra.mxu0 0.0
    %1532 = vmatpush.msra.mxu0 0.0
    %1533 = vmatpush.msra.mxu0 0.0
    %1534 = vmatpush.msra.mxu0 %v1414
    %1535 = vmatpush.msra.mxu0 %v1413
    %1536 = vmatpush.msra.mxu0 %v1412
    %1537 = vmatpush.msra.mxu0 %v1411
    %1538 = vmatmul.f32.gmra.mxu0 %v1421
    %v1539 = vpop.f32.mrf.mxu0
    %v1540 = vadd.f32 %v1418, %v1539
    %1541 = vmatmul.f32.gmra.mxu0 %v1424
    %v1542 = vpop.f32.mrf.mxu0
    %v1543 = vadd.f32 %v1418, %v1542
    %1544 = vmatmul.f32.gmra.mxu0 %v1427
    %v1545 = vpop.f32.mrf.mxu0
    %v1546 = vadd.f32 %v1418, %v1545
    %1547 = vmatmul.f32.gmra.mxu0 %v1430
    %v1548 = vpop.f32.mrf.mxu0
    %v1549 = vadd.f32 %v1418, %v1548
    %1550 = vmatmul.f32.gmra.mxu0 %v1433
    %v1551 = vpop.f32.mrf.mxu0
    %v1552 = vadd.f32 %v1418, %v1551
    %1553 = vmatmul.f32.gmra.mxu0 %v1436
    %v1554 = vpop.f32.mrf.mxu0
    %v1555 = vadd.f32 %v1418, %v1554
    %1556 = vmatmul.f32.gmra.mxu0 %v1439
    %v1557 = vpop.f32.mrf.mxu0
    %v1558 = vadd.f32 %v1418, %v1557
    %1559 = vmatmul.f32.gmra.mxu0 %v1442
    %v1560 = vpop.f32.mrf.mxu0
    %v1561 = vadd.f32 %v1418, %v1560
    %1562 = vmatmul.f32.gmra.mxu0 %v1445
    %v1563 = vpop.f32.mrf.mxu0
    %v1564 = vadd.f32 %v1418, %v1563
    %1565 = vmatmul.f32.gmra.mxu0 %v1448
    %v1566 = vpop.f32.mrf.mxu0
    %v1567 = vadd.f32 %v1418, %v1566
    %1568 = vmatmul.f32.gmra.mxu0 %v1451
    %v1569 = vpop.f32.mrf.mxu0
    %v1570 = vadd.f32 %v1418, %v1569
    %1571 = vmatmul.f32.gmra.mxu0 %v1454
    %v1572 = vpop.f32.mrf.mxu0
    %v1573 = vadd.f32 %v1418, %v1572
    %1574 = vmatmul.f32.gmra.mxu0 %v1457
    %v1575 = vpop.f32.mrf.mxu0
    %v1576 = vadd.f32 %v1418, %v1575
    %1577 = vmatmul.f32.gmra.mxu0 %v1460
    %v1578 = vpop.f32.mrf.mxu0
    %v1579 = vadd.f32 %v1418, %v1578
    %1580 = vmatmul.f32.gmra.mxu0 %v1463
    %v1581 = vpop.f32.mrf.mxu0
    %v1582 = vadd.f32 %v1418, %v1581
    %1583 = vmatmul.f32.gmra.mxu0 %v1466
    %v1584 = vpop.f32.mrf.mxu0
    %v1585 = vadd.f32 %v1418, %v1584
    %1586 = vmatmul.f32.gmra.mxu0 %v1469
    %v1587 = vpop.f32.mrf.mxu0
    %v1588 = vadd.f32 %v1418, %v1587
    %1589 = vmatmul.f32.gmra.mxu0 %v1472
    %v1590 = vpop.f32.mrf.mxu0
    %v1591 = vadd.f32 %v1418, %v1590
    %1592 = vmatmul.f32.gmra.mxu0 %v1475
    %v1593 = vpop.f32.mrf.mxu0
    %v1594 = vadd.f32 %v1418, %v1593
    %1595 = vmatmul.f32.gmra.mxu0 %v1478
    %v1596 = vpop.f32.mrf.mxu0
    %v1597 = vadd.f32 %v1418, %v1596
    %1598 = vmatmul.f32.gmra.mxu0 %v1481
    %v1599 = vpop.f32.mrf.mxu0
    %v1600 = vadd.f32 %v1418, %v1599
    %1601 = vmatmul.f32.gmra.mxu0 %v1484
    %v1602 = vpop.f32.mrf.mxu0
    %v1603 = vadd.f32 %v1418, %v1602
    %1604 = vmatmul.f32.gmra.mxu0 %v1487
    %v1605 = vpop.f32.mrf.mxu0
    %v1606 = vadd.f32 %v1418, %v1605
    %1607 = vmatmul.f32.gmra.mxu0 %v1490
    %v1608 = vpop.f32.mrf.mxu0
    %v1609 = vadd.f32 %v1418, %v1608
    %1610 = vmatmul.f32.gmra.mxu0 %v1493
    %v1611 = vpop.f32.mrf.mxu0
    %v1612 = vadd.f32 %v1418, %v1611
    %1613 = vmatmul.f32.gmra.mxu0 %v1496
    %v1614 = vpop.f32.mrf.mxu0
    %v1615 = vadd.f32 %v1418, %v1614
    %1616 = vmatmul.f32.gmra.mxu0 %v1499
    %v1617 = vpop.f32.mrf.mxu0
    %v1618 = vadd.f32 %v1418, %v1617
    %1619 = vmatmul.f32.gmra.mxu0 %v1502
    %v1620 = vpop.f32.mrf.mxu0
    %v1621 = vadd.f32 %v1418, %v1620
    %1622 = vmatmul.f32.gmra.mxu0 %v1505
    %v1623 = vpop.f32.mrf.mxu0
    %v1624 = vadd.f32 %v1418, %v1623
    %1625 = vmatmul.f32.gmra.mxu0 %v1508
    %v1626 = vpop.f32.mrf.mxu0
    %v1627 = vadd.f32 %v1418, %v1626
    %1628 = vmatmul.f32.gmra.mxu0 %v1511
    %v1629 = vpop.f32.mrf.mxu0
    %v1630 = vadd.f32 %v1418, %v1629
    %1631 = vmatmul.f32.gmra.mxu0 %v1514
    %v1632 = vpop.f32.mrf.mxu0
    %v1633 = vadd.f32 %v1418, %v1632
    %1634 = vmatmul.f32.gmra.mxu0 %v1517
    %v1635 = vpop.f32.mrf.mxu0
    %v1636 = vadd.f32 %v1418, %v1635
    %1637 = vmatmul.f32.gmra.mxu0 %v1520
    %v1638 = vpop.f32.mrf.mxu0
    %v1639 = vadd.f32 %v1418, %v1638
    %1640 = vdwg.mxu0
    %v1641 = vxor.u32 %v1540, 2147483648
    %v1642 = vxor.u32 %v1543, 2147483648
    %v1643 = vxor.u32 %v1546, 2147483648
    %v1644 = vxor.u32 %v1549, 2147483648
    %v1645 = vxor.u32 %v1552, 2147483648
    %v1646 = vxor.u32 %v1555, 2147483648
    %v1647 = vxor.u32 %v1558, 2147483648
    %v1648 = vxor.u32 %v1561, 2147483648
    %v1649 = vxor.u32 %v1564, 2147483648
    %v1650 = vxor.u32 %v1567, 2147483648
    %v1651 = vxor.u32 %v1570, 2147483648
    %v1652 = vxor.u32 %v1573, 2147483648
    %v1653 = vxor.u32 %v1576, 2147483648
    %v1654 = vxor.u32 %v1579, 2147483648
    %v1655 = vxor.u32 %v1582, 2147483648
    %v1656 = vxor.u32 %v1585, 2147483648
    %v1657 = vxor.u32 %v1588, 2147483648
    %v1658 = vxor.u32 %v1591, 2147483648
    %v1659 = vxor.u32 %v1594, 2147483648
    %v1660 = vxor.u32 %v1597, 2147483648
    %v1661 = vxor.u32 %v1600, 2147483648
    %v1662 = vxor.u32 %v1603, 2147483648
    %v1663 = vxor.u32 %v1606, 2147483648
    %v1664 = vxor.u32 %v1609, 2147483648
    %v1665 = vxor.u32 %v1612, 2147483648
    %v1666 = vxor.u32 %v1615, 2147483648
    %v1667 = vxor.u32 %v1618, 2147483648
    %v1668 = vxor.u32 %v1621, 2147483648
    %v1669 = vxor.u32 %v1624, 2147483648
    %v1670 = vxor.u32 %v1627, 2147483648
    %v1671 = vxor.u32 %v1630, 2147483648
    %v1672 = vxor.u32 %v1633, 2147483648
    %v1673 = vxor.u32 %v1636, 2147483648
    %v1674 = vxor.u32 %v1639, 2147483648
    %v1675 = vmul.f32 %v1641, 1.442695
    %v1676 = vpow.pop %v1675
    %v1677 = vmul.f32 %v1642, 1.442695
    %v1678 = vpow.pop %v1677
    %v1679 = vmul.f32 %v1643, 1.442695
    %v1680 = vpow.pop %v1679
    %v1681 = vmul.f32 %v1644, 1.442695
    %v1682 = vpow.pop %v1681
    %v1683 = vmul.f32 %v1645, 1.442695
    %v1684 = vpow.pop %v1683
    %v1685 = vmul.f32 %v1646, 1.442695
    %v1686 = vpow.pop %v1685
    %v1687 = vmul.f32 %v1647, 1.442695
    %v1688 = vpow.pop %v1687
    %v1689 = vmul.f32 %v1648, 1.442695
    %v1690 = vpow.pop %v1689
    %v1691 = vmul.f32 %v1649, 1.442695
    %v1692 = vpow.pop %v1691
    %v1693 = vmul.f32 %v1650, 1.442695
    %v1694 = vpow.pop %v1693
    %v1695 = vmul.f32 %v1651, 1.442695
    %v1696 = vpow.pop %v1695
    %v1697 = vmul.f32 %v1652, 1.442695
    %v1698 = vpow.pop %v1697
    %v1699 = vmul.f32 %v1653, 1.442695
    %v1700 = vpow.pop %v1699
    %v1701 = vmul.f32 %v1654, 1.442695
    %v1702 = vpow.pop %v1701
    %v1703 = vmul.f32 %v1655, 1.442695
    %v1704 = vpow.pop %v1703
    %v1705 = vmul.f32 %v1656, 1.442695
    %v1706 = vpow.pop %v1705
    %v1707 = vmul.f32 %v1657, 1.442695
    %v1708 = vpow.pop %v1707
    %v1709 = vmul.f32 %v1658, 1.442695
    %v1710 = vpow.pop %v1709
    %v1711 = vmul.f32 %v1659, 1.442695
    %v1712 = vpow.pop %v1711
    %v1713 = vmul.f32 %v1660, 1.442695
    %v1714 = vpow.pop %v1713
    %v1715 = vmul.f32 %v1661, 1.442695
    %v1716 = vpow.pop %v1715
    %v1717 = vmul.f32 %v1662, 1.442695
    %v1718 = vpow.pop %v1717
    %v1719 = vmul.f32 %v1663, 1.442695
    %v1720 = vpow.pop %v1719
    %v1721 = vmul.f32 %v1664, 1.442695
    %v1722 = vpow.pop %v1721
    %v1723 = vmul.f32 %v1665, 1.442695
    %v1724 = vpow.pop %v1723
    %v1725 = vmul.f32 %v1666, 1.442695
    %v1726 = vpow.pop %v1725
    %v1727 = vmul.f32 %v1667, 1.442695
    %v1728 = vpow.pop %v1727
    %v1729 = vmul.f32 %v1668, 1.442695
    %v1730 = vpow.pop %v1729
    %v1731 = vmul.f32 %v1669, 1.442695
    %v1732 = vpow.pop %v1731
    %v1733 = vmul.f32 %v1670, 1.442695
    %v1734 = vpow.pop %v1733
    %v1735 = vmul.f32 %v1671, 1.442695
    %v1736 = vpow.pop %v1735
    %v1737 = vmul.f32 %v1672, 1.442695
    %v1738 = vpow.pop %v1737
    %v1739 = vmul.f32 %v1673, 1.442695
    %v1740 = vpow.pop %v1739
    %v1741 = vmul.f32 %v1674, 1.442695
    %v1742 = vpow.pop %v1741
    %v1743 = vadd.f32 %v1676, 1.0
    %v1744 = vadd.f32 %v1678, 1.0
    %v1745 = vadd.f32 %v1680, 1.0
    %v1746 = vadd.f32 %v1682, 1.0
    %v1747 = vadd.f32 %v1684, 1.0
    %v1748 = vadd.f32 %v1686, 1.0
    %v1749 = vadd.f32 %v1688, 1.0
    %v1750 = vadd.f32 %v1690, 1.0
    %v1751 = vadd.f32 %v1692, 1.0
    %v1752 = vadd.f32 %v1694, 1.0
    %v1753 = vadd.f32 %v1696, 1.0
    %v1754 = vadd.f32 %v1698, 1.0
    %v1755 = vadd.f32 %v1700, 1.0
    %v1756 = vadd.f32 %v1702, 1.0
    %v1757 = vadd.f32 %v1704, 1.0
    %v1758 = vadd.f32 %v1706, 1.0
    %v1759 = vadd.f32 %v1708, 1.0
    %v1760 = vadd.f32 %v1710, 1.0
    %v1761 = vadd.f32 %v1712, 1.0
    %v1762 = vadd.f32 %v1714, 1.0
    %v1763 = vadd.f32 %v1716, 1.0
    %v1764 = vadd.f32 %v1718, 1.0
    %v1765 = vadd.f32 %v1720, 1.0
    %v1766 = vadd.f32 %v1722, 1.0
    %v1767 = vadd.f32 %v1724, 1.0
    %v1768 = vadd.f32 %v1726, 1.0
    %v1769 = vadd.f32 %v1728, 1.0
    %v1770 = vadd.f32 %v1730, 1.0
    %v1771 = vadd.f32 %v1732, 1.0
    %v1772 = vadd.f32 %v1734, 1.0
    %v1773 = vadd.f32 %v1736, 1.0
    %v1774 = vadd.f32 %v1738, 1.0
    %v1775 = vadd.f32 %v1740, 1.0
    %v1776 = vadd.f32 %v1742, 1.0
    %v1777 = vrcp.pop %v1743
    %v1778 = vmul.f32 %v1743, %v1777
    %v1779 = vsub.f32 1.0, %v1778
    %v1780 = vmul.f32 %v1777, %v1779
    %v1781 = vadd.f32 %v1777, %v1780
    %vm1782 = vweird.f32 %v1743
    %vm1783 = vweird.f32 %v1777
    %vm1784 = vmor %vm1782, %vm1783
    %v1785 = vsel %vm1784, %v1777, %v1781
    %v1786 = vand.u32 2147483647, %v1743
    %vm1787 = vcmp.eq.f32.partialorder %v1786, 8.507059e+37
    %v1788 = vand.u32 %v1743, 2147483648
    %v1789 = vor.u32 1.1754944e-38, %v1788
    %v1790 = vsel %vm1787, %v1789, %v1785
    %v1791 = vmul.f32 1.0, %v1790
    %v1792 = vrcp.pop %v1744
    %v1793 = vmul.f32 %v1744, %v1792
    %v1794 = vsub.f32 1.0, %v1793
    %v1795 = vmul.f32 %v1792, %v1794
    %v1796 = vadd.f32 %v1792, %v1795
    %vm1797 = vweird.f32 %v1744
    %vm1798 = vweird.f32 %v1792
    %vm1799 = vmor %vm1797, %vm1798
    %v1800 = vsel %vm1799, %v1792, %v1796
    %v1801 = vand.u32 2147483647, %v1744
    %vm1802 = vcmp.eq.f32.partialorder %v1801, 8.507059e+37
    %v1803 = vand.u32 %v1744, 2147483648
    %v1804 = vor.u32 1.1754944e-38, %v1803
    %v1805 = vsel %vm1802, %v1804, %v1800
    %v1806 = vmul.f32 1.0, %v1805
    %v1807 = vrcp.pop %v1745
    %v1808 = vmul.f32 %v1745, %v1807
    %v1809 = vsub.f32 1.0, %v1808
    %v1810 = vmul.f32 %v1807, %v1809
    %v1811 = vadd.f32 %v1807, %v1810
    %vm1812 = vweird.f32 %v1745
    %vm1813 = vweird.f32 %v1807
    %vm1814 = vmor %vm1812, %vm1813
    %v1815 = vsel %vm1814, %v1807, %v1811
    %v1816 = vand.u32 2147483647, %v1745
    %vm1817 = vcmp.eq.f32.partialorder %v1816, 8.507059e+37
    %v1818 = vand.u32 %v1745, 2147483648
    %v1819 = vor.u32 1.1754944e-38, %v1818
    %v1820 = vsel %vm1817, %v1819, %v1815
    %v1821 = vmul.f32 1.0, %v1820
    %v1822 = vrcp.pop %v1746
    %v1823 = vmul.f32 %v1746, %v1822
    %v1824 = vsub.f32 1.0, %v1823
    %v1825 = vmul.f32 %v1822, %v1824
    %v1826 = vadd.f32 %v1822, %v1825
    %vm1827 = vweird.f32 %v1746
    %vm1828 = vweird.f32 %v1822
    %vm1829 = vmor %vm1827, %vm1828
    %v1830 = vsel %vm1829, %v1822, %v1826
    %v1831 = vand.u32 2147483647, %v1746
    %vm1832 = vcmp.eq.f32.partialorder %v1831, 8.507059e+37
    %v1833 = vand.u32 %v1746, 2147483648
    %v1834 = vor.u32 1.1754944e-38, %v1833
    %v1835 = vsel %vm1832, %v1834, %v1830
    %v1836 = vmul.f32 1.0, %v1835
    %v1837 = vrcp.pop %v1747
    %v1838 = vmul.f32 %v1747, %v1837
    %v1839 = vsub.f32 1.0, %v1838
    %v1840 = vmul.f32 %v1837, %v1839
    %v1841 = vadd.f32 %v1837, %v1840
    %vm1842 = vweird.f32 %v1747
    %vm1843 = vweird.f32 %v1837
    %vm1844 = vmor %vm1842, %vm1843
    %v1845 = vsel %vm1844, %v1837, %v1841
    %v1846 = vand.u32 2147483647, %v1747
    %vm1847 = vcmp.eq.f32.partialorder %v1846, 8.507059e+37
    %v1848 = vand.u32 %v1747, 2147483648
    %v1849 = vor.u32 1.1754944e-38, %v1848
    %v1850 = vsel %vm1847, %v1849, %v1845
    %v1851 = vmul.f32 1.0, %v1850
    %v1852 = vrcp.pop %v1748
    %v1853 = vmul.f32 %v1748, %v1852
    %v1854 = vsub.f32 1.0, %v1853
    %v1855 = vmul.f32 %v1852, %v1854
    %v1856 = vadd.f32 %v1852, %v1855
    %vm1857 = vweird.f32 %v1748
    %vm1858 = vweird.f32 %v1852
    %vm1859 = vmor %vm1857, %vm1858
    %v1860 = vsel %vm1859, %v1852, %v1856
    %v1861 = vand.u32 2147483647, %v1748
    %vm1862 = vcmp.eq.f32.partialorder %v1861, 8.507059e+37
    %v1863 = vand.u32 %v1748, 2147483648
    %v1864 = vor.u32 1.1754944e-38, %v1863
    %v1865 = vsel %vm1862, %v1864, %v1860
    %v1866 = vmul.f32 1.0, %v1865
    %v1867 = vrcp.pop %v1749
    %v1868 = vmul.f32 %v1749, %v1867
    %v1869 = vsub.f32 1.0, %v1868
    %v1870 = vmul.f32 %v1867, %v1869
    %v1871 = vadd.f32 %v1867, %v1870
    %vm1872 = vweird.f32 %v1749
    %vm1873 = vweird.f32 %v1867
    %vm1874 = vmor %vm1872, %vm1873
    %v1875 = vsel %vm1874, %v1867, %v1871
    %v1876 = vand.u32 2147483647, %v1749
    %vm1877 = vcmp.eq.f32.partialorder %v1876, 8.507059e+37
    %v1878 = vand.u32 %v1749, 2147483648
    %v1879 = vor.u32 1.1754944e-38, %v1878
    %v1880 = vsel %vm1877, %v1879, %v1875
    %v1881 = vmul.f32 1.0, %v1880
    %v1882 = vrcp.pop %v1750
    %v1883 = vmul.f32 %v1750, %v1882
    %v1884 = vsub.f32 1.0, %v1883
    %v1885 = vmul.f32 %v1882, %v1884
    %v1886 = vadd.f32 %v1882, %v1885
    %vm1887 = vweird.f32 %v1750
    %vm1888 = vweird.f32 %v1882
    %vm1889 = vmor %vm1887, %vm1888
    %v1890 = vsel %vm1889, %v1882, %v1886
    %v1891 = vand.u32 2147483647, %v1750
    %vm1892 = vcmp.eq.f32.partialorder %v1891, 8.507059e+37
    %v1893 = vand.u32 %v1750, 2147483648
    %v1894 = vor.u32 1.1754944e-38, %v1893
    %v1895 = vsel %vm1892, %v1894, %v1890
    %v1896 = vmul.f32 1.0, %v1895
    %v1897 = vrcp.pop %v1751
    %v1898 = vmul.f32 %v1751, %v1897
    %v1899 = vsub.f32 1.0, %v1898
    %v1900 = vmul.f32 %v1897, %v1899
    %v1901 = vadd.f32 %v1897, %v1900
    %vm1902 = vweird.f32 %v1751
    %vm1903 = vweird.f32 %v1897
    %vm1904 = vmor %vm1902, %vm1903
    %v1905 = vsel %vm1904, %v1897, %v1901
    %v1906 = vand.u32 2147483647, %v1751
    %vm1907 = vcmp.eq.f32.partialorder %v1906, 8.507059e+37
    %v1908 = vand.u32 %v1751, 2147483648
    %v1909 = vor.u32 1.1754944e-38, %v1908
    %v1910 = vsel %vm1907, %v1909, %v1905
    %v1911 = vmul.f32 1.0, %v1910
    %v1912 = vrcp.pop %v1752
    %v1913 = vmul.f32 %v1752, %v1912
    %v1914 = vsub.f32 1.0, %v1913
    %v1915 = vmul.f32 %v1912, %v1914
    %v1916 = vadd.f32 %v1912, %v1915
    %vm1917 = vweird.f32 %v1752
    %vm1918 = vweird.f32 %v1912
    %vm1919 = vmor %vm1917, %vm1918
    %v1920 = vsel %vm1919, %v1912, %v1916
    %v1921 = vand.u32 2147483647, %v1752
    %vm1922 = vcmp.eq.f32.partialorder %v1921, 8.507059e+37
    %v1923 = vand.u32 %v1752, 2147483648
    %v1924 = vor.u32 1.1754944e-38, %v1923
    %v1925 = vsel %vm1922, %v1924, %v1920
    %v1926 = vmul.f32 1.0, %v1925
    %v1927 = vrcp.pop %v1753
    %v1928 = vmul.f32 %v1753, %v1927
    %v1929 = vsub.f32 1.0, %v1928
    %v1930 = vmul.f32 %v1927, %v1929
    %v1931 = vadd.f32 %v1927, %v1930
    %vm1932 = vweird.f32 %v1753
    %vm1933 = vweird.f32 %v1927
    %vm1934 = vmor %vm1932, %vm1933
    %v1935 = vsel %vm1934, %v1927, %v1931
    %v1936 = vand.u32 2147483647, %v1753
    %vm1937 = vcmp.eq.f32.partialorder %v1936, 8.507059e+37
    %v1938 = vand.u32 %v1753, 2147483648
    %v1939 = vor.u32 1.1754944e-38, %v1938
    %v1940 = vsel %vm1937, %v1939, %v1935
    %v1941 = vmul.f32 1.0, %v1940
    %v1942 = vrcp.pop %v1754
    %v1943 = vmul.f32 %v1754, %v1942
    %v1944 = vsub.f32 1.0, %v1943
    %v1945 = vmul.f32 %v1942, %v1944
    %v1946 = vadd.f32 %v1942, %v1945
    %vm1947 = vweird.f32 %v1754
    %vm1948 = vweird.f32 %v1942
    %vm1949 = vmor %vm1947, %vm1948
    %v1950 = vsel %vm1949, %v1942, %v1946
    %v1951 = vand.u32 2147483647, %v1754
    %vm1952 = vcmp.eq.f32.partialorder %v1951, 8.507059e+37
    %v1953 = vand.u32 %v1754, 2147483648
    %v1954 = vor.u32 1.1754944e-38, %v1953
    %v1955 = vsel %vm1952, %v1954, %v1950
    %v1956 = vmul.f32 1.0, %v1955
    %v1957 = vrcp.pop %v1755
    %v1958 = vmul.f32 %v1755, %v1957
    %v1959 = vsub.f32 1.0, %v1958
    %v1960 = vmul.f32 %v1957, %v1959
    %v1961 = vadd.f32 %v1957, %v1960
    %vm1962 = vweird.f32 %v1755
    %vm1963 = vweird.f32 %v1957
    %vm1964 = vmor %vm1962, %vm1963
    %v1965 = vsel %vm1964, %v1957, %v1961
    %v1966 = vand.u32 2147483647, %v1755
    %vm1967 = vcmp.eq.f32.partialorder %v1966, 8.507059e+37
    %v1968 = vand.u32 %v1755, 2147483648
    %v1969 = vor.u32 1.1754944e-38, %v1968
    %v1970 = vsel %vm1967, %v1969, %v1965
    %v1971 = vmul.f32 1.0, %v1970
    %v1972 = vrcp.pop %v1756
    %v1973 = vmul.f32 %v1756, %v1972
    %v1974 = vsub.f32 1.0, %v1973
    %v1975 = vmul.f32 %v1972, %v1974
    %v1976 = vadd.f32 %v1972, %v1975
    %vm1977 = vweird.f32 %v1756
    %vm1978 = vweird.f32 %v1972
    %vm1979 = vmor %vm1977, %vm1978
    %v1980 = vsel %vm1979, %v1972, %v1976
    %v1981 = vand.u32 2147483647, %v1756
    %vm1982 = vcmp.eq.f32.partialorder %v1981, 8.507059e+37
    %v1983 = vand.u32 %v1756, 2147483648
    %v1984 = vor.u32 1.1754944e-38, %v1983
    %v1985 = vsel %vm1982, %v1984, %v1980
    %v1986 = vmul.f32 1.0, %v1985
    %v1987 = vrcp.pop %v1757
    %v1988 = vmul.f32 %v1757, %v1987
    %v1989 = vsub.f32 1.0, %v1988
    %v1990 = vmul.f32 %v1987, %v1989
    %v1991 = vadd.f32 %v1987, %v1990
    %vm1992 = vweird.f32 %v1757
    %vm1993 = vweird.f32 %v1987
    %vm1994 = vmor %vm1992, %vm1993
    %v1995 = vsel %vm1994, %v1987, %v1991
    %v1996 = vand.u32 2147483647, %v1757
    %vm1997 = vcmp.eq.f32.partialorder %v1996, 8.507059e+37
    %v1998 = vand.u32 %v1757, 2147483648
    %v1999 = vor.u32 1.1754944e-38, %v1998
    %v2000 = vsel %vm1997, %v1999, %v1995
    %v2001 = vmul.f32 1.0, %v2000
    %v2002 = vrcp.pop %v1758
    %v2003 = vmul.f32 %v1758, %v2002
    %v2004 = vsub.f32 1.0, %v2003
    %v2005 = vmul.f32 %v2002, %v2004
    %v2006 = vadd.f32 %v2002, %v2005
    %vm2007 = vweird.f32 %v1758
    %vm2008 = vweird.f32 %v2002
    %vm2009 = vmor %vm2007, %vm2008
    %v2010 = vsel %vm2009, %v2002, %v2006
    %v2011 = vand.u32 2147483647, %v1758
    %vm2012 = vcmp.eq.f32.partialorder %v2011, 8.507059e+37
    %v2013 = vand.u32 %v1758, 2147483648
    %v2014 = vor.u32 1.1754944e-38, %v2013
    %v2015 = vsel %vm2012, %v2014, %v2010
    %v2016 = vmul.f32 1.0, %v2015
    %v2017 = vrcp.pop %v1759
    %v2018 = vmul.f32 %v1759, %v2017
    %v2019 = vsub.f32 1.0, %v2018
    %v2020 = vmul.f32 %v2017, %v2019
    %v2021 = vadd.f32 %v2017, %v2020
    %vm2022 = vweird.f32 %v1759
    %vm2023 = vweird.f32 %v2017
    %vm2024 = vmor %vm2022, %vm2023
    %v2025 = vsel %vm2024, %v2017, %v2021
    %v2026 = vand.u32 2147483647, %v1759
    %vm2027 = vcmp.eq.f32.partialorder %v2026, 8.507059e+37
    %v2028 = vand.u32 %v1759, 2147483648
    %v2029 = vor.u32 1.1754944e-38, %v2028
    %v2030 = vsel %vm2027, %v2029, %v2025
    %v2031 = vmul.f32 1.0, %v2030
    %v2032 = vrcp.pop %v1760
    %v2033 = vmul.f32 %v1760, %v2032
    %v2034 = vsub.f32 1.0, %v2033
    %v2035 = vmul.f32 %v2032, %v2034
    %v2036 = vadd.f32 %v2032, %v2035
    %vm2037 = vweird.f32 %v1760
    %vm2038 = vweird.f32 %v2032
    %vm2039 = vmor %vm2037, %vm2038
    %v2040 = vsel %vm2039, %v2032, %v2036
    %v2041 = vand.u32 2147483647, %v1760
    %vm2042 = vcmp.eq.f32.partialorder %v2041, 8.507059e+37
    %v2043 = vand.u32 %v1760, 2147483648
    %v2044 = vor.u32 1.1754944e-38, %v2043
    %v2045 = vsel %vm2042, %v2044, %v2040
    %v2046 = vmul.f32 1.0, %v2045
    %v2047 = vrcp.pop %v1761
    %v2048 = vmul.f32 %v1761, %v2047
    %v2049 = vsub.f32 1.0, %v2048
    %v2050 = vmul.f32 %v2047, %v2049
    %v2051 = vadd.f32 %v2047, %v2050
    %vm2052 = vweird.f32 %v1761
    %vm2053 = vweird.f32 %v2047
    %vm2054 = vmor %vm2052, %vm2053
    %v2055 = vsel %vm2054, %v2047, %v2051
    %v2056 = vand.u32 2147483647, %v1761
    %vm2057 = vcmp.eq.f32.partialorder %v2056, 8.507059e+37
    %v2058 = vand.u32 %v1761, 2147483648
    %v2059 = vor.u32 1.1754944e-38, %v2058
    %v2060 = vsel %vm2057, %v2059, %v2055
    %v2061 = vmul.f32 1.0, %v2060
    %v2062 = vrcp.pop %v1762
    %v2063 = vmul.f32 %v1762, %v2062
    %v2064 = vsub.f32 1.0, %v2063
    %v2065 = vmul.f32 %v2062, %v2064
    %v2066 = vadd.f32 %v2062, %v2065
    %vm2067 = vweird.f32 %v1762
    %vm2068 = vweird.f32 %v2062
    %vm2069 = vmor %vm2067, %vm2068
    %v2070 = vsel %vm2069, %v2062, %v2066
    %v2071 = vand.u32 2147483647, %v1762
    %vm2072 = vcmp.eq.f32.partialorder %v2071, 8.507059e+37
    %v2073 = vand.u32 %v1762, 2147483648
    %v2074 = vor.u32 1.1754944e-38, %v2073
    %v2075 = vsel %vm2072, %v2074, %v2070
    %v2076 = vmul.f32 1.0, %v2075
    %v2077 = vrcp.pop %v1763
    %v2078 = vmul.f32 %v1763, %v2077
    %v2079 = vsub.f32 1.0, %v2078
    %v2080 = vmul.f32 %v2077, %v2079
    %v2081 = vadd.f32 %v2077, %v2080
    %vm2082 = vweird.f32 %v1763
    %vm2083 = vweird.f32 %v2077
    %vm2084 = vmor %vm2082, %vm2083
    %v2085 = vsel %vm2084, %v2077, %v2081
    %v2086 = vand.u32 2147483647, %v1763
    %vm2087 = vcmp.eq.f32.partialorder %v2086, 8.507059e+37
    %v2088 = vand.u32 %v1763, 2147483648
    %v2089 = vor.u32 1.1754944e-38, %v2088
    %v2090 = vsel %vm2087, %v2089, %v2085
    %v2091 = vmul.f32 1.0, %v2090
    %v2092 = vrcp.pop %v1764
    %v2093 = vmul.f32 %v1764, %v2092
    %v2094 = vsub.f32 1.0, %v2093
    %v2095 = vmul.f32 %v2092, %v2094
    %v2096 = vadd.f32 %v2092, %v2095
    %vm2097 = vweird.f32 %v1764
    %vm2098 = vweird.f32 %v2092
    %vm2099 = vmor %vm2097, %vm2098
    %v2100 = vsel %vm2099, %v2092, %v2096
    %v2101 = vand.u32 2147483647, %v1764
    %vm2102 = vcmp.eq.f32.partialorder %v2101, 8.507059e+37
    %v2103 = vand.u32 %v1764, 2147483648
    %v2104 = vor.u32 1.1754944e-38, %v2103
    %v2105 = vsel %vm2102, %v2104, %v2100
    %v2106 = vmul.f32 1.0, %v2105
    %v2107 = vrcp.pop %v1765
    %v2108 = vmul.f32 %v1765, %v2107
    %v2109 = vsub.f32 1.0, %v2108
    %v2110 = vmul.f32 %v2107, %v2109
    %v2111 = vadd.f32 %v2107, %v2110
    %vm2112 = vweird.f32 %v1765
    %vm2113 = vweird.f32 %v2107
    %vm2114 = vmor %vm2112, %vm2113
    %v2115 = vsel %vm2114, %v2107, %v2111
    %v2116 = vand.u32 2147483647, %v1765
    %vm2117 = vcmp.eq.f32.partialorder %v2116, 8.507059e+37
    %v2118 = vand.u32 %v1765, 2147483648
    %v2119 = vor.u32 1.1754944e-38, %v2118
    %v2120 = vsel %vm2117, %v2119, %v2115
    %v2121 = vmul.f32 1.0, %v2120
    %v2122 = vrcp.pop %v1766
    %v2123 = vmul.f32 %v1766, %v2122
    %v2124 = vsub.f32 1.0, %v2123
    %v2125 = vmul.f32 %v2122, %v2124
    %v2126 = vadd.f32 %v2122, %v2125
    %vm2127 = vweird.f32 %v1766
    %vm2128 = vweird.f32 %v2122
    %vm2129 = vmor %vm2127, %vm2128
    %v2130 = vsel %vm2129, %v2122, %v2126
    %v2131 = vand.u32 2147483647, %v1766
    %vm2132 = vcmp.eq.f32.partialorder %v2131, 8.507059e+37
    %v2133 = vand.u32 %v1766, 2147483648
    %v2134 = vor.u32 1.1754944e-38, %v2133
    %v2135 = vsel %vm2132, %v2134, %v2130
    %v2136 = vmul.f32 1.0, %v2135
    %v2137 = vrcp.pop %v1767
    %v2138 = vmul.f32 %v1767, %v2137
    %v2139 = vsub.f32 1.0, %v2138
    %v2140 = vmul.f32 %v2137, %v2139
    %v2141 = vadd.f32 %v2137, %v2140
    %vm2142 = vweird.f32 %v1767
    %vm2143 = vweird.f32 %v2137
    %vm2144 = vmor %vm2142, %vm2143
    %v2145 = vsel %vm2144, %v2137, %v2141
    %v2146 = vand.u32 2147483647, %v1767
    %vm2147 = vcmp.eq.f32.partialorder %v2146, 8.507059e+37
    %v2148 = vand.u32 %v1767, 2147483648
    %v2149 = vor.u32 1.1754944e-38, %v2148
    %v2150 = vsel %vm2147, %v2149, %v2145
    %v2151 = vmul.f32 1.0, %v2150
    %v2152 = vrcp.pop %v1768
    %v2153 = vmul.f32 %v1768, %v2152
    %v2154 = vsub.f32 1.0, %v2153
    %v2155 = vmul.f32 %v2152, %v2154
    %v2156 = vadd.f32 %v2152, %v2155
    %vm2157 = vweird.f32 %v1768
    %vm2158 = vweird.f32 %v2152
    %vm2159 = vmor %vm2157, %vm2158
    %v2160 = vsel %vm2159, %v2152, %v2156
    %v2161 = vand.u32 2147483647, %v1768
    %vm2162 = vcmp.eq.f32.partialorder %v2161, 8.507059e+37
    %v2163 = vand.u32 %v1768, 2147483648
    %v2164 = vor.u32 1.1754944e-38, %v2163
    %v2165 = vsel %vm2162, %v2164, %v2160
    %v2166 = vmul.f32 1.0, %v2165
    %v2167 = vrcp.pop %v1769
    %v2168 = vmul.f32 %v1769, %v2167
    %v2169 = vsub.f32 1.0, %v2168
    %v2170 = vmul.f32 %v2167, %v2169
    %v2171 = vadd.f32 %v2167, %v2170
    %vm2172 = vweird.f32 %v1769
    %vm2173 = vweird.f32 %v2167
    %vm2174 = vmor %vm2172, %vm2173
    %v2175 = vsel %vm2174, %v2167, %v2171
    %v2176 = vand.u32 2147483647, %v1769
    %vm2177 = vcmp.eq.f32.partialorder %v2176, 8.507059e+37
    %v2178 = vand.u32 %v1769, 2147483648
    %v2179 = vor.u32 1.1754944e-38, %v2178
    %v2180 = vsel %vm2177, %v2179, %v2175
    %v2181 = vmul.f32 1.0, %v2180
    %v2182 = vrcp.pop %v1770
    %v2183 = vmul.f32 %v1770, %v2182
    %v2184 = vsub.f32 1.0, %v2183
    %v2185 = vmul.f32 %v2182, %v2184
    %v2186 = vadd.f32 %v2182, %v2185
    %vm2187 = vweird.f32 %v1770
    %vm2188 = vweird.f32 %v2182
    %vm2189 = vmor %vm2187, %vm2188
    %v2190 = vsel %vm2189, %v2182, %v2186
    %v2191 = vand.u32 2147483647, %v1770
    %vm2192 = vcmp.eq.f32.partialorder %v2191, 8.507059e+37
    %v2193 = vand.u32 %v1770, 2147483648
    %v2194 = vor.u32 1.1754944e-38, %v2193
    %v2195 = vsel %vm2192, %v2194, %v2190
    %v2196 = vmul.f32 1.0, %v2195
    %v2197 = vrcp.pop %v1771
    %v2198 = vmul.f32 %v1771, %v2197
    %v2199 = vsub.f32 1.0, %v2198
    %v2200 = vmul.f32 %v2197, %v2199
    %v2201 = vadd.f32 %v2197, %v2200
    %vm2202 = vweird.f32 %v1771
    %vm2203 = vweird.f32 %v2197
    %vm2204 = vmor %vm2202, %vm2203
    %v2205 = vsel %vm2204, %v2197, %v2201
    %v2206 = vand.u32 2147483647, %v1771
    %vm2207 = vcmp.eq.f32.partialorder %v2206, 8.507059e+37
    %v2208 = vand.u32 %v1771, 2147483648
    %v2209 = vor.u32 1.1754944e-38, %v2208
    %v2210 = vsel %vm2207, %v2209, %v2205
    %v2211 = vmul.f32 1.0, %v2210
    %v2212 = vrcp.pop %v1772
    %v2213 = vmul.f32 %v1772, %v2212
    %v2214 = vsub.f32 1.0, %v2213
    %v2215 = vmul.f32 %v2212, %v2214
    %v2216 = vadd.f32 %v2212, %v2215
    %vm2217 = vweird.f32 %v1772
    %vm2218 = vweird.f32 %v2212
    %vm2219 = vmor %vm2217, %vm2218
    %v2220 = vsel %vm2219, %v2212, %v2216
    %v2221 = vand.u32 2147483647, %v1772
    %vm2222 = vcmp.eq.f32.partialorder %v2221, 8.507059e+37
    %v2223 = vand.u32 %v1772, 2147483648
    %v2224 = vor.u32 1.1754944e-38, %v2223
    %v2225 = vsel %vm2222, %v2224, %v2220
    %v2226 = vmul.f32 1.0, %v2225
    %v2227 = vrcp.pop %v1773
    %v2228 = vmul.f32 %v1773, %v2227
    %v2229 = vsub.f32 1.0, %v2228
    %v2230 = vmul.f32 %v2227, %v2229
    %v2231 = vadd.f32 %v2227, %v2230
    %vm2232 = vweird.f32 %v1773
    %vm2233 = vweird.f32 %v2227
    %vm2234 = vmor %vm2232, %vm2233
    %v2235 = vsel %vm2234, %v2227, %v2231
    %v2236 = vand.u32 2147483647, %v1773
    %vm2237 = vcmp.eq.f32.partialorder %v2236, 8.507059e+37
    %v2238 = vand.u32 %v1773, 2147483648
    %v2239 = vor.u32 1.1754944e-38, %v2238
    %v2240 = vsel %vm2237, %v2239, %v2235
    %v2241 = vmul.f32 1.0, %v2240
    %v2242 = vrcp.pop %v1774
    %v2243 = vmul.f32 %v1774, %v2242
    %v2244 = vsub.f32 1.0, %v2243
    %v2245 = vmul.f32 %v2242, %v2244
    %v2246 = vadd.f32 %v2242, %v2245
    %vm2247 = vweird.f32 %v1774
    %vm2248 = vweird.f32 %v2242
    %vm2249 = vmor %vm2247, %vm2248
    %v2250 = vsel %vm2249, %v2242, %v2246
    %v2251 = vand.u32 2147483647, %v1774
    %vm2252 = vcmp.eq.f32.partialorder %v2251, 8.507059e+37
    %v2253 = vand.u32 %v1774, 2147483648
    %v2254 = vor.u32 1.1754944e-38, %v2253
    %v2255 = vsel %vm2252, %v2254, %v2250
    %v2256 = vmul.f32 1.0, %v2255
    %v2257 = vrcp.pop %v1775
    %v2258 = vmul.f32 %v1775, %v2257
    %v2259 = vsub.f32 1.0, %v2258
    %v2260 = vmul.f32 %v2257, %v2259
    %v2261 = vadd.f32 %v2257, %v2260
    %vm2262 = vweird.f32 %v1775
    %vm2263 = vweird.f32 %v2257
    %vm2264 = vmor %vm2262, %vm2263
    %v2265 = vsel %vm2264, %v2257, %v2261
    %v2266 = vand.u32 2147483647, %v1775
    %vm2267 = vcmp.eq.f32.partialorder %v2266, 8.507059e+37
    %v2268 = vand.u32 %v1775, 2147483648
    %v2269 = vor.u32 1.1754944e-38, %v2268
    %v2270 = vsel %vm2267, %v2269, %v2265
    %v2271 = vmul.f32 1.0, %v2270
    %v2272 = vrcp.pop %v1776
    %v2273 = vmul.f32 %v1776, %v2272
    %v2274 = vsub.f32 1.0, %v2273
    %v2275 = vmul.f32 %v2272, %v2274
    %v2276 = vadd.f32 %v2272, %v2275
    %vm2277 = vweird.f32 %v1776
    %vm2278 = vweird.f32 %v2272
    %vm2279 = vmor %vm2277, %vm2278
    %v2280 = vsel %vm2279, %v2272, %v2276
    %v2281 = vand.u32 2147483647, %v1776
    %vm2282 = vcmp.eq.f32.partialorder %v2281, 8.507059e+37
    %v2283 = vand.u32 %v1776, 2147483648
    %v2284 = vor.u32 1.1754944e-38, %v2283
    %v2285 = vsel %vm2282, %v2284, %v2280
    %v2286 = vmul.f32 1.0, %v2285
    %v2287 = vmax.f32 %v1540, 0.0
    %v2288 = vmax.f32 %v1543, 0.0
    %v2289 = vmax.f32 %v1546, 0.0
    %v2290 = vmax.f32 %v1549, 0.0
    %v2291 = vmax.f32 %v1552, 0.0
    %v2292 = vmax.f32 %v1555, 0.0
    %v2293 = vmax.f32 %v1558, 0.0
    %v2294 = vmax.f32 %v1561, 0.0
    %v2295 = vmax.f32 %v1564, 0.0
    %v2296 = vmax.f32 %v1567, 0.0
    %v2297 = vmax.f32 %v1570, 0.0
    %v2298 = vmax.f32 %v1573, 0.0
    %v2299 = vmax.f32 %v1576, 0.0
    %v2300 = vmax.f32 %v1579, 0.0
    %v2301 = vmax.f32 %v1582, 0.0
    %v2302 = vmax.f32 %v1585, 0.0
    %v2303 = vmax.f32 %v1588, 0.0
    %v2304 = vmax.f32 %v1591, 0.0
    %v2305 = vmax.f32 %v1594, 0.0
    %v2306 = vmax.f32 %v1597, 0.0
    %v2307 = vmax.f32 %v1600, 0.0
    %v2308 = vmax.f32 %v1603, 0.0
    %v2309 = vmax.f32 %v1606, 0.0
    %v2310 = vmax.f32 %v1609, 0.0
    %v2311 = vmax.f32 %v1612, 0.0
    %v2312 = vmax.f32 %v1615, 0.0
    %v2313 = vmax.f32 %v1618, 0.0
    %v2314 = vmax.f32 %v1621, 0.0
    %v2315 = vmax.f32 %v1624, 0.0
    %v2316 = vmax.f32 %v1627, 0.0
    %v2317 = vmax.f32 %v1630, 0.0
    %v2318 = vmax.f32 %v1633, 0.0
    %v2319 = vmax.f32 %v1636, 0.0
    %v2320 = vmax.f32 %v1639, 0.0
    %2355 = vrot.lane.b32.xlu0 %v2287, 96
    %v2356 = vpop.permute.xlu0 %2355
    %2357 = vrot.lane.b32.xlu0 %v2288, 96
    %v2358 = vpop.permute.xlu0 %2357
    %2359 = vrot.lane.b32.xlu0 %v2289, 96
    %v2360 = vpop.permute.xlu0 %2359
    %2361 = vrot.lane.b32.xlu0 %v2290, 96
    %v2362 = vpop.permute.xlu0 %2361
    %2363 = vrot.lane.b32.xlu0 %v2291, 96
    %v2364 = vpop.permute.xlu0 %2363
    %2365 = vrot.lane.b32.xlu0 %v2292, 96
    %v2366 = vpop.permute.xlu0 %2365
    %2367 = vrot.lane.b32.xlu0 %v2293, 96
    %v2368 = vpop.permute.xlu0 %2367
    %2369 = vrot.lane.b32.xlu0 %v2294, 96
    %v2370 = vpop.permute.xlu0 %2369
    %2371 = vrot.lane.b32.xlu0 %v2295, 96
    %v2372 = vpop.permute.xlu0 %2371
    %2373 = vrot.lane.b32.xlu0 %v2296, 96
    %v2374 = vpop.permute.xlu0 %2373
    %2375 = vrot.lane.b32.xlu0 %v2297, 96
    %v2376 = vpop.permute.xlu0 %2375
    %2377 = vrot.lane.b32.xlu0 %v2298, 96
    %v2378 = vpop.permute.xlu0 %2377
    %2379 = vrot.lane.b32.xlu0 %v2299, 96
    %v2380 = vpop.permute.xlu0 %2379
    %2381 = vrot.lane.b32.xlu0 %v2300, 96
    %v2382 = vpop.permute.xlu0 %2381
    %2383 = vrot.lane.b32.xlu0 %v2301, 96
    %v2384 = vpop.permute.xlu0 %2383
    %2385 = vrot.lane.b32.xlu0 %v2302, 96
    %v2386 = vpop.permute.xlu0 %2385
    %2387 = vrot.lane.b32.xlu0 %v2303, 96
    %v2388 = vpop.permute.xlu0 %2387
    %2389 = vrot.lane.b32.xlu0 %v2304, 96
    %v2390 = vpop.permute.xlu0 %2389
    %2391 = vrot.lane.b32.xlu0 %v2305, 96
    %v2392 = vpop.permute.xlu0 %2391
    %2393 = vrot.lane.b32.xlu0 %v2306, 96
    %v2394 = vpop.permute.xlu0 %2393
    %2395 = vrot.lane.b32.xlu0 %v2307, 96
    %v2396 = vpop.permute.xlu0 %2395
    %2397 = vrot.lane.b32.xlu0 %v2308, 96
    %v2398 = vpop.permute.xlu0 %2397
    %2399 = vrot.lane.b32.xlu0 %v2309, 96
    %v2400 = vpop.permute.xlu0 %2399
    %2401 = vrot.lane.b32.xlu0 %v2310, 96
    %v2402 = vpop.permute.xlu0 %2401
    %2403 = vrot.lane.b32.xlu0 %v2311, 96
    %v2404 = vpop.permute.xlu0 %2403
    %2405 = vrot.lane.b32.xlu0 %v2312, 96
    %v2406 = vpop.permute.xlu0 %2405
    %2407 = vrot.lane.b32.xlu0 %v2313, 96
    %v2408 = vpop.permute.xlu0 %2407
    %2409 = vrot.lane.b32.xlu0 %v2314, 96
    %v2410 = vpop.permute.xlu0 %2409
    %2411 = vrot.lane.b32.xlu0 %v2315, 96
    %v2412 = vpop.permute.xlu0 %2411
    %2413 = vrot.lane.b32.xlu0 %v2316, 96
    %v2414 = vpop.permute.xlu0 %2413
    %2415 = vrot.lane.b32.xlu0 %v2317, 96
    %v2416 = vpop.permute.xlu0 %2415
    %2417 = vrot.lane.b32.xlu0 %v2318, 96
    %v2418 = vpop.permute.xlu0 %2417
    %2419 = vrot.lane.b32.xlu0 %v2319, 96
    %v2420 = vpop.permute.xlu0 %2419
    %2421 = vrot.lane.b32.xlu0 %v2320, 96
    %v2422 = vpop.permute.xlu0 %2421
    %v2457 = vmul.f32 %v1791, %v2356
    %v2458 = vmul.f32 %v1806, %v2358
    %v2459 = vmul.f32 %v1821, %v2360
    %v2460 = vmul.f32 %v1836, %v2362
    %v2461 = vmul.f32 %v1851, %v2364
    %v2462 = vmul.f32 %v1866, %v2366
    %v2463 = vmul.f32 %v1881, %v2368
    %v2464 = vmul.f32 %v1896, %v2370
    %v2465 = vmul.f32 %v1911, %v2372
    %v2466 = vmul.f32 %v1926, %v2374
    %v2467 = vmul.f32 %v1941, %v2376
    %v2468 = vmul.f32 %v1956, %v2378
    %v2469 = vmul.f32 %v1971, %v2380
    %v2470 = vmul.f32 %v1986, %v2382
    %v2471 = vmul.f32 %v2001, %v2384
    %v2472 = vmul.f32 %v2016, %v2386
    %v2473 = vmul.f32 %v2031, %v2388
    %v2474 = vmul.f32 %v2046, %v2390
    %v2475 = vmul.f32 %v2061, %v2392
    %v2476 = vmul.f32 %v2076, %v2394
    %v2477 = vmul.f32 %v2091, %v2396
    %v2478 = vmul.f32 %v2106, %v2398
    %v2479 = vmul.f32 %v2121, %v2400
    %v2480 = vmul.f32 %v2136, %v2402
    %v2481 = vmul.f32 %v2151, %v2404
    %v2482 = vmul.f32 %v2166, %v2406
    %v2483 = vmul.f32 %v2181, %v2408
    %v2484 = vmul.f32 %v2196, %v2410
    %v2485 = vmul.f32 %v2211, %v2412
    %v2486 = vmul.f32 %v2226, %v2414
    %v2487 = vmul.f32 %v2241, %v2416
    %v2488 = vmul.f32 %v2256, %v2418
    %v2489 = vmul.f32 %v2271, %v2420
    %v2490 = vmul.f32 %v2286, %v2422
    %v2491 = vsub.f32 1.0, %v1791
    %v2492 = vsub.f32 1.0, %v1806
    %v2493 = vsub.f32 1.0, %v1821
    %v2494 = vsub.f32 1.0, %v1836
    %v2495 = vsub.f32 1.0, %v1851
    %v2496 = vsub.f32 1.0, %v1866
    %v2497 = vsub.f32 1.0, %v1881
    %v2498 = vsub.f32 1.0, %v1896
    %v2499 = vsub.f32 1.0, %v1911
    %v2500 = vsub.f32 1.0, %v1926
    %v2501 = vsub.f32 1.0, %v1941
    %v2502 = vsub.f32 1.0, %v1956
    %v2503 = vsub.f32 1.0, %v1971
    %v2504 = vsub.f32 1.0, %v1986
    %v2505 = vsub.f32 1.0, %v2001
    %v2506 = vsub.f32 1.0, %v2016
    %v2507 = vsub.f32 1.0, %v2031
    %v2508 = vsub.f32 1.0, %v2046
    %v2509 = vsub.f32 1.0, %v2061
    %v2510 = vsub.f32 1.0, %v2076
    %v2511 = vsub.f32 1.0, %v2091
    %v2512 = vsub.f32 1.0, %v2106
    %v2513 = vsub.f32 1.0, %v2121
    %v2514 = vsub.f32 1.0, %v2136
    %v2515 = vsub.f32 1.0, %v2151
    %v2516 = vsub.f32 1.0, %v2166
    %v2517 = vsub.f32 1.0, %v2181
    %v2518 = vsub.f32 1.0, %v2196
    %v2519 = vsub.f32 1.0, %v2211
    %v2520 = vsub.f32 1.0, %v2226
    %v2521 = vsub.f32 1.0, %v2241
    %v2522 = vsub.f32 1.0, %v2256
    %v2523 = vsub.f32 1.0, %v2271
    %v2524 = vsub.f32 1.0, %v2286
    %2559 = vrot.lane.b32.xlu0 %v1540, 64
    %v2560 = vpop.permute.xlu0 %2559
    %2561 = vrot.lane.b32.xlu0 %v1543, 64
    %v2562 = vpop.permute.xlu0 %2561
    %2563 = vrot.lane.b32.xlu0 %v1546, 64
    %v2564 = vpop.permute.xlu0 %2563
    %2565 = vrot.lane.b32.xlu0 %v1549, 64
    %v2566 = vpop.permute.xlu0 %2565
    %2567 = vrot.lane.b32.xlu0 %v1552, 64
    %v2568 = vpop.permute.xlu0 %2567
    %2569 = vrot.lane.b32.xlu0 %v1555, 64
    %v2570 = vpop.permute.xlu0 %2569
    %2571 = vrot.lane.b32.xlu0 %v1558, 64
    %v2572 = vpop.permute.xlu0 %2571
    %2573 = vrot.lane.b32.xlu0 %v1561, 64
    %v2574 = vpop.permute.xlu0 %2573
    %2575 = vrot.lane.b32.xlu0 %v1564, 64
    %v2576 = vpop.permute.xlu0 %2575
    %2577 = vrot.lane.b32.xlu0 %v1567, 64
    %v2578 = vpop.permute.xlu0 %2577
    %2579 = vrot.lane.b32.xlu0 %v1570, 64
    %v2580 = vpop.permute.xlu0 %2579
    %2581 = vrot.lane.b32.xlu0 %v1573, 64
    %v2582 = vpop.permute.xlu0 %2581
    %2583 = vrot.lane.b32.xlu0 %v1576, 64
    %v2584 = vpop.permute.xlu0 %2583
    %2585 = vrot.lane.b32.xlu0 %v1579, 64
    %v2586 = vpop.permute.xlu0 %2585
    %2587 = vrot.lane.b32.xlu0 %v1582, 64
    %v2588 = vpop.permute.xlu0 %2587
    %2589 = vrot.lane.b32.xlu0 %v1585, 64
    %v2590 = vpop.permute.xlu0 %2589
    %2591 = vrot.lane.b32.xlu0 %v1588, 64
    %v2592 = vpop.permute.xlu0 %2591
    %2593 = vrot.lane.b32.xlu0 %v1591, 64
    %v2594 = vpop.permute.xlu0 %2593
    %2595 = vrot.lane.b32.xlu0 %v1594, 64
    %v2596 = vpop.permute.xlu0 %2595
    %2597 = vrot.lane.b32.xlu0 %v1597, 64
    %v2598 = vpop.permute.xlu0 %2597
    %2599 = vrot.lane.b32.xlu0 %v1600, 64
    %v2600 = vpop.permute.xlu0 %2599
    %2601 = vrot.lane.b32.xlu0 %v1603, 64
    %v2602 = vpop.permute.xlu0 %2601
    %2603 = vrot.lane.b32.xlu0 %v1606, 64
    %v2604 = vpop.permute.xlu0 %2603
    %2605 = vrot.lane.b32.xlu0 %v1609, 64
    %v2606 = vpop.permute.xlu0 %2605
    %2607 = vrot.lane.b32.xlu0 %v1612, 64
    %v2608 = vpop.permute.xlu0 %2607
    %2609 = vrot.lane.b32.xlu0 %v1615, 64
    %v2610 = vpop.permute.xlu0 %2609
    %2611 = vrot.lane.b32.xlu0 %v1618, 64
    %v2612 = vpop.permute.xlu0 %2611
    %2613 = vrot.lane.b32.xlu0 %v1621, 64
    %v2614 = vpop.permute.xlu0 %2613
    %2615 = vrot.lane.b32.xlu0 %v1624, 64
    %v2616 = vpop.permute.xlu0 %2615
    %2617 = vrot.lane.b32.xlu0 %v1627, 64
    %v2618 = vpop.permute.xlu0 %2617
    %2619 = vrot.lane.b32.xlu0 %v1630, 64
    %v2620 = vpop.permute.xlu0 %2619
    %2621 = vrot.lane.b32.xlu0 %v1633, 64
    %v2622 = vpop.permute.xlu0 %2621
    %2623 = vrot.lane.b32.xlu0 %v1636, 64
    %v2624 = vpop.permute.xlu0 %2623
    %2625 = vrot.lane.b32.xlu0 %v1639, 64
    %v2626 = vpop.permute.xlu0 %2625
    %v2661 = vmul.f32 %v2491, %v2560
    %v2662 = vmul.f32 %v2492, %v2562
    %v2663 = vmul.f32 %v2493, %v2564
    %v2664 = vmul.f32 %v2494, %v2566
    %v2665 = vmul.f32 %v2495, %v2568
    %v2666 = vmul.f32 %v2496, %v2570
    %v2667 = vmul.f32 %v2497, %v2572
    %v2668 = vmul.f32 %v2498, %v2574
    %v2669 = vmul.f32 %v2499, %v2576
    %v2670 = vmul.f32 %v2500, %v2578
    %v2671 = vmul.f32 %v2501, %v2580
    %v2672 = vmul.f32 %v2502, %v2582
    %v2673 = vmul.f32 %v2503, %v2584
    %v2674 = vmul.f32 %v2504, %v2586
    %v2675 = vmul.f32 %v2505, %v2588
    %v2676 = vmul.f32 %v2506, %v2590
    %v2677 = vmul.f32 %v2507, %v2592
    %v2678 = vmul.f32 %v2508, %v2594
    %v2679 = vmul.f32 %v2509, %v2596
    %v2680 = vmul.f32 %v2510, %v2598
    %v2681 = vmul.f32 %v2511, %v2600
    %v2682 = vmul.f32 %v2512, %v2602
    %v2683 = vmul.f32 %v2513, %v2604
    %v2684 = vmul.f32 %v2514, %v2606
    %v2685 = vmul.f32 %v2515, %v2608
    %v2686 = vmul.f32 %v2516, %v2610
    %v2687 = vmul.f32 %v2517, %v2612
    %v2688 = vmul.f32 %v2518, %v2614
    %v2689 = vmul.f32 %v2519, %v2616
    %v2690 = vmul.f32 %v2520, %v2618
    %v2691 = vmul.f32 %v2521, %v2620
    %v2692 = vmul.f32 %v2522, %v2622
    %v2693 = vmul.f32 %v2523, %v2624
    %v2694 = vmul.f32 %v2524, %v2626
    %v2695 = vadd.f32 %v2457, %v2661
    %v2696 = vadd.f32 %v2458, %v2662
    %v2697 = vadd.f32 %v2459, %v2663
    %v2698 = vadd.f32 %v2460, %v2664
    %v2699 = vadd.f32 %v2461, %v2665
    %v2700 = vadd.f32 %v2462, %v2666
    %v2701 = vadd.f32 %v2463, %v2667
    %v2702 = vadd.f32 %v2464, %v2668
    %v2703 = vadd.f32 %v2465, %v2669
    %v2704 = vadd.f32 %v2466, %v2670
    %v2705 = vadd.f32 %v2467, %v2671
    %v2706 = vadd.f32 %v2468, %v2672
    %v2707 = vadd.f32 %v2469, %v2673
    %v2708 = vadd.f32 %v2470, %v2674
    %v2709 = vadd.f32 %v2471, %v2675
    %v2710 = vadd.f32 %v2472, %v2676
    %v2711 = vadd.f32 %v2473, %v2677
    %v2712 = vadd.f32 %v2474, %v2678
    %v2713 = vadd.f32 %v2475, %v2679
    %v2714 = vadd.f32 %v2476, %v2680
    %v2715 = vadd.f32 %v2477, %v2681
    %v2716 = vadd.f32 %v2478, %v2682
    %v2717 = vadd.f32 %v2479, %v2683
    %v2718 = vadd.f32 %v2480, %v2684
    %v2719 = vadd.f32 %v2481, %v2685
    %v2720 = vadd.f32 %v2482, %v2686
    %v2721 = vadd.f32 %v2483, %v2687
    %v2722 = vadd.f32 %v2484, %v2688
    %v2723 = vadd.f32 %v2485, %v2689
    %v2724 = vadd.f32 %v2486, %v2690
    %v2725 = vadd.f32 %v2487, %v2691
    %v2726 = vadd.f32 %v2488, %v2692
    %v2727 = vadd.f32 %v2489, %v2693
    %v2728 = vadd.f32 %v2490, %v2694
    %v2729 = vld [vmem:[%s4] sm:$0xff]
    %v2730 = vld [vmem:[%s4 + $0x8] sm:$0xff]
    %v2731 = vld [vmem:[%s4 + $0x10] sm:$0xff]
    %v2732 = vld [vmem:[%s4 + $0x18] sm:$0xff]
    %v2733 = vld [vmem:[%s6] sm:$0x1]
    %v2735 = vperm.slane %v2733, 0
    %v2738 = vsel %vm100, %v2695, 0
    %v2741 = vsel %vm100, %v2696, 0
    %v2744 = vsel %vm100, %v2697, 0
    %v2747 = vsel %vm100, %v2698, 0
    %v2750 = vsel %vm100, %v2699, 0
    %v2753 = vsel %vm100, %v2700, 0
    %v2756 = vsel %vm100, %v2701, 0
    %v2759 = vsel %vm100, %v2702, 0
    %v2762 = vsel %vm100, %v2703, 0
    %v2765 = vsel %vm100, %v2704, 0
    %v2768 = vsel %vm100, %v2705, 0
    %v2771 = vsel %vm100, %v2706, 0
    %v2774 = vsel %vm100, %v2707, 0
    %v2777 = vsel %vm100, %v2708, 0
    %v2780 = vsel %vm100, %v2709, 0
    %v2783 = vsel %vm100, %v2710, 0
    %2785 = vmatpush.msra.mxu0 0.0
    %2786 = vmatpush.msra.mxu0 0.0
    %2787 = vmatpush.msra.mxu0 0.0
    %2788 = vmatpush.msra.mxu0 0.0
    %2789 = vmatpush.msra.mxu0 0.0
    %2790 = vmatpush.msra.mxu0 0.0
    %2791 = vmatpush.msra.mxu0 0.0
    %2792 = vmatpush.msra.mxu0 0.0
    %2793 = vmatpush.msra.mxu0 0.0
    %2794 = vmatpush.msra.mxu0 0.0
    %2795 = vmatpush.msra.mxu0 0.0
    %2796 = vmatpush.msra.mxu0 0.0
    %2797 = vmatpush.msra.mxu0 %v2732
    %2798 = vmatpush.msra.mxu0 %v2731
    %2799 = vmatpush.msra.mxu0 %v2730
    %2800 = vmatpush.msra.mxu0 %v2729
    %2801 = vmatmul.f32.gmra.mxu0 %v2738
    %v2802 = vpop.f32.mrf.mxu0
    %v2803 = vadd.f32 %v2735, %v2802
    %2804 = vmatmul.f32.gmra.mxu0 %v2741
    %v2805 = vpop.f32.mrf.mxu0
    %v2806 = vadd.f32 %v2735, %v2805
    %2807 = vmatmul.f32.gmra.mxu0 %v2744
    %v2808 = vpop.f32.mrf.mxu0
    %v2809 = vadd.f32 %v2735, %v2808
    %2810 = vmatmul.f32.gmra.mxu0 %v2747
    %v2811 = vpop.f32.mrf.mxu0
    %v2812 = vadd.f32 %v2735, %v2811
    %2813 = vmatmul.f32.gmra.mxu0 %v2750
    %v2814 = vpop.f32.mrf.mxu0
    %v2815 = vadd.f32 %v2735, %v2814
    %2816 = vmatmul.f32.gmra.mxu0 %v2753
    %v2817 = vpop.f32.mrf.mxu0
    %v2818 = vadd.f32 %v2735, %v2817
    %2819 = vmatmul.f32.gmra.mxu0 %v2756
    %v2820 = vpop.f32.mrf.mxu0
    %v2821 = vadd.f32 %v2735, %v2820
    %2822 = vmatmul.f32.gmra.mxu0 %v2759
    %v2823 = vpop.f32.mrf.mxu0
    %v2824 = vadd.f32 %v2735, %v2823
    %2825 = vmatmul.f32.gmra.mxu0 %v2762
    %v2826 = vpop.f32.mrf.mxu0
    %v2827 = vadd.f32 %v2735, %v2826
    %2828 = vmatmul.f32.gmra.mxu0 %v2765
    %v2829 = vpop.f32.mrf.mxu0
    %v2830 = vadd.f32 %v2735, %v2829
    %2831 = vmatmul.f32.gmra.mxu0 %v2768
    %v2832 = vpop.f32.mrf.mxu0
    %v2833 = vadd.f32 %v2735, %v2832
    %2834 = vmatmul.f32.gmra.mxu0 %v2771
    %v2835 = vpop.f32.mrf.mxu0
    %v2836 = vadd.f32 %v2735, %v2835
    %2837 = vmatmul.f32.gmra.mxu0 %v2774
    %v2838 = vpop.f32.mrf.mxu0
    %v2839 = vadd.f32 %v2735, %v2838
    %2840 = vmatmul.f32.gmra.mxu0 %v2777
    %v2841 = vpop.f32.mrf.mxu0
    %v2842 = vadd.f32 %v2735, %v2841
    %2843 = vmatmul.f32.gmra.mxu0 %v2780
    %v2844 = vpop.f32.mrf.mxu0
    %v2845 = vadd.f32 %v2735, %v2844
    %2846 = vmatmul.f32.gmra.mxu0 %v2783
    %v2847 = vpop.f32.mrf.mxu0
    %v2848 = vadd.f32 %v2735, %v2847
    %2849 = vdwg.mxu0
    %v2850 = vld [vmem:[%s5] sm:$0xff]
    %v2851 = vld [vmem:[%s5 + $0x8] sm:$0xff]
    %v2852 = vld [vmem:[%s5 + $0x10] sm:$0xff]
    %v2853 = vld [vmem:[%s5 + $0x18] sm:$0xff]
    %v2855 = vsel %vm100, 0.0, 0
    %2857 = vmatpush.msra.mxu0 0.0
    %2858 = vmatpush.msra.mxu0 0.0
    %2859 = vmatpush.msra.mxu0 0.0
    %2860 = vmatpush.msra.mxu0 0.0
    %2861 = vmatpush.msra.mxu0 0.0
    %2862 = vmatpush.msra.mxu0 0.0
    %2863 = vmatpush.msra.mxu0 0.0
    %2864 = vmatpush.msra.mxu0 0.0
    %2865 = vmatpush.msra.mxu0 0.0
    %2866 = vmatpush.msra.mxu0 0.0
    %2867 = vmatpush.msra.mxu0 0.0
    %2868 = vmatpush.msra.mxu0 0.0
    %2869 = vmatpush.msra.mxu0 %v2853
    %2870 = vmatpush.msra.mxu0 %v2852
    %2871 = vmatpush.msra.mxu0 %v2851
    %2872 = vmatpush.msra.mxu0 %v2850
    %2873 = vmatmul.f32.gmra.mxu0 %v2855
    %v2874 = vpop.f32.mrf.mxu0
    %v2875 = vadd.f32 0.0, %v2874
    %2876 = vmatmul.f32.gmra.mxu0 %v2855
    %v2877 = vpop.f32.mrf.mxu0
    %v2878 = vadd.f32 0.0, %v2877
    %2879 = vdwg.mxu0
    %v2880 = vadd.f32 %v2803, %v2875
    %v2881 = vadd.f32 %v2806, %v2878
    %v2882 = vxor.u32 %v2880, 2147483648
    %v2883 = vxor.u32 %v2881, 2147483648
    %v2884 = vmul.f32 %v2882, 1.442695
    %v2885 = vpow.pop %v2884
    %v2886 = vmul.f32 %v2883, 1.442695
    %v2887 = vpow.pop %v2886
    %v2888 = vadd.f32 %v2885, 1.0
    %v2889 = vadd.f32 %v2887, 1.0
    %v2890 = vrcp.pop %v2888
    %v2891 = vmul.f32 %v2888, %v2890
    %v2892 = vsub.f32 1.0, %v2891
    %v2893 = vmul.f32 %v2890, %v2892
    %v2894 = vadd.f32 %v2890, %v2893
    %vm2895 = vweird.f32 %v2888
    %vm2896 = vweird.f32 %v2890
    %vm2897 = vmor %vm2895, %vm2896
    %v2898 = vsel %vm2897, %v2890, %v2894
    %v2899 = vand.u32 2147483647, %v2888
    %vm2900 = vcmp.eq.f32.partialorder %v2899, 8.507059e+37
    %v2901 = vand.u32 %v2888, 2147483648
    %v2902 = vor.u32 1.1754944e-38, %v2901
    %v2903 = vsel %vm2900, %v2902, %v2898
    %v2904 = vmul.f32 1.0, %v2903
    %v2905 = vrcp.pop %v2889
    %v2906 = vmul.f32 %v2889, %v2905
    %v2907 = vsub.f32 1.0, %v2906
    %v2908 = vmul.f32 %v2905, %v2907
    %v2909 = vadd.f32 %v2905, %v2908
    %vm2910 = vweird.f32 %v2889
    %vm2911 = vweird.f32 %v2905
    %vm2912 = vmor %vm2910, %vm2911
    %v2913 = vsel %vm2912, %v2905, %v2909
    %v2914 = vand.u32 2147483647, %v2889
    %vm2915 = vcmp.eq.f32.partialorder %v2914, 8.507059e+37
    %v2916 = vand.u32 %v2889, 2147483648
    %v2917 = vor.u32 1.1754944e-38, %v2916
    %v2918 = vsel %vm2915, %v2917, %v2913
    %v2919 = vmul.f32 1.0, %v2918
    %v2920 = vtanh.pop %v2880
    %v2921 = vtanh.pop %v2881
    %v2922 = vmul.f32 %v2904, 0.0
    %v2923 = vmul.f32 %v2919, 0.0
    %2926 = vrot.lane.b32.xlu0 %v2920, 64
    %v2927 = vpop.permute.xlu0 %2926
    %2928 = vrot.lane.b32.xlu0 %v2921, 64
    %v2929 = vpop.permute.xlu0 %2928
    %v2932 = vmul.f32 %v2904, %v2927
    %v2933 = vmul.f32 %v2919, %v2929
    %2936 = vrot.lane.b32.xlu0 %v2932, 32
    %v2937 = vpop.permute.xlu0 %2936
    %2938 = vrot.lane.b32.xlu0 %v2933, 32
    %v2939 = vpop.permute.xlu0 %2938
    %v2942 = vadd.f32 %v2922, %v2937
    %v2943 = vadd.f32 %v2923, %v2939
    %v2944 = vtanh.pop %v2942
    %v2945 = vtanh.pop %v2943
    %2948 = vrot.lane.b32.xlu0 %v2944, 64
    %v2949 = vpop.permute.xlu0 %2948
    %2950 = vrot.lane.b32.xlu0 %v2945, 64
    %v2951 = vpop.permute.xlu0 %2950
    %v2954 = vmul.f32 %v2904, %v2949
    %v2955 = vmul.f32 %v2919, %v2951
    %2958 = vrot.lane.b32.xlu0 %v2954, 32
    %v2959 = vpop.permute.xlu0 %2958
    %2960 = vrot.lane.b32.xlu0 %v2955, 32
    %v2961 = vpop.permute.xlu0 %2960
    %v2962 = vsel %vm100, %v2959, 0
    %v2964 = vsel %vm100, %v2961, 0
    %2966 = vmatpush.msra.mxu0 0.0
    %2967 = vmatpush.msra.mxu0 0.0
    %2968 = vmatpush.msra.mxu0 0.0
    %2969 = vmatpush.msra.mxu0 0.0
    %2970 = vmatpush.msra.mxu0 0.0
    %2971 = vmatpush.msra.mxu0 0.0
    %2972 = vmatpush.msra.mxu0 0.0
    %2973 = vmatpush.msra.mxu0 0.0
    %2974 = vmatpush.msra.mxu0 0.0
    %2975 = vmatpush.msra.mxu0 0.0
    %2976 = vmatpush.msra.mxu0 0.0
    %2977 = vmatpush.msra.mxu0 0.0
    %2978 = vmatpush.msra.mxu0 %v2853
    %2979 = vmatpush.msra.mxu0 %v2852
    %2980 = vmatpush.msra.mxu0 %v2851
    %2981 = vmatpush.msra.mxu0 %v2850
    %2982 = vmatmul.f32.gmra.mxu0 %v2962
    %v2983 = vpop.f32.mrf.mxu0
    %v2984 = vadd.f32 0.0, %v2983
    %2985 = vmatmul.f32.gmra.mxu0 %v2964
    %v2986 = vpop.f32.mrf.mxu0
    %v2987 = vadd.f32 0.0, %v2986
    %2988 = vdwg.mxu0
    %v2989 = vadd.f32 %v2809, %v2984
    %v2990 = vadd.f32 %v2812, %v2987
    %v2991 = vxor.u32 %v2989, 2147483648
    %v2992 = vxor.u32 %v2990, 2147483648
    %v2993 = vmul.f32 %v2991, 1.442695
    %v2994 = vpow.pop %v2993
    %v2995 = vmul.f32 %v2992, 1.442695
    %v2996 = vpow.pop %v2995
    %v2997 = vadd.f32 %v2994, 1.0
    %v2998 = vadd.f32 %v2996, 1.0
    %v2999 = vrcp.pop %v2997
    %v3000 = vmul.f32 %v2997, %v2999
    %v3001 = vsub.f32 1.0, %v3000
    %v3002 = vmul.f32 %v2999, %v3001
    %v3003 = vadd.f32 %v2999, %v3002
    %vm3004 = vweird.f32 %v2997
    %vm3005 = vweird.f32 %v2999
    %vm3006 = vmor %vm3004, %vm3005
    %v3007 = vsel %vm3006, %v2999, %v3003
    %v3008 = vand.u32 2147483647, %v2997
    %vm3009 = vcmp.eq.f32.partialorder %v3008, 8.507059e+37
    %v3010 = vand.u32 %v2997, 2147483648
    %v3011 = vor.u32 1.1754944e-38, %v3010
    %v3012 = vsel %vm3009, %v3011, %v3007
    %v3013 = vmul.f32 1.0, %v3012
    %v3014 = vrcp.pop %v2998
    %v3015 = vmul.f32 %v2998, %v3014
    %v3016 = vsub.f32 1.0, %v3015
    %v3017 = vmul.f32 %v3014, %v3016
    %v3018 = vadd.f32 %v3014, %v3017
    %vm3019 = vweird.f32 %v2998
    %vm3020 = vweird.f32 %v3014
    %vm3021 = vmor %vm3019, %vm3020
    %v3022 = vsel %vm3021, %v3014, %v3018
    %v3023 = vand.u32 2147483647, %v2998
    %vm3024 = vcmp.eq.f32.partialorder %v3023, 8.507059e+37
    %v3025 = vand.u32 %v2998, 2147483648
    %v3026 = vor.u32 1.1754944e-38, %v3025
    %v3027 = vsel %vm3024, %v3026, %v3022
    %v3028 = vmul.f32 1.0, %v3027
    %v3029 = vtanh.pop %v2989
    %v3030 = vtanh.pop %v2990
    %v3031 = vmul.f32 %v3013, %v2942
    %v3032 = vmul.f32 %v3028, %v2943
    %3035 = vrot.lane.b32.xlu0 %v3029, 64
    %v3036 = vpop.permute.xlu0 %3035
    %3037 = vrot.lane.b32.xlu0 %v3030, 64
    %v3038 = vpop.permute.xlu0 %3037
    %v3041 = vmul.f32 %v3013, %v3036
    %v3042 = vmul.f32 %v3028, %v3038
    %3045 = vrot.lane.b32.xlu0 %v3041, 32
    %v3046 = vpop.permute.xlu0 %3045
    %3047 = vrot.lane.b32.xlu0 %v3042, 32
    %v3048 = vpop.permute.xlu0 %3047
    %v3051 = vadd.f32 %v3031, %v3046
    %v3052 = vadd.f32 %v3032, %v3048
    %v3053 = vtanh.pop %v3051
    %v3054 = vtanh.pop %v3052
    %3057 = vrot.lane.b32.xlu0 %v3053, 64
    %v3058 = vpop.permute.xlu0 %3057
    %3059 = vrot.lane.b32.xlu0 %v3054, 64
    %v3060 = vpop.permute.xlu0 %3059
    %v3063 = vmul.f32 %v3013, %v3058
    %v3064 = vmul.f32 %v3028, %v3060
    %3067 = vrot.lane.b32.xlu0 %v3063, 32
    %v3068 = vpop.permute.xlu0 %3067
    %3069 = vrot.lane.b32.xlu0 %v3064, 32
    %v3070 = vpop.permute.xlu0 %3069
    %v3071 = vsel %vm100, %v3068, 0
    %v3073 = vsel %vm100, %v3070, 0
    %3075 = vmatpush.msra.mxu0 0.0
    %3076 = vmatpush.msra.mxu0 0.0
    %3077 = vmatpush.msra.mxu0 0.0
    %3078 = vmatpush.msra.mxu0 0.0
    %3079 = vmatpush.msra.mxu0 0.0
    %3080 = vmatpush.msra.mxu0 0.0
    %3081 = vmatpush.msra.mxu0 0.0
    %3082 = vmatpush.msra.mxu0 0.0
    %3083 = vmatpush.msra.mxu0 0.0
    %3084 = vmatpush.msra.mxu0 0.0
    %3085 = vmatpush.msra.mxu0 0.0
    %3086 = vmatpush.msra.mxu0 0.0
    %3087 = vmatpush.msra.mxu0 %v2853
    %3088 = vmatpush.msra.mxu0 %v2852
    %3089 = vmatpush.msra.mxu0 %v2851
    %3090 = vmatpush.msra.mxu0 %v2850
    %3091 = vmatmul.f32.gmra.mxu0 %v3071
    %v3092 = vpop.f32.mrf.mxu0
    %v3093 = vadd.f32 0.0, %v3092
    %3094 = vmatmul.f32.gmra.mxu0 %v3073
    %v3095 = vpop.f32.mrf.mxu0
    %v3096 = vadd.f32 0.0, %v3095
    %3097 = vdwg.mxu0
    %v3098 = vadd.f32 %v2815, %v3093
    %v3099 = vadd.f32 %v2818, %v3096
    %v3100 = vxor.u32 %v3098, 2147483648
    %v3101 = vxor.u32 %v3099, 2147483648
    %v3102 = vmul.f32 %v3100, 1.442695
    %v3103 = vpow.pop %v3102
    %v3104 = vmul.f32 %v3101, 1.442695
    %v3105 = vpow.pop %v3104
    %v3106 = vadd.f32 %v3103, 1.0
    %v3107 = vadd.f32 %v3105, 1.0
    %v3108 = vrcp.pop %v3106
    %v3109 = vmul.f32 %v3106, %v3108
    %v3110 = vsub.f32 1.0, %v3109
    %v3111 = vmul.f32 %v3108, %v3110
    %v3112 = vadd.f32 %v3108, %v3111
    %vm3113 = vweird.f32 %v3106
    %vm3114 = vweird.f32 %v3108
    %vm3115 = vmor %vm3113, %vm3114
    %v3116 = vsel %vm3115, %v3108, %v3112
    %v3117 = vand.u32 2147483647, %v3106
    %vm3118 = vcmp.eq.f32.partialorder %v3117, 8.507059e+37
    %v3119 = vand.u32 %v3106, 2147483648
    %v3120 = vor.u32 1.1754944e-38, %v3119
    %v3121 = vsel %vm3118, %v3120, %v3116
    %v3122 = vmul.f32 1.0, %v3121
    %v3123 = vrcp.pop %v3107
    %v3124 = vmul.f32 %v3107, %v3123
    %v3125 = vsub.f32 1.0, %v3124
    %v3126 = vmul.f32 %v3123, %v3125
    %v3127 = vadd.f32 %v3123, %v3126
    %vm3128 = vweird.f32 %v3107
    %vm3129 = vweird.f32 %v3123
    %vm3130 = vmor %vm3128, %vm3129
    %v3131 = vsel %vm3130, %v3123, %v3127
    %v3132 = vand.u32 2147483647, %v3107
    %vm3133 = vcmp.eq.f32.partialorder %v3132, 8.507059e+37
    %v3134 = vand.u32 %v3107, 2147483648
    %v3135 = vor.u32 1.1754944e-38, %v3134
    %v3136 = vsel %vm3133, %v3135, %v3131
    %v3137 = vmul.f32 1.0, %v3136
    %v3138 = vtanh.pop %v3098
    %v3139 = vtanh.pop %v3099
    %v3140 = vmul.f32 %v3122, %v3051
    %v3141 = vmul.f32 %v3137, %v3052
    %3144 = vrot.lane.b32.xlu0 %v3138, 64
    %v3145 = vpop.permute.xlu0 %3144
    %3146 = vrot.lane.b32.xlu0 %v3139, 64
    %v3147 = vpop.permute.xlu0 %3146
    %v3150 = vmul.f32 %v3122, %v3145
    %v3151 = vmul.f32 %v3137, %v3147
    %3154 = vrot.lane.b32.xlu0 %v3150, 32
    %v3155 = vpop.permute.xlu0 %3154
    %3156 = vrot.lane.b32.xlu0 %v3151, 32
    %v3157 = vpop.permute.xlu0 %3156
    %v3160 = vadd.f32 %v3140, %v3155
    %v3161 = vadd.f32 %v3141, %v3157
    %v3162 = vtanh.pop %v3160
    %v3163 = vtanh.pop %v3161
    %3166 = vrot.lane.b32.xlu0 %v3162, 64
    %v3167 = vpop.permute.xlu0 %3166
    %3168 = vrot.lane.b32.xlu0 %v3163, 64
    %v3169 = vpop.permute.xlu0 %3168
    %v3172 = vmul.f32 %v3122, %v3167
    %v3173 = vmul.f32 %v3137, %v3169
    %3176 = vrot.lane.b32.xlu0 %v3172, 32
    %v3177 = vpop.permute.xlu0 %3176
    %3178 = vrot.lane.b32.xlu0 %v3173, 32
    %v3179 = vpop.permute.xlu0 %3178
    %v3180 = vsel %vm100, %v3177, 0
    %v3182 = vsel %vm100, %v3179, 0
    %3184 = vmatpush.msra.mxu0 0.0
    %3185 = vmatpush.msra.mxu0 0.0
    %3186 = vmatpush.msra.mxu0 0.0
    %3187 = vmatpush.msra.mxu0 0.0
    %3188 = vmatpush.msra.mxu0 0.0
    %3189 = vmatpush.msra.mxu0 0.0
    %3190 = vmatpush.msra.mxu0 0.0
    %3191 = vmatpush.msra.mxu0 0.0
    %3192 = vmatpush.msra.mxu0 0.0
    %3193 = vmatpush.msra.mxu0 0.0
    %3194 = vmatpush.msra.mxu0 0.0
    %3195 = vmatpush.msra.mxu0 0.0
    %3196 = vmatpush.msra.mxu0 %v2853
    %3197 = vmatpush.msra.mxu0 %v2852
    %3198 = vmatpush.msra.mxu0 %v2851
    %3199 = vmatpush.msra.mxu0 %v2850
    %3200 = vmatmul.f32.gmra.mxu0 %v3180
    %v3201 = vpop.f32.mrf.mxu0
    %v3202 = vadd.f32 0.0, %v3201
    %3203 = vmatmul.f32.gmra.mxu0 %v3182
    %v3204 = vpop.f32.mrf.mxu0
    %v3205 = vadd.f32 0.0, %v3204
    %3206 = vdwg.mxu0
    %v3207 = vadd.f32 %v2821, %v3202
    %v3208 = vadd.f32 %v2824, %v3205
    %v3209 = vxor.u32 %v3207, 2147483648
    %v3210 = vxor.u32 %v3208, 2147483648
    %v3211 = vmul.f32 %v3209, 1.442695
    %v3212 = vpow.pop %v3211
    %v3213 = vmul.f32 %v3210, 1.442695
    %v3214 = vpow.pop %v3213
    %v3215 = vadd.f32 %v3212, 1.0
    %v3216 = vadd.f32 %v3214, 1.0
    %v3217 = vrcp.pop %v3215
    %v3218 = vmul.f32 %v3215, %v3217
    %v3219 = vsub.f32 1.0, %v3218
    %v3220 = vmul.f32 %v3217, %v3219
    %v3221 = vadd.f32 %v3217, %v3220
    %vm3222 = vweird.f32 %v3215
    %vm3223 = vweird.f32 %v3217
    %vm3224 = vmor %vm3222, %vm3223
    %v3225 = vsel %vm3224, %v3217, %v3221
    %v3226 = vand.u32 2147483647, %v3215
    %vm3227 = vcmp.eq.f32.partialorder %v3226, 8.507059e+37
    %v3228 = vand.u32 %v3215, 2147483648
    %v3229 = vor.u32 1.1754944e-38, %v3228
    %v3230 = vsel %vm3227, %v3229, %v3225
    %v3231 = vmul.f32 1.0, %v3230
    %v3232 = vrcp.pop %v3216
    %v3233 = vmul.f32 %v3216, %v3232
    %v3234 = vsub.f32 1.0, %v3233
    %v3235 = vmul.f32 %v3232, %v3234
    %v3236 = vadd.f32 %v3232, %v3235
    %vm3237 = vweird.f32 %v3216
    %vm3238 = vweird.f32 %v3232
    %vm3239 = vmor %vm3237, %vm3238
    %v3240 = vsel %vm3239, %v3232, %v3236
    %v3241 = vand.u32 2147483647, %v3216
    %vm3242 = vcmp.eq.f32.partialorder %v3241, 8.507059e+37
    %v3243 = vand.u32 %v3216, 2147483648
    %v3244 = vor.u32 1.1754944e-38, %v3243
    %v3245 = vsel %vm3242, %v3244, %v3240
    %v3246 = vmul.f32 1.0, %v3245
    %v3247 = vtanh.pop %v3207
    %v3248 = vtanh.pop %v3208
    %v3249 = vmul.f32 %v3231, %v3160
    %v3250 = vmul.f32 %v3246, %v3161
    %3253 = vrot.lane.b32.xlu0 %v3247, 64
    %v3254 = vpop.permute.xlu0 %3253
    %3255 = vrot.lane.b32.xlu0 %v3248, 64
    %v3256 = vpop.permute.xlu0 %3255
    %v3259 = vmul.f32 %v3231, %v3254
    %v3260 = vmul.f32 %v3246, %v3256
    %3263 = vrot.lane.b32.xlu0 %v3259, 32
    %v3264 = vpop.permute.xlu0 %3263
    %3265 = vrot.lane.b32.xlu0 %v3260, 32
    %v3266 = vpop.permute.xlu0 %3265
    %v3269 = vadd.f32 %v3249, %v3264
    %v3270 = vadd.f32 %v3250, %v3266
    %v3271 = vtanh.pop %v3269
    %v3272 = vtanh.pop %v3270
    %3275 = vrot.lane.b32.xlu0 %v3271, 64
    %v3276 = vpop.permute.xlu0 %3275
    %3277 = vrot.lane.b32.xlu0 %v3272, 64
    %v3278 = vpop.permute.xlu0 %3277
    %v3281 = vmul.f32 %v3231, %v3276
    %v3282 = vmul.f32 %v3246, %v3278
    %3285 = vrot.lane.b32.xlu0 %v3281, 32
    %v3286 = vpop.permute.xlu0 %3285
    %3287 = vrot.lane.b32.xlu0 %v3282, 32
    %v3288 = vpop.permute.xlu0 %3287
    %v3289 = vsel %vm100, %v3286, 0
    %v3291 = vsel %vm100, %v3288, 0
    %3293 = vmatpush.msra.mxu0 0.0
    %3294 = vmatpush.msra.mxu0 0.0
    %3295 = vmatpush.msra.mxu0 0.0
    %3296 = vmatpush.msra.mxu0 0.0
    %3297 = vmatpush.msra.mxu0 0.0
    %3298 = vmatpush.msra.mxu0 0.0
    %3299 = vmatpush.msra.mxu0 0.0
    %3300 = vmatpush.msra.mxu0 0.0
    %3301 = vmatpush.msra.mxu0 0.0
    %3302 = vmatpush.msra.mxu0 0.0
    %3303 = vmatpush.msra.mxu0 0.0
    %3304 = vmatpush.msra.mxu0 0.0
    %3305 = vmatpush.msra.mxu0 %v2853
    %3306 = vmatpush.msra.mxu0 %v2852
    %3307 = vmatpush.msra.mxu0 %v2851
    %3308 = vmatpush.msra.mxu0 %v2850
    %3309 = vmatmul.f32.gmra.mxu0 %v3289
    %v3310 = vpop.f32.mrf.mxu0
    %v3311 = vadd.f32 0.0, %v3310
    %3312 = vmatmul.f32.gmra.mxu0 %v3291
    %v3313 = vpop.f32.mrf.mxu0
    %v3314 = vadd.f32 0.0, %v3313
    %3315 = vdwg.mxu0
    %v3316 = vadd.f32 %v2827, %v3311
    %v3317 = vadd.f32 %v2830, %v3314
    %v3318 = vxor.u32 %v3316, 2147483648
    %v3319 = vxor.u32 %v3317, 2147483648
    %v3320 = vmul.f32 %v3318, 1.442695
    %v3321 = vpow.pop %v3320
    %v3322 = vmul.f32 %v3319, 1.442695
    %v3323 = vpow.pop %v3322
    %v3324 = vadd.f32 %v3321, 1.0
    %v3325 = vadd.f32 %v3323, 1.0
    %v3326 = vrcp.pop %v3324
    %v3327 = vmul.f32 %v3324, %v3326
    %v3328 = vsub.f32 1.0, %v3327
    %v3329 = vmul.f32 %v3326, %v3328
    %v3330 = vadd.f32 %v3326, %v3329
    %vm3331 = vweird.f32 %v3324
    %vm3332 = vweird.f32 %v3326
    %vm3333 = vmor %vm3331, %vm3332
    %v3334 = vsel %vm3333, %v3326, %v3330
    %v3335 = vand.u32 2147483647, %v3324
    %vm3336 = vcmp.eq.f32.partialorder %v3335, 8.507059e+37
    %v3337 = vand.u32 %v3324, 2147483648
    %v3338 = vor.u32 1.1754944e-38, %v3337
    %v3339 = vsel %vm3336, %v3338, %v3334
    %v3340 = vmul.f32 1.0, %v3339
    %v3341 = vrcp.pop %v3325
    %v3342 = vmul.f32 %v3325, %v3341
    %v3343 = vsub.f32 1.0, %v3342
    %v3344 = vmul.f32 %v3341, %v3343
    %v3345 = vadd.f32 %v3341, %v3344
    %vm3346 = vweird.f32 %v3325
    %vm3347 = vweird.f32 %v3341
    %vm3348 = vmor %vm3346, %vm3347
    %v3349 = vsel %vm3348, %v3341, %v3345
    %v3350 = vand.u32 2147483647, %v3325
    %vm3351 = vcmp.eq.f32.partialorder %v3350, 8.507059e+37
    %v3352 = vand.u32 %v3325, 2147483648
    %v3353 = vor.u32 1.1754944e-38, %v3352
    %v3354 = vsel %vm3351, %v3353, %v3349
    %v3355 = vmul.f32 1.0, %v3354
    %v3356 = vtanh.pop %v3316
    %v3357 = vtanh.pop %v3317
    %v3358 = vmul.f32 %v3340, %v3269
    %v3359 = vmul.f32 %v3355, %v3270
    %3362 = vrot.lane.b32.xlu0 %v3356, 64
    %v3363 = vpop.permute.xlu0 %3362
    %3364 = vrot.lane.b32.xlu0 %v3357, 64
    %v3365 = vpop.permute.xlu0 %3364
    %v3368 = vmul.f32 %v3340, %v3363
    %v3369 = vmul.f32 %v3355, %v3365
    %3372 = vrot.lane.b32.xlu0 %v3368, 32
    %v3373 = vpop.permute.xlu0 %3372
    %3374 = vrot.lane.b32.xlu0 %v3369, 32
    %v3375 = vpop.permute.xlu0 %3374
    %v3378 = vadd.f32 %v3358, %v3373
    %v3379 = vadd.f32 %v3359, %v3375
    %v3380 = vtanh.pop %v3378
    %v3381 = vtanh.pop %v3379
    %3384 = vrot.lane.b32.xlu0 %v3380, 64
    %v3385 = vpop.permute.xlu0 %3384
    %3386 = vrot.lane.b32.xlu0 %v3381, 64
    %v3387 = vpop.permute.xlu0 %3386
    %v3390 = vmul.f32 %v3340, %v3385
    %v3391 = vmul.f32 %v3355, %v3387
    %3394 = vrot.lane.b32.xlu0 %v3390, 32
    %v3395 = vpop.permute.xlu0 %3394
    %3396 = vrot.lane.b32.xlu0 %v3391, 32
    %v3397 = vpop.permute.xlu0 %3396
    %v3398 = vsel %vm100, %v3395, 0
    %v3400 = vsel %vm100, %v3397, 0
    %3402 = vmatpush.msra.mxu0 0.0
    %3403 = vmatpush.msra.mxu0 0.0
    %3404 = vmatpush.msra.mxu0 0.0
    %3405 = vmatpush.msra.mxu0 0.0
    %3406 = vmatpush.msra.mxu0 0.0
    %3407 = vmatpush.msra.mxu0 0.0
    %3408 = vmatpush.msra.mxu0 0.0
    %3409 = vmatpush.msra.mxu0 0.0
    %3410 = vmatpush.msra.mxu0 0.0
    %3411 = vmatpush.msra.mxu0 0.0
    %3412 = vmatpush.msra.mxu0 0.0
    %3413 = vmatpush.msra.mxu0 0.0
    %3414 = vmatpush.msra.mxu0 %v2853
    %3415 = vmatpush.msra.mxu0 %v2852
    %3416 = vmatpush.msra.mxu0 %v2851
    %3417 = vmatpush.msra.mxu0 %v2850
    %3418 = vmatmul.f32.gmra.mxu0 %v3398
    %v3419 = vpop.f32.mrf.mxu0
    %v3420 = vadd.f32 0.0, %v3419
    %3421 = vmatmul.f32.gmra.mxu0 %v3400
    %v3422 = vpop.f32.mrf.mxu0
    %v3423 = vadd.f32 0.0, %v3422
    %3424 = vdwg.mxu0
    %v3425 = vadd.f32 %v2833, %v3420
    %v3426 = vadd.f32 %v2836, %v3423
    %v3427 = vxor.u32 %v3425, 2147483648
    %v3428 = vxor.u32 %v3426, 2147483648
    %v3429 = vmul.f32 %v3427, 1.442695
    %v3430 = vpow.pop %v3429
    %v3431 = vmul.f32 %v3428, 1.442695
    %v3432 = vpow.pop %v3431
    %v3433 = vadd.f32 %v3430, 1.0
    %v3434 = vadd.f32 %v3432, 1.0
    %v3435 = vrcp.pop %v3433
    %v3436 = vmul.f32 %v3433, %v3435
    %v3437 = vsub.f32 1.0, %v3436
    %v3438 = vmul.f32 %v3435, %v3437
    %v3439 = vadd.f32 %v3435, %v3438
    %vm3440 = vweird.f32 %v3433
    %vm3441 = vweird.f32 %v3435
    %vm3442 = vmor %vm3440, %vm3441
    %v3443 = vsel %vm3442, %v3435, %v3439
    %v3444 = vand.u32 2147483647, %v3433
    %vm3445 = vcmp.eq.f32.partialorder %v3444, 8.507059e+37
    %v3446 = vand.u32 %v3433, 2147483648
    %v3447 = vor.u32 1.1754944e-38, %v3446
    %v3448 = vsel %vm3445, %v3447, %v3443
    %v3449 = vmul.f32 1.0, %v3448
    %v3450 = vrcp.pop %v3434
    %v3451 = vmul.f32 %v3434, %v3450
    %v3452 = vsub.f32 1.0, %v3451
    %v3453 = vmul.f32 %v3450, %v3452
    %v3454 = vadd.f32 %v3450, %v3453
    %vm3455 = vweird.f32 %v3434
    %vm3456 = vweird.f32 %v3450
    %vm3457 = vmor %vm3455, %vm3456
    %v3458 = vsel %vm3457, %v3450, %v3454
    %v3459 = vand.u32 2147483647, %v3434
    %vm3460 = vcmp.eq.f32.partialorder %v3459, 8.507059e+37
    %v3461 = vand.u32 %v3434, 2147483648
    %v3462 = vor.u32 1.1754944e-38, %v3461
    %v3463 = vsel %vm3460, %v3462, %v3458
    %v3464 = vmul.f32 1.0, %v3463
    %v3465 = vtanh.pop %v3425
    %v3466 = vtanh.pop %v3426
    %v3467 = vmul.f32 %v3449, %v3378
    %v3468 = vmul.f32 %v3464, %v3379
    %3471 = vrot.lane.b32.xlu0 %v3465, 64
    %v3472 = vpop.permute.xlu0 %3471
    %3473 = vrot.lane.b32.xlu0 %v3466, 64
    %v3474 = vpop.permute.xlu0 %3473
    %v3477 = vmul.f32 %v3449, %v3472
    %v3478 = vmul.f32 %v3464, %v3474
    %3481 = vrot.lane.b32.xlu0 %v3477, 32
    %v3482 = vpop.permute.xlu0 %3481
    %3483 = vrot.lane.b32.xlu0 %v3478, 32
    %v3484 = vpop.permute.xlu0 %3483
    %v3487 = vadd.f32 %v3467, %v3482
    %v3488 = vadd.f32 %v3468, %v3484
    %v3489 = vtanh.pop %v3487
    %v3490 = vtanh.pop %v3488
    %3493 = vrot.lane.b32.xlu0 %v3489, 64
    %v3494 = vpop.permute.xlu0 %3493
    %3495 = vrot.lane.b32.xlu0 %v3490, 64
    %v3496 = vpop.permute.xlu0 %3495
    %v3499 = vmul.f32 %v3449, %v3494
    %v3500 = vmul.f32 %v3464, %v3496
    %3503 = vrot.lane.b32.xlu0 %v3499, 32
    %v3504 = vpop.permute.xlu0 %3503
    %3505 = vrot.lane.b32.xlu0 %v3500, 32
    %v3506 = vpop.permute.xlu0 %3505
    %v3507 = vsel %vm100, %v3504, 0
    %v3509 = vsel %vm100, %v3506, 0
    %3511 = vmatpush.msra.mxu0 0.0
    %3512 = vmatpush.msra.mxu0 0.0
    %3513 = vmatpush.msra.mxu0 0.0
    %3514 = vmatpush.msra.mxu0 0.0
    %3515 = vmatpush.msra.mxu0 0.0
    %3516 = vmatpush.msra.mxu0 0.0
    %3517 = vmatpush.msra.mxu0 0.0
    %3518 = vmatpush.msra.mxu0 0.0
    %3519 = vmatpush.msra.mxu0 0.0
    %3520 = vmatpush.msra.mxu0 0.0
    %3521 = vmatpush.msra.mxu0 0.0
    %3522 = vmatpush.msra.mxu0 0.0
    %3523 = vmatpush.msra.mxu0 %v2853
    %3524 = vmatpush.msra.mxu0 %v2852
    %3525 = vmatpush.msra.mxu0 %v2851
    %3526 = vmatpush.msra.mxu0 %v2850
    %3527 = vmatmul.f32.gmra.mxu0 %v3507
    %v3528 = vpop.f32.mrf.mxu0
    %v3529 = vadd.f32 0.0, %v3528
    %3530 = vmatmul.f32.gmra.mxu0 %v3509
    %v3531 = vpop.f32.mrf.mxu0
    %v3532 = vadd.f32 0.0, %v3531
    %3533 = vdwg.mxu0
    %v3534 = vadd.f32 %v2839, %v3529
    %v3535 = vadd.f32 %v2842, %v3532
    %v3536 = vxor.u32 %v3534, 2147483648
    %v3537 = vxor.u32 %v3535, 2147483648
    %v3538 = vmul.f32 %v3536, 1.442695
    %v3539 = vpow.pop %v3538
    %v3540 = vmul.f32 %v3537, 1.442695
    %v3541 = vpow.pop %v3540
    %v3542 = vadd.f32 %v3539, 1.0
    %v3543 = vadd.f32 %v3541, 1.0
    %v3544 = vrcp.pop %v3542
    %v3545 = vmul.f32 %v3542, %v3544
    %v3546 = vsub.f32 1.0, %v3545
    %v3547 = vmul.f32 %v3544, %v3546
    %v3548 = vadd.f32 %v3544, %v3547
    %vm3549 = vweird.f32 %v3542
    %vm3550 = vweird.f32 %v3544
    %vm3551 = vmor %vm3549, %vm3550
    %v3552 = vsel %vm3551, %v3544, %v3548
    %v3553 = vand.u32 2147483647, %v3542
    %vm3554 = vcmp.eq.f32.partialorder %v3553, 8.507059e+37
    %v3555 = vand.u32 %v3542, 2147483648
    %v3556 = vor.u32 1.1754944e-38, %v3555
    %v3557 = vsel %vm3554, %v3556, %v3552
    %v3558 = vmul.f32 1.0, %v3557
    %v3559 = vrcp.pop %v3543
    %v3560 = vmul.f32 %v3543, %v3559
    %v3561 = vsub.f32 1.0, %v3560
    %v3562 = vmul.f32 %v3559, %v3561
    %v3563 = vadd.f32 %v3559, %v3562
    %vm3564 = vweird.f32 %v3543
    %vm3565 = vweird.f32 %v3559
    %vm3566 = vmor %vm3564, %vm3565
    %v3567 = vsel %vm3566, %v3559, %v3563
    %v3568 = vand.u32 2147483647, %v3543
    %vm3569 = vcmp.eq.f32.partialorder %v3568, 8.507059e+37
    %v3570 = vand.u32 %v3543, 2147483648
    %v3571 = vor.u32 1.1754944e-38, %v3570
    %v3572 = vsel %vm3569, %v3571, %v3567
    %v3573 = vmul.f32 1.0, %v3572
    %v3574 = vtanh.pop %v3534
    %v3575 = vtanh.pop %v3535
    %v3576 = vmul.f32 %v3558, %v3487
    %v3577 = vmul.f32 %v3573, %v3488
    %3580 = vrot.lane.b32.xlu0 %v3574, 64
    %v3581 = vpop.permute.xlu0 %3580
    %3582 = vrot.lane.b32.xlu0 %v3575, 64
    %v3583 = vpop.permute.xlu0 %3582
    %v3586 = vmul.f32 %v3558, %v3581
    %v3587 = vmul.f32 %v3573, %v3583
    %3590 = vrot.lane.b32.xlu0 %v3586, 32
    %v3591 = vpop.permute.xlu0 %3590
    %3592 = vrot.lane.b32.xlu0 %v3587, 32
    %v3593 = vpop.permute.xlu0 %3592
    %v3596 = vadd.f32 %v3576, %v3591
    %v3597 = vadd.f32 %v3577, %v3593
    %v3598 = vtanh.pop %v3596
    %v3599 = vtanh.pop %v3597
    %3602 = vrot.lane.b32.xlu0 %v3598, 64
    %v3603 = vpop.permute.xlu0 %3602
    %3604 = vrot.lane.b32.xlu0 %v3599, 64
    %v3605 = vpop.permute.xlu0 %3604
    %v3608 = vmul.f32 %v3558, %v3603
    %v3609 = vmul.f32 %v3573, %v3605
    %3612 = vrot.lane.b32.xlu0 %v3608, 32
    %v3613 = vpop.permute.xlu0 %3612
    %3614 = vrot.lane.b32.xlu0 %v3609, 32
    %v3615 = vpop.permute.xlu0 %3614
    %v3616 = vsel %vm100, %v3613, 0
    %v3618 = vsel %vm100, %v3615, 0
    %3620 = vmatpush.msra.mxu0 0.0
    %3621 = vmatpush.msra.mxu0 0.0
    %3622 = vmatpush.msra.mxu0 0.0
    %3623 = vmatpush.msra.mxu0 0.0
    %3624 = vmatpush.msra.mxu0 0.0
    %3625 = vmatpush.msra.mxu0 0.0
    %3626 = vmatpush.msra.mxu0 0.0
    %3627 = vmatpush.msra.mxu0 0.0
    %3628 = vmatpush.msra.mxu0 0.0
    %3629 = vmatpush.msra.mxu0 0.0
    %3630 = vmatpush.msra.mxu0 0.0
    %3631 = vmatpush.msra.mxu0 0.0
    %3632 = vmatpush.msra.mxu0 %v2853
    %3633 = vmatpush.msra.mxu0 %v2852
    %3634 = vmatpush.msra.mxu0 %v2851
    %3635 = vmatpush.msra.mxu0 %v2850
    %3636 = vmatmul.f32.gmra.mxu0 %v3616
    %v3637 = vpop.f32.mrf.mxu0
    %v3638 = vadd.f32 0.0, %v3637
    %3639 = vmatmul.f32.gmra.mxu0 %v3618
    %v3640 = vpop.f32.mrf.mxu0
    %v3641 = vadd.f32 0.0, %v3640
    %3642 = vdwg.mxu0
    %v3643 = vadd.f32 %v2845, %v3638
    %v3644 = vadd.f32 %v2848, %v3641
    %v3645 = vxor.u32 %v3643, 2147483648
    %v3646 = vxor.u32 %v3644, 2147483648
    %v3647 = vmul.f32 %v3645, 1.442695
    %v3648 = vpow.pop %v3647
    %v3649 = vmul.f32 %v3646, 1.442695
    %v3650 = vpow.pop %v3649
    %v3651 = vadd.f32 %v3648, 1.0
    %v3652 = vadd.f32 %v3650, 1.0
    %v3653 = vrcp.pop %v3651
    %v3654 = vmul.f32 %v3651, %v3653
    %v3655 = vsub.f32 1.0, %v3654
    %v3656 = vmul.f32 %v3653, %v3655
    %v3657 = vadd.f32 %v3653, %v3656
    %vm3658 = vweird.f32 %v3651
    %vm3659 = vweird.f32 %v3653
    %vm3660 = vmor %vm3658, %vm3659
    %v3661 = vsel %vm3660, %v3653, %v3657
    %v3662 = vand.u32 2147483647, %v3651
    %vm3663 = vcmp.eq.f32.partialorder %v3662, 8.507059e+37
    %v3664 = vand.u32 %v3651, 2147483648
    %v3665 = vor.u32 1.1754944e-38, %v3664
    %v3666 = vsel %vm3663, %v3665, %v3661
    %v3667 = vmul.f32 1.0, %v3666
    %v3668 = vrcp.pop %v3652
    %v3669 = vmul.f32 %v3652, %v3668
    %v3670 = vsub.f32 1.0, %v3669
    %v3671 = vmul.f32 %v3668, %v3670
    %v3672 = vadd.f32 %v3668, %v3671
    %vm3673 = vweird.f32 %v3652
    %vm3674 = vweird.f32 %v3668
    %vm3675 = vmor %vm3673, %vm3674
    %v3676 = vsel %vm3675, %v3668, %v3672
    %v3677 = vand.u32 2147483647, %v3652
    %vm3678 = vcmp.eq.f32.partialorder %v3677, 8.507059e+37
    %v3679 = vand.u32 %v3652, 2147483648
    %v3680 = vor.u32 1.1754944e-38, %v3679
    %v3681 = vsel %vm3678, %v3680, %v3676
    %v3682 = vmul.f32 1.0, %v3681
    %v3683 = vtanh.pop %v3643
    %v3684 = vtanh.pop %v3644
    %v3685 = vmul.f32 %v3667, %v3596
    %v3686 = vmul.f32 %v3682, %v3597
    %3689 = vrot.lane.b32.xlu0 %v3683, 64
    %v3690 = vpop.permute.xlu0 %3689
    %3691 = vrot.lane.b32.xlu0 %v3684, 64
    %v3692 = vpop.permute.xlu0 %3691
    %v3695 = vmul.f32 %v3667, %v3690
    %v3696 = vmul.f32 %v3682, %v3692
    %3699 = vrot.lane.b32.xlu0 %v3695, 32
    %v3700 = vpop.permute.xlu0 %3699
    %3701 = vrot.lane.b32.xlu0 %v3696, 32
    %v3702 = vpop.permute.xlu0 %3701
    %v3705 = vadd.f32 %v3685, %v3700
    %v3706 = vadd.f32 %v3686, %v3702
    %v3707 = vtanh.pop %v3705
    %v3708 = vtanh.pop %v3706
    %3711 = vrot.lane.b32.xlu0 %v3707, 64
    %v3712 = vpop.permute.xlu0 %3711
    %3713 = vrot.lane.b32.xlu0 %v3708, 64
    %v3714 = vpop.permute.xlu0 %3713
    %v3717 = vmul.f32 %v3667, %v3712
    %v3718 = vmul.f32 %v3682, %v3714
    %v3719 = vld [vmem:[%s7] sm:$0xff]
    %v3720 = vld [vmem:[%s7 + $0x8] sm:$0xff]
    %v3721 = vld [vmem:[%s7 + $0x10] sm:$0xff]
    %v3722 = vld [vmem:[%s7 + $0x18] sm:$0xff]
    %v3723 = vld [vmem:[%s7 + $0x20] sm:$0xff]
    %v3724 = vld [vmem:[%s7 + $0x28] sm:$0xff]
    %v3725 = vld [vmem:[%s7 + $0x30] sm:$0xff]
    %v3726 = vld [vmem:[%s7 + $0x38] sm:$0xff]
    %3728 = vrot.lane.b32.xlu0 %v3718, 32
    %v3729 = vpop.permute.xlu0 %3728
    %v3730 = vsel %vm100, %v3729, 0
    %3732 = vmatpush.msra.mxu0 0.0
    %3733 = vmatpush.msra.mxu0 0.0
    %3734 = vmatpush.msra.mxu0 0.0
    %3735 = vmatpush.msra.mxu0 0.0
    %3736 = vmatpush.msra.mxu0 0.0
    %3737 = vmatpush.msra.mxu0 0.0
    %3738 = vmatpush.msra.mxu0 0.0
    %3739 = vmatpush.msra.mxu0 0.0
    %3740 = vmatpush.msra.mxu0 0.0
    %3741 = vmatpush.msra.mxu0 0.0
    %3742 = vmatpush.msra.mxu0 0.0
    %3743 = vmatpush.msra.mxu0 0.0
    %3744 = vmatpush.msra.mxu0 %v3726
    %3745 = vmatpush.msra.mxu0 %v3725
    %3746 = vmatpush.msra.mxu0 %v3724
    %3747 = vmatpush.msra.mxu0 %v3723
    %3748 = vmatmul.f32.gmra.mxu0 %v3730
    %v3749 = vpop.f32.mrf.mxu0
    %v3750 = vadd.f32 0.0, %v3749
    %3751 = vdwg.mxu0
    %3753 = vrot.lane.b32.xlu0 %v3717, 32
    %v3754 = vpop.permute.xlu0 %3753
    %v3755 = vsel %vm100, %v3754, 0
    %3757 = vmatpush.msra.mxu0 0.0
    %3758 = vmatpush.msra.mxu0 0.0
    %3759 = vmatpush.msra.mxu0 0.0
    %3760 = vmatpush.msra.mxu0 0.0
    %3761 = vmatpush.msra.mxu0 0.0
    %3762 = vmatpush.msra.mxu0 0.0
    %3763 = vmatpush.msra.mxu0 0.0
    %3764 = vmatpush.msra.mxu0 0.0
    %3765 = vmatpush.msra.mxu0 0.0
    %3766 = vmatpush.msra.mxu0 0.0
    %3767 = vmatpush.msra.mxu0 0.0
    %3768 = vmatpush.msra.mxu0 0.0
    %3769 = vmatpush.msra.mxu0 %v3722
    %3770 = vmatpush.msra.mxu0 %v3721
    %3771 = vmatpush.msra.mxu0 %v3720
    %3772 = vmatpush.msra.mxu0 %v3719
    %3773 = vmatmul.f32.gmra.mxu0 %v3755
    %v3774 = vpop.f32.mrf.mxu0
    %v3775 = vadd.f32 %v3750, %v3774
    %3776 = vdwg.mxu0
    %v3777 = vld [vmem:[%s8] sm:$0x1]
    %v3779 = vperm.slane %v3777, 0
    %v3781 = vadd.f32 %v3775, %v3779
    %v3782 = vmul.f32 %v3781, 0.5
    %v3783 = vmul.f32 %v3782, 1.442695
    %v3784 = vpow.pop %v3783
    %v3785 = vld [vmem:[%s1] sm:$0xff]
    %3787 = vrot.lane.b32.xlu0 %v3784, 112
    %v3788 = vpop.permute.xlu0 %3787
    %v3790 = vmul.f32 %v3785, %v3788
    %v3791 = vadd.f32 %v3790, %v3781
    %v3792 = vmul.f32 %v3781, %v3781
    %3794 = vrot.lane.b32.xlu0 %v3792, 16
    %v3795 = vpop.permute.xlu0 %3794
    %v3797 = vsub.f32 %v3781, %v3795
    %v3798 = vmul.f32 %v3781, 1.442695
    %v3799 = vpow.pop %v3798
    %v3800 = vsub.f32 %v3797, %v3799
    %v3801 = vadd.f32 %v3800, 1.0
    %3803 = vrot.lane.b32.xlu0 %v3801, 112
    %v3804 = vpop.permute.xlu0 %3803
    %vm3806 = vcmask 130048
    %v3807 = vsel %vm3806, %v3804, 0.0
    %3808 = vadd.xlane.f32.xlu0 %v3807
    %v3809 = vpop.xlane.xlu0 %3808
    %v3810 = vmul.f32 %v3809, -0.5
    %v3811 = vlaneseq
    %v3812 = vshrl.u32 %v3811, 7
    %vm3813 = vcmp.lt.s32.totalorder %v3812, 2
    %v3814 = vsel %vm3813, %v3810, 0.0
    %v3815 = vrot.slane %v3814, 4
    %v3816 = vadd.f32 %v3814, %v3815
    %v3817 = vrot.slane %v3816, 2
    %v3818 = vadd.f32 %v3816, %v3817
    %v3819 = vrot.slane %v3818, 1
    %v3820 = vadd.f32 %v3818, %v3819
    %v3821 = vmul.f32 %v3820, 0.5
    %vm3822 = vcmask 0
    %3823 = vst.msk [vmem:[#allocation3] sm:$0x1] %vm3822, %v3821
    %v3824 = vld [vmem:[%s9] sm:$0xff]
    %v3825 = vld [vmem:[%s9 + $0x8] sm:$0xff]
    %v3826 = vld [vmem:[%s9 + $0x10] sm:$0xff]
    %v3827 = vld [vmem:[%s9 + $0x18] sm:$0xff]
    %v3828 = vld [vmem:[%s9 + $0x20] sm:$0xff]
    %v3829 = vld [vmem:[%s9 + $0x28] sm:$0xff]
    %v3830 = vld [vmem:[%s9 + $0x30] sm:$0xff]
    %v3831 = vld [vmem:[%s9 + $0x38] sm:$0xff]
    %v3832 = vld [vmem:[%s10] sm:$0x3]
    %v3834 = vperm.slane %v3832, 0
    %v3835 = vperm.slane %v3832, 1
    %v3839 = vsel %vm100, %v2711, 0
    %v3842 = vsel %vm100, %v2712, 0
    %v3845 = vsel %vm100, %v2713, 0
    %v3848 = vsel %vm100, %v2714, 0
    %v3851 = vsel %vm100, %v2715, 0
    %v3854 = vsel %vm100, %v2716, 0
    %v3857 = vsel %vm100, %v2717, 0
    %v3860 = vsel %vm100, %v2718, 0
    %v3863 = vsel %vm100, %v2719, 0
    %v3866 = vsel %vm100, %v2720, 0
    %v3869 = vsel %vm100, %v2721, 0
    %v3872 = vsel %vm100, %v2722, 0
    %v3875 = vsel %vm100, %v2723, 0
    %v3878 = vsel %vm100, %v2724, 0
    %v3881 = vsel %vm100, %v2725, 0
    %v3884 = vsel %vm100, %v2726, 0
    %v3887 = vsel %vm100, %v2727, 0
    %v3890 = vsel %vm100, %v2728, 0
    %3892 = vmatpush.msra.mxu0 0.0
    %3893 = vmatpush.msra.mxu0 0.0
    %3894 = vmatpush.msra.mxu0 0.0
    %3895 = vmatpush.msra.mxu0 0.0
    %3896 = vmatpush.msra.mxu0 0.0
    %3897 = vmatpush.msra.mxu0 0.0
    %3898 = vmatpush.msra.mxu0 0.0
    %3899 = vmatpush.msra.mxu0 0.0
    %3900 = vmatpush.msra.mxu0 0.0
    %3901 = vmatpush.msra.mxu0 0.0
    %3902 = vmatpush.msra.mxu0 0.0
    %3903 = vmatpush.msra.mxu0 0.0
    %3904 = vmatpush.msra.mxu0 %v3830
    %3905 = vmatpush.msra.mxu0 %v3828
    %3906 = vmatpush.msra.mxu0 %v3826
    %3907 = vmatpush.msra.mxu0 %v3824
    %3908 = vmatmul.f32.gmra.mxu0 %v3839
    %v3909 = vpop.f32.mrf.mxu0
    %v3910 = vadd.f32 %v3834, %v3909
    %3911 = vmatmul.f32.gmra.mxu0 %v3842
    %v3912 = vpop.f32.mrf.mxu0
    %v3913 = vadd.f32 %v3834, %v3912
    %3914 = vmatmul.f32.gmra.mxu0 %v3845
    %v3915 = vpop.f32.mrf.mxu0
    %v3916 = vadd.f32 %v3834, %v3915
    %3917 = vmatmul.f32.gmra.mxu0 %v3848
    %v3918 = vpop.f32.mrf.mxu0
    %v3919 = vadd.f32 %v3834, %v3918
    %3920 = vmatmul.f32.gmra.mxu0 %v3851
    %v3921 = vpop.f32.mrf.mxu0
    %v3922 = vadd.f32 %v3834, %v3921
    %3923 = vmatmul.f32.gmra.mxu0 %v3854
    %v3924 = vpop.f32.mrf.mxu0
    %v3925 = vadd.f32 %v3834, %v3924
    %3926 = vmatmul.f32.gmra.mxu0 %v3857
    %v3927 = vpop.f32.mrf.mxu0
    %v3928 = vadd.f32 %v3834, %v3927
    %3929 = vmatmul.f32.gmra.mxu0 %v3860
    %v3930 = vpop.f32.mrf.mxu0
    %v3931 = vadd.f32 %v3834, %v3930
    %3932 = vmatmul.f32.gmra.mxu0 %v3863
    %v3933 = vpop.f32.mrf.mxu0
    %v3934 = vadd.f32 %v3834, %v3933
    %3935 = vmatmul.f32.gmra.mxu0 %v3866
    %v3936 = vpop.f32.mrf.mxu0
    %3937 = vmatmul.f32.gmra.mxu0 %v3869
    %v3938 = vpop.f32.mrf.mxu0
    %3939 = vmatmul.f32.gmra.mxu0 %v3872
    %v3940 = vpop.f32.mrf.mxu0
    %3941 = vmatmul.f32.gmra.mxu0 %v3875
    %v3942 = vpop.f32.mrf.mxu0
    %3943 = vmatmul.f32.gmra.mxu0 %v3878
    %v3944 = vpop.f32.mrf.mxu0
    %3945 = vmatmul.f32.gmra.mxu0 %v3881
    %v3946 = vpop.f32.mrf.mxu0
    %3947 = vmatmul.f32.gmra.mxu0 %v3884
    %v3948 = vpop.f32.mrf.mxu0
    %3949 = vmatmul.f32.gmra.mxu0 %v3887
    %v3950 = vpop.f32.mrf.mxu0
    %3951 = vmatmul.f32.gmra.mxu0 %v3890
    %v3952 = vpop.f32.mrf.mxu0
    %3953 = vdwg.mxu0
    %3954 = vmatpush.msra.mxu0 0.0
    %3955 = vmatpush.msra.mxu0 0.0
    %3956 = vmatpush.msra.mxu0 0.0
    %3957 = vmatpush.msra.mxu0 0.0
    %3958 = vmatpush.msra.mxu0 0.0
    %3959 = vmatpush.msra.mxu0 0.0
    %3960 = vmatpush.msra.mxu0 0.0
    %3961 = vmatpush.msra.mxu0 0.0
    %3962 = vmatpush.msra.mxu0 0.0
    %3963 = vmatpush.msra.mxu0 0.0
    %3964 = vmatpush.msra.mxu0 0.0
    %3965 = vmatpush.msra.mxu0 0.0
    %3966 = vmatpush.msra.mxu0 %v3831
    %3967 = vmatpush.msra.mxu0 %v3829
    %3968 = vmatpush.msra.mxu0 %v3827
    %3969 = vmatpush.msra.mxu0 %v3825
    %3970 = vmatmul.f32.gmra.mxu0 %v3839
    %v3971 = vpop.f32.mrf.mxu0
    %3972 = vmatmul.f32.gmra.mxu0 %v3842
    %v3973 = vpop.f32.mrf.mxu0
    %3974 = vmatmul.f32.gmra.mxu0 %v3845
    %v3975 = vpop.f32.mrf.mxu0
    %3976 = vmatmul.f32.gmra.mxu0 %v3848
    %v3977 = vpop.f32.mrf.mxu0
    %3978 = vmatmul.f32.gmra.mxu0 %v3851
    %v3979 = vpop.f32.mrf.mxu0
    %3980 = vmatmul.f32.gmra.mxu0 %v3854
    %v3981 = vpop.f32.mrf.mxu0
    %3982 = vmatmul.f32.gmra.mxu0 %v3857
    %v3983 = vpop.f32.mrf.mxu0
    %3984 = vmatmul.f32.gmra.mxu0 %v3860
    %v3985 = vpop.f32.mrf.mxu0
    %3986 = vmatmul.f32.gmra.mxu0 %v3863
    %v3987 = vpop.f32.mrf.mxu0
    %3988 = vmatmul.f32.gmra.mxu0 %v3866
    %v3989 = vpop.f32.mrf.mxu0
    %v3990 = vadd.f32 %v3835, %v3989
    %3991 = vmatmul.f32.gmra.mxu0 %v3869
    %v3992 = vpop.f32.mrf.mxu0
    %v3993 = vadd.f32 %v3835, %v3992
    %3994 = vmatmul.f32.gmra.mxu0 %v3872
    %v3995 = vpop.f32.mrf.mxu0
    %v3996 = vadd.f32 %v3835, %v3995
    %3997 = vmatmul.f32.gmra.mxu0 %v3875
    %v3998 = vpop.f32.mrf.mxu0
    %v3999 = vadd.f32 %v3835, %v3998
    %4000 = vmatmul.f32.gmra.mxu0 %v3878
    %v4001 = vpop.f32.mrf.mxu0
    %v4002 = vadd.f32 %v3835, %v4001
    %4003 = vmatmul.f32.gmra.mxu0 %v3881
    %v4004 = vpop.f32.mrf.mxu0
    %v4005 = vadd.f32 %v3835, %v4004
    %4006 = vmatmul.f32.gmra.mxu0 %v3884
    %v4007 = vpop.f32.mrf.mxu0
    %v4008 = vadd.f32 %v3835, %v4007
    %4009 = vmatmul.f32.gmra.mxu0 %v3887
    %v4010 = vpop.f32.mrf.mxu0
    %v4011 = vadd.f32 %v3835, %v4010
    %4012 = vmatmul.f32.gmra.mxu0 %v3890
    %v4013 = vpop.f32.mrf.mxu0
    %v4014 = vadd.f32 %v3835, %v4013
    %4015 = vdwg.mxu0
    %v4016 = vld [vmem:[%s11] sm:$0xff]
    %v4017 = vld [vmem:[%s11 + $0x8] sm:$0xff]
    %v4018 = vld [vmem:[%s11 + $0x10] sm:$0xff]
    %v4019 = vld [vmem:[%s11 + $0x18] sm:$0xff]
    %4020 = vmatpush.msra.mxu0 0.0
    %4021 = vmatpush.msra.mxu0 0.0
    %4022 = vmatpush.msra.mxu0 0.0
    %4023 = vmatpush.msra.mxu0 0.0
    %4024 = vmatpush.msra.mxu0 0.0
    %4025 = vmatpush.msra.mxu0 0.0
    %4026 = vmatpush.msra.mxu0 0.0
    %4027 = vmatpush.msra.mxu0 0.0
    %4028 = vmatpush.msra.mxu0 0.0
    %4029 = vmatpush.msra.mxu0 0.0
    %4030 = vmatpush.msra.mxu0 0.0
    %4031 = vmatpush.msra.mxu0 0.0
    %4032 = vmatpush.msra.mxu0 %v4019
    %4033 = vmatpush.msra.mxu0 %v4018
    %4034 = vmatpush.msra.mxu0 %v4017
    %4035 = vmatpush.msra.mxu0 %v4016
    %4036 = vmatmul.f32.gmra.mxu0 %v2855
    %v4037 = vpop.f32.mrf.mxu0
    %v4038 = vadd.f32 0.0, %v4037
    %4039 = vdwg.mxu0
    %v4040 = vadd.f32 %v3910, %v4038
    %v4041 = vxor.u32 %v4040, 2147483648
    %v4042 = vmul.f32 %v4041, 1.442695
    %v4043 = vpow.pop %v4042
    %v4044 = vadd.f32 %v4043, 1.0
    %v4045 = vrcp.pop %v4044
    %v4046 = vmul.f32 %v4044, %v4045
    %v4047 = vsub.f32 1.0, %v4046
    %v4048 = vmul.f32 %v4045, %v4047
    %v4049 = vadd.f32 %v4045, %v4048
    %vm4050 = vweird.f32 %v4044
    %vm4051 = vweird.f32 %v4045
    %vm4052 = vmor %vm4050, %vm4051
    %v4053 = vsel %vm4052, %v4045, %v4049
    %v4054 = vand.u32 2147483647, %v4044
    %vm4055 = vcmp.eq.f32.partialorder %v4054, 8.507059e+37
    %v4056 = vand.u32 %v4044, 2147483648
    %v4057 = vor.u32 1.1754944e-38, %v4056
    %v4058 = vsel %vm4055, %v4057, %v4053
    %v4059 = vmul.f32 1.0, %v4058
    %v4060 = vtanh.pop %v4040
    %v4061 = vmul.f32 %v4059, 0.0
    %4063 = vrot.lane.b32.xlu0 %v4060, 64
    %v4064 = vpop.permute.xlu0 %4063
    %v4066 = vmul.f32 %v4059, %v4064
    %4068 = vrot.lane.b32.xlu0 %v4066, 32
    %v4069 = vpop.permute.xlu0 %4068
    %v4071 = vadd.f32 %v4061, %v4069
    %v4072 = vtanh.pop %v4071
    %4074 = vrot.lane.b32.xlu0 %v4072, 64
    %v4075 = vpop.permute.xlu0 %4074
    %v4077 = vmul.f32 %v4059, %v4075
    %4079 = vrot.lane.b32.xlu0 %v4077, 32
    %v4080 = vpop.permute.xlu0 %4079
    %v4081 = vsel %vm100, %v4080, 0
    %4083 = vmatpush.msra.mxu0 0.0
    %4084 = vmatpush.msra.mxu0 0.0
    %4085 = vmatpush.msra.mxu0 0.0
    %4086 = vmatpush.msra.mxu0 0.0
    %4087 = vmatpush.msra.mxu0 0.0
    %4088 = vmatpush.msra.mxu0 0.0
    %4089 = vmatpush.msra.mxu0 0.0
    %4090 = vmatpush.msra.mxu0 0.0
    %4091 = vmatpush.msra.mxu0 0.0
    %4092 = vmatpush.msra.mxu0 0.0
    %4093 = vmatpush.msra.mxu0 0.0
    %4094 = vmatpush.msra.mxu0 0.0
    %4095 = vmatpush.msra.mxu0 %v4019
    %4096 = vmatpush.msra.mxu0 %v4018
    %4097 = vmatpush.msra.mxu0 %v4017
    %4098 = vmatpush.msra.mxu0 %v4016
    %4099 = vmatmul.f32.gmra.mxu0 %v4081
    %v4100 = vpop.f32.mrf.mxu0
    %v4101 = vadd.f32 0.0, %v4100
    %4102 = vdwg.mxu0
    %v4103 = vadd.f32 %v3913, %v4101
    %v4104 = vxor.u32 %v4103, 2147483648
    %v4105 = vmul.f32 %v4104, 1.442695
    %v4106 = vpow.pop %v4105
    %v4107 = vadd.f32 %v4106, 1.0
    %v4108 = vrcp.pop %v4107
    %v4109 = vmul.f32 %v4107, %v4108
    %v4110 = vsub.f32 1.0, %v4109
    %v4111 = vmul.f32 %v4108, %v4110
    %v4112 = vadd.f32 %v4108, %v4111
    %vm4113 = vweird.f32 %v4107
    %vm4114 = vweird.f32 %v4108
    %vm4115 = vmor %vm4113, %vm4114
    %v4116 = vsel %vm4115, %v4108, %v4112
    %v4117 = vand.u32 2147483647, %v4107
    %vm4118 = vcmp.eq.f32.partialorder %v4117, 8.507059e+37
    %v4119 = vand.u32 %v4107, 2147483648
    %v4120 = vor.u32 1.1754944e-38, %v4119
    %v4121 = vsel %vm4118, %v4120, %v4116
    %v4122 = vmul.f32 1.0, %v4121
    %v4123 = vtanh.pop %v4103
    %v4124 = vmul.f32 %v4122, %v4071
    %4126 = vrot.lane.b32.xlu0 %v4123, 64
    %v4127 = vpop.permute.xlu0 %4126
    %v4129 = vmul.f32 %v4122, %v4127
    %4131 = vrot.lane.b32.xlu0 %v4129, 32
    %v4132 = vpop.permute.xlu0 %4131
    %v4134 = vadd.f32 %v4124, %v4132
    %v4135 = vtanh.pop %v4134
    %4137 = vrot.lane.b32.xlu0 %v4135, 64
    %v4138 = vpop.permute.xlu0 %4137
    %v4140 = vmul.f32 %v4122, %v4138
    %4142 = vrot.lane.b32.xlu0 %v4140, 32
    %v4143 = vpop.permute.xlu0 %4142
    %v4144 = vsel %vm100, %v4143, 0
    %4146 = vmatpush.msra.mxu0 0.0
    %4147 = vmatpush.msra.mxu0 0.0
    %4148 = vmatpush.msra.mxu0 0.0
    %4149 = vmatpush.msra.mxu0 0.0
    %4150 = vmatpush.msra.mxu0 0.0
    %4151 = vmatpush.msra.mxu0 0.0
    %4152 = vmatpush.msra.mxu0 0.0
    %4153 = vmatpush.msra.mxu0 0.0
    %4154 = vmatpush.msra.mxu0 0.0
    %4155 = vmatpush.msra.mxu0 0.0
    %4156 = vmatpush.msra.mxu0 0.0
    %4157 = vmatpush.msra.mxu0 0.0
    %4158 = vmatpush.msra.mxu0 %v4019
    %4159 = vmatpush.msra.mxu0 %v4018
    %4160 = vmatpush.msra.mxu0 %v4017
    %4161 = vmatpush.msra.mxu0 %v4016
    %4162 = vmatmul.f32.gmra.mxu0 %v4144
    %v4163 = vpop.f32.mrf.mxu0
    %v4164 = vadd.f32 0.0, %v4163
    %4165 = vdwg.mxu0
    %v4166 = vadd.f32 %v3916, %v4164
    %v4167 = vxor.u32 %v4166, 2147483648
    %v4168 = vmul.f32 %v4167, 1.442695
    %v4169 = vpow.pop %v4168
    %v4170 = vadd.f32 %v4169, 1.0
    %v4171 = vrcp.pop %v4170
    %v4172 = vmul.f32 %v4170, %v4171
    %v4173 = vsub.f32 1.0, %v4172
    %v4174 = vmul.f32 %v4171, %v4173
    %v4175 = vadd.f32 %v4171, %v4174
    %vm4176 = vweird.f32 %v4170
    %vm4177 = vweird.f32 %v4171
    %vm4178 = vmor %vm4176, %vm4177
    %v4179 = vsel %vm4178, %v4171, %v4175
    %v4180 = vand.u32 2147483647, %v4170
    %vm4181 = vcmp.eq.f32.partialorder %v4180, 8.507059e+37
    %v4182 = vand.u32 %v4170, 2147483648
    %v4183 = vor.u32 1.1754944e-38, %v4182
    %v4184 = vsel %vm4181, %v4183, %v4179
    %v4185 = vmul.f32 1.0, %v4184
    %v4186 = vtanh.pop %v4166
    %v4187 = vmul.f32 %v4185, %v4134
    %4189 = vrot.lane.b32.xlu0 %v4186, 64
    %v4190 = vpop.permute.xlu0 %4189
    %v4192 = vmul.f32 %v4185, %v4190
    %4194 = vrot.lane.b32.xlu0 %v4192, 32
    %v4195 = vpop.permute.xlu0 %4194
    %v4197 = vadd.f32 %v4187, %v4195
    %v4198 = vtanh.pop %v4197
    %4200 = vrot.lane.b32.xlu0 %v4198, 64
    %v4201 = vpop.permute.xlu0 %4200
    %v4203 = vmul.f32 %v4185, %v4201
    %4205 = vrot.lane.b32.xlu0 %v4203, 32
    %v4206 = vpop.permute.xlu0 %4205
    %v4207 = vsel %vm100, %v4206, 0
    %4209 = vmatpush.msra.mxu0 0.0
    %4210 = vmatpush.msra.mxu0 0.0
    %4211 = vmatpush.msra.mxu0 0.0
    %4212 = vmatpush.msra.mxu0 0.0
    %4213 = vmatpush.msra.mxu0 0.0
    %4214 = vmatpush.msra.mxu0 0.0
    %4215 = vmatpush.msra.mxu0 0.0
    %4216 = vmatpush.msra.mxu0 0.0
    %4217 = vmatpush.msra.mxu0 0.0
    %4218 = vmatpush.msra.mxu0 0.0
    %4219 = vmatpush.msra.mxu0 0.0
    %4220 = vmatpush.msra.mxu0 0.0
    %4221 = vmatpush.msra.mxu0 %v4019
    %4222 = vmatpush.msra.mxu0 %v4018
    %4223 = vmatpush.msra.mxu0 %v4017
    %4224 = vmatpush.msra.mxu0 %v4016
    %4225 = vmatmul.f32.gmra.mxu0 %v4207
    %v4226 = vpop.f32.mrf.mxu0
    %v4227 = vadd.f32 0.0, %v4226
    %4228 = vdwg.mxu0
    %v4229 = vadd.f32 %v3919, %v4227
    %v4230 = vxor.u32 %v4229, 2147483648
    %v4231 = vmul.f32 %v4230, 1.442695
    %v4232 = vpow.pop %v4231
    %v4233 = vadd.f32 %v4232, 1.0
    %v4234 = vrcp.pop %v4233
    %v4235 = vmul.f32 %v4233, %v4234
    %v4236 = vsub.f32 1.0, %v4235
    %v4237 = vmul.f32 %v4234, %v4236
    %v4238 = vadd.f32 %v4234, %v4237
    %vm4239 = vweird.f32 %v4233
    %vm4240 = vweird.f32 %v4234
    %vm4241 = vmor %vm4239, %vm4240
    %v4242 = vsel %vm4241, %v4234, %v4238
    %v4243 = vand.u32 2147483647, %v4233
    %vm4244 = vcmp.eq.f32.partialorder %v4243, 8.507059e+37
    %v4245 = vand.u32 %v4233, 2147483648
    %v4246 = vor.u32 1.1754944e-38, %v4245
    %v4247 = vsel %vm4244, %v4246, %v4242
    %v4248 = vmul.f32 1.0, %v4247
    %v4249 = vtanh.pop %v4229
    %v4250 = vmul.f32 %v4248, %v4197
    %4252 = vrot.lane.b32.xlu0 %v4249, 64
    %v4253 = vpop.permute.xlu0 %4252
    %v4255 = vmul.f32 %v4248, %v4253
    %4257 = vrot.lane.b32.xlu0 %v4255, 32
    %v4258 = vpop.permute.xlu0 %4257
    %v4260 = vadd.f32 %v4250, %v4258
    %v4261 = vtanh.pop %v4260
    %4263 = vrot.lane.b32.xlu0 %v4261, 64
    %v4264 = vpop.permute.xlu0 %4263
    %v4266 = vmul.f32 %v4248, %v4264
    %4268 = vrot.lane.b32.xlu0 %v4266, 32
    %v4269 = vpop.permute.xlu0 %4268
    %v4270 = vsel %vm100, %v4269, 0
    %4272 = vmatpush.msra.mxu0 0.0
    %4273 = vmatpush.msra.mxu0 0.0
    %4274 = vmatpush.msra.mxu0 0.0
    %4275 = vmatpush.msra.mxu0 0.0
    %4276 = vmatpush.msra.mxu0 0.0
    %4277 = vmatpush.msra.mxu0 0.0
    %4278 = vmatpush.msra.mxu0 0.0
    %4279 = vmatpush.msra.mxu0 0.0
    %4280 = vmatpush.msra.mxu0 0.0
    %4281 = vmatpush.msra.mxu0 0.0
    %4282 = vmatpush.msra.mxu0 0.0
    %4283 = vmatpush.msra.mxu0 0.0
    %4284 = vmatpush.msra.mxu0 %v4019
    %4285 = vmatpush.msra.mxu0 %v4018
    %4286 = vmatpush.msra.mxu0 %v4017
    %4287 = vmatpush.msra.mxu0 %v4016
    %4288 = vmatmul.f32.gmra.mxu0 %v4270
    %v4289 = vpop.f32.mrf.mxu0
    %v4290 = vadd.f32 0.0, %v4289
    %4291 = vdwg.mxu0
    %v4292 = vadd.f32 %v3922, %v4290
    %v4293 = vxor.u32 %v4292, 2147483648
    %v4294 = vmul.f32 %v4293, 1.442695
    %v4295 = vpow.pop %v4294
    %v4296 = vadd.f32 %v4295, 1.0
    %v4297 = vrcp.pop %v4296
    %v4298 = vmul.f32 %v4296, %v4297
    %v4299 = vsub.f32 1.0, %v4298
    %v4300 = vmul.f32 %v4297, %v4299
    %v4301 = vadd.f32 %v4297, %v4300
    %vm4302 = vweird.f32 %v4296
    %vm4303 = vweird.f32 %v4297
    %vm4304 = vmor %vm4302, %vm4303
    %v4305 = vsel %vm4304, %v4297, %v4301
    %v4306 = vand.u32 2147483647, %v4296
    %vm4307 = vcmp.eq.f32.partialorder %v4306, 8.507059e+37
    %v4308 = vand.u32 %v4296, 2147483648
    %v4309 = vor.u32 1.1754944e-38, %v4308
    %v4310 = vsel %vm4307, %v4309, %v4305
    %v4311 = vmul.f32 1.0, %v4310
    %v4312 = vtanh.pop %v4292
    %v4313 = vmul.f32 %v4311, %v4260
    %4315 = vrot.lane.b32.xlu0 %v4312, 64
    %v4316 = vpop.permute.xlu0 %4315
    %v4318 = vmul.f32 %v4311, %v4316
    %4320 = vrot.lane.b32.xlu0 %v4318, 32
    %v4321 = vpop.permute.xlu0 %4320
    %v4323 = vadd.f32 %v4313, %v4321
    %v4324 = vtanh.pop %v4323
    %4326 = vrot.lane.b32.xlu0 %v4324, 64
    %v4327 = vpop.permute.xlu0 %4326
    %v4329 = vmul.f32 %v4311, %v4327
    %4331 = vrot.lane.b32.xlu0 %v4329, 32
    %v4332 = vpop.permute.xlu0 %4331
    %v4333 = vsel %vm100, %v4332, 0
    %4335 = vmatpush.msra.mxu0 0.0
    %4336 = vmatpush.msra.mxu0 0.0
    %4337 = vmatpush.msra.mxu0 0.0
    %4338 = vmatpush.msra.mxu0 0.0
    %4339 = vmatpush.msra.mxu0 0.0
    %4340 = vmatpush.msra.mxu0 0.0
    %4341 = vmatpush.msra.mxu0 0.0
    %4342 = vmatpush.msra.mxu0 0.0
    %4343 = vmatpush.msra.mxu0 0.0
    %4344 = vmatpush.msra.mxu0 0.0
    %4345 = vmatpush.msra.mxu0 0.0
    %4346 = vmatpush.msra.mxu0 0.0
    %4347 = vmatpush.msra.mxu0 %v4019
    %4348 = vmatpush.msra.mxu0 %v4018
    %4349 = vmatpush.msra.mxu0 %v4017
    %4350 = vmatpush.msra.mxu0 %v4016
    %4351 = vmatmul.f32.gmra.mxu0 %v4333
    %v4352 = vpop.f32.mrf.mxu0
    %v4353 = vadd.f32 0.0, %v4352
    %4354 = vdwg.mxu0
    %v4355 = vadd.f32 %v3925, %v4353
    %v4356 = vxor.u32 %v4355, 2147483648
    %v4357 = vmul.f32 %v4356, 1.442695
    %v4358 = vpow.pop %v4357
    %v4359 = vadd.f32 %v4358, 1.0
    %v4360 = vrcp.pop %v4359
    %v4361 = vmul.f32 %v4359, %v4360
    %v4362 = vsub.f32 1.0, %v4361
    %v4363 = vmul.f32 %v4360, %v4362
    %v4364 = vadd.f32 %v4360, %v4363
    %vm4365 = vweird.f32 %v4359
    %vm4366 = vweird.f32 %v4360
    %vm4367 = vmor %vm4365, %vm4366
    %v4368 = vsel %vm4367, %v4360, %v4364
    %v4369 = vand.u32 2147483647, %v4359
    %vm4370 = vcmp.eq.f32.partialorder %v4369, 8.507059e+37
    %v4371 = vand.u32 %v4359, 2147483648
    %v4372 = vor.u32 1.1754944e-38, %v4371
    %v4373 = vsel %vm4370, %v4372, %v4368
    %v4374 = vmul.f32 1.0, %v4373
    %v4375 = vtanh.pop %v4355
    %v4376 = vmul.f32 %v4374, %v4323
    %4378 = vrot.lane.b32.xlu0 %v4375, 64
    %v4379 = vpop.permute.xlu0 %4378
    %v4381 = vmul.f32 %v4374, %v4379
    %4383 = vrot.lane.b32.xlu0 %v4381, 32
    %v4384 = vpop.permute.xlu0 %4383
    %v4386 = vadd.f32 %v4376, %v4384
    %v4387 = vtanh.pop %v4386
    %4389 = vrot.lane.b32.xlu0 %v4387, 64
    %v4390 = vpop.permute.xlu0 %4389
    %v4392 = vmul.f32 %v4374, %v4390
    %4394 = vrot.lane.b32.xlu0 %v4392, 32
    %v4395 = vpop.permute.xlu0 %4394
    %v4396 = vsel %vm100, %v4395, 0
    %4398 = vmatpush.msra.mxu0 0.0
    %4399 = vmatpush.msra.mxu0 0.0
    %4400 = vmatpush.msra.mxu0 0.0
    %4401 = vmatpush.msra.mxu0 0.0
    %4402 = vmatpush.msra.mxu0 0.0
    %4403 = vmatpush.msra.mxu0 0.0
    %4404 = vmatpush.msra.mxu0 0.0
    %4405 = vmatpush.msra.mxu0 0.0
    %4406 = vmatpush.msra.mxu0 0.0
    %4407 = vmatpush.msra.mxu0 0.0
    %4408 = vmatpush.msra.mxu0 0.0
    %4409 = vmatpush.msra.mxu0 0.0
    %4410 = vmatpush.msra.mxu0 %v4019
    %4411 = vmatpush.msra.mxu0 %v4018
    %4412 = vmatpush.msra.mxu0 %v4017
    %4413 = vmatpush.msra.mxu0 %v4016
    %4414 = vmatmul.f32.gmra.mxu0 %v4396
    %v4415 = vpop.f32.mrf.mxu0
    %v4416 = vadd.f32 0.0, %v4415
    %4417 = vdwg.mxu0
    %v4418 = vadd.f32 %v3928, %v4416
    %v4419 = vxor.u32 %v4418, 2147483648
    %v4420 = vmul.f32 %v4419, 1.442695
    %v4421 = vpow.pop %v4420
    %v4422 = vadd.f32 %v4421, 1.0
    %v4423 = vrcp.pop %v4422
    %v4424 = vmul.f32 %v4422, %v4423
    %v4425 = vsub.f32 1.0, %v4424
    %v4426 = vmul.f32 %v4423, %v4425
    %v4427 = vadd.f32 %v4423, %v4426
    %vm4428 = vweird.f32 %v4422
    %vm4429 = vweird.f32 %v4423
    %vm4430 = vmor %vm4428, %vm4429
    %v4431 = vsel %vm4430, %v4423, %v4427
    %v4432 = vand.u32 2147483647, %v4422
    %vm4433 = vcmp.eq.f32.partialorder %v4432, 8.507059e+37
    %v4434 = vand.u32 %v4422, 2147483648
    %v4435 = vor.u32 1.1754944e-38, %v4434
    %v4436 = vsel %vm4433, %v4435, %v4431
    %v4437 = vmul.f32 1.0, %v4436
    %v4438 = vtanh.pop %v4418
    %v4439 = vmul.f32 %v4437, %v4386
    %4441 = vrot.lane.b32.xlu0 %v4438, 64
    %v4442 = vpop.permute.xlu0 %4441
    %v4444 = vmul.f32 %v4437, %v4442
    %4446 = vrot.lane.b32.xlu0 %v4444, 32
    %v4447 = vpop.permute.xlu0 %4446
    %v4449 = vadd.f32 %v4439, %v4447
    %v4450 = vtanh.pop %v4449
    %4452 = vrot.lane.b32.xlu0 %v4450, 64
    %v4453 = vpop.permute.xlu0 %4452
    %v4455 = vmul.f32 %v4437, %v4453
    %4457 = vrot.lane.b32.xlu0 %v4455, 32
    %v4458 = vpop.permute.xlu0 %4457
    %v4459 = vsel %vm100, %v4458, 0
    %4461 = vmatpush.msra.mxu0 0.0
    %4462 = vmatpush.msra.mxu0 0.0
    %4463 = vmatpush.msra.mxu0 0.0
    %4464 = vmatpush.msra.mxu0 0.0
    %4465 = vmatpush.msra.mxu0 0.0
    %4466 = vmatpush.msra.mxu0 0.0
    %4467 = vmatpush.msra.mxu0 0.0
    %4468 = vmatpush.msra.mxu0 0.0
    %4469 = vmatpush.msra.mxu0 0.0
    %4470 = vmatpush.msra.mxu0 0.0
    %4471 = vmatpush.msra.mxu0 0.0
    %4472 = vmatpush.msra.mxu0 0.0
    %4473 = vmatpush.msra.mxu0 %v4019
    %4474 = vmatpush.msra.mxu0 %v4018
    %4475 = vmatpush.msra.mxu0 %v4017
    %4476 = vmatpush.msra.mxu0 %v4016
    %4477 = vmatmul.f32.gmra.mxu0 %v4459
    %v4478 = vpop.f32.mrf.mxu0
    %v4479 = vadd.f32 0.0, %v4478
    %4480 = vdwg.mxu0
    %v4481 = vadd.f32 %v3931, %v4479
    %v4482 = vxor.u32 %v4481, 2147483648
    %v4483 = vmul.f32 %v4482, 1.442695
    %v4484 = vpow.pop %v4483
    %v4485 = vadd.f32 %v4484, 1.0
    %v4486 = vrcp.pop %v4485
    %v4487 = vmul.f32 %v4485, %v4486
    %v4488 = vsub.f32 1.0, %v4487
    %v4489 = vmul.f32 %v4486, %v4488
    %v4490 = vadd.f32 %v4486, %v4489
    %vm4491 = vweird.f32 %v4485
    %vm4492 = vweird.f32 %v4486
    %vm4493 = vmor %vm4491, %vm4492
    %v4494 = vsel %vm4493, %v4486, %v4490
    %v4495 = vand.u32 2147483647, %v4485
    %vm4496 = vcmp.eq.f32.partialorder %v4495, 8.507059e+37
    %v4497 = vand.u32 %v4485, 2147483648
    %v4498 = vor.u32 1.1754944e-38, %v4497
    %v4499 = vsel %vm4496, %v4498, %v4494
    %v4500 = vmul.f32 1.0, %v4499
    %v4501 = vtanh.pop %v4481
    %v4502 = vmul.f32 %v4500, %v4449
    %4504 = vrot.lane.b32.xlu0 %v4501, 64
    %v4505 = vpop.permute.xlu0 %4504
    %v4507 = vmul.f32 %v4500, %v4505
    %4509 = vrot.lane.b32.xlu0 %v4507, 32
    %v4510 = vpop.permute.xlu0 %4509
    %v4512 = vadd.f32 %v4502, %v4510
    %v4513 = vtanh.pop %v4512
    %4515 = vrot.lane.b32.xlu0 %v4513, 64
    %v4516 = vpop.permute.xlu0 %4515
    %v4518 = vmul.f32 %v4500, %v4516
    %4520 = vrot.lane.b32.xlu0 %v4518, 32
    %v4521 = vpop.permute.xlu0 %4520
    %v4522 = vsel %vm100, %v4521, 0
    %4524 = vmatpush.msra.mxu0 0.0
    %4525 = vmatpush.msra.mxu0 0.0
    %4526 = vmatpush.msra.mxu0 0.0
    %4527 = vmatpush.msra.mxu0 0.0
    %4528 = vmatpush.msra.mxu0 0.0
    %4529 = vmatpush.msra.mxu0 0.0
    %4530 = vmatpush.msra.mxu0 0.0
    %4531 = vmatpush.msra.mxu0 0.0
    %4532 = vmatpush.msra.mxu0 0.0
    %4533 = vmatpush.msra.mxu0 0.0
    %4534 = vmatpush.msra.mxu0 0.0
    %4535 = vmatpush.msra.mxu0 0.0
    %4536 = vmatpush.msra.mxu0 %v4019
    %4537 = vmatpush.msra.mxu0 %v4018
    %4538 = vmatpush.msra.mxu0 %v4017
    %4539 = vmatpush.msra.mxu0 %v4016
    %4540 = vmatmul.f32.gmra.mxu0 %v4522
    %v4541 = vpop.f32.mrf.mxu0
    %v4542 = vadd.f32 0.0, %v4541
    %4543 = vdwg.mxu0
    %v4544 = vadd.f32 %v3934, %v4542
    %v4545 = vxor.u32 %v4544, 2147483648
    %v4546 = vmul.f32 %v4545, 1.442695
    %v4547 = vpow.pop %v4546
    %v4548 = vadd.f32 %v4547, 1.0
    %v4549 = vrcp.pop %v4548
    %v4550 = vmul.f32 %v4548, %v4549
    %v4551 = vsub.f32 1.0, %v4550
    %v4552 = vmul.f32 %v4549, %v4551
    %v4553 = vadd.f32 %v4549, %v4552
    %vm4554 = vweird.f32 %v4548
    %vm4555 = vweird.f32 %v4549
    %vm4556 = vmor %vm4554, %vm4555
    %v4557 = vsel %vm4556, %v4549, %v4553
    %v4558 = vand.u32 2147483647, %v4548
    %vm4559 = vcmp.eq.f32.partialorder %v4558, 8.507059e+37
    %v4560 = vand.u32 %v4548, 2147483648
    %v4561 = vor.u32 1.1754944e-38, %v4560
    %v4562 = vsel %vm4559, %v4561, %v4557
    %v4563 = vmul.f32 1.0, %v4562
    %v4564 = vtanh.pop %v4544
    %v4565 = vmul.f32 %v4563, %v4512
    %4567 = vrot.lane.b32.xlu0 %v4564, 64
    %v4568 = vpop.permute.xlu0 %4567
    %v4570 = vmul.f32 %v4563, %v4568
    %4572 = vrot.lane.b32.xlu0 %v4570, 32
    %v4573 = vpop.permute.xlu0 %4572
    %v4575 = vadd.f32 %v4565, %v4573
    %v4576 = vtanh.pop %v4575
    %4578 = vrot.lane.b32.xlu0 %v4576, 64
    %v4579 = vpop.permute.xlu0 %4578
    %v4581 = vmul.f32 %v4563, %v4579
    %v4582 = vld [vmem:[%s12] sm:$0xff]
    %v4583 = vld [vmem:[%s12 + $0x8] sm:$0xff]
    %v4585 = vsel %vm3806, %v3791, 0
    %4587 = vmatpush.msra.mxu0 0.0
    %4588 = vmatpush.msra.mxu0 0.0
    %4589 = vmatpush.msra.mxu0 0.0
    %4590 = vmatpush.msra.mxu0 0.0
    %4591 = vmatpush.msra.mxu0 0.0
    %4592 = vmatpush.msra.mxu0 0.0
    %4593 = vmatpush.msra.mxu0 0.0
    %4594 = vmatpush.msra.mxu0 0.0
    %4595 = vmatpush.msra.mxu0 0.0
    %4596 = vmatpush.msra.mxu0 0.0
    %4597 = vmatpush.msra.mxu0 0.0
    %4598 = vmatpush.msra.mxu0 0.0
    %4599 = vmatpush.msra.mxu0 0.0
    %4600 = vmatpush.msra.mxu0 0.0
    %4601 = vmatpush.msra.mxu0 %v4583
    %4602 = vmatpush.msra.mxu0 %v4582
    %4603 = vmatmul.f32.gmra.mxu0 %v4585
    %v4604 = vpop.f32.mrf.mxu0
    %v4605 = vadd.f32 0.0, %v4604
    %4606 = vdwg.mxu0
    %v4607 = vld [vmem:[%s13] sm:$0xff]
    %v4608 = vld [vmem:[%s13 + $0x8] sm:$0xff]
    %v4609 = vld [vmem:[%s13 + $0x10] sm:$0xff]
    %v4610 = vld [vmem:[%s13 + $0x18] sm:$0xff]
    %v4611 = vadd.f32 %v3990, %v4605
    %4613 = vrot.lane.b32.xlu0 %v4581, 32
    %v4614 = vpop.permute.xlu0 %4613
    %v4615 = vsel %vm100, %v4614, 0
    %4617 = vmatpush.msra.mxu0 0.0
    %4618 = vmatpush.msra.mxu0 0.0
    %4619 = vmatpush.msra.mxu0 0.0
    %4620 = vmatpush.msra.mxu0 0.0
    %4621 = vmatpush.msra.mxu0 0.0
    %4622 = vmatpush.msra.mxu0 0.0
    %4623 = vmatpush.msra.mxu0 0.0
    %4624 = vmatpush.msra.mxu0 0.0
    %4625 = vmatpush.msra.mxu0 0.0
    %4626 = vmatpush.msra.mxu0 0.0
    %4627 = vmatpush.msra.mxu0 0.0
    %4628 = vmatpush.msra.mxu0 0.0
    %4629 = vmatpush.msra.mxu0 %v4610
    %4630 = vmatpush.msra.mxu0 %v4609
    %4631 = vmatpush.msra.mxu0 %v4608
    %4632 = vmatpush.msra.mxu0 %v4607
    %4633 = vmatmul.f32.gmra.mxu0 %v4615
    %v4634 = vpop.f32.mrf.mxu0
    %v4635 = vadd.f32 0.0, %v4634
    %4636 = vdwg.mxu0
    %v4637 = vadd.f32 %v4611, %v4635
    %v4638 = vxor.u32 %v4637, 2147483648
    %v4639 = vmul.f32 %v4638, 1.442695
    %v4640 = vpow.pop %v4639
    %v4641 = vadd.f32 %v4640, 1.0
    %v4642 = vrcp.pop %v4641
    %v4643 = vmul.f32 %v4641, %v4642
    %v4644 = vsub.f32 1.0, %v4643
    %v4645 = vmul.f32 %v4642, %v4644
    %v4646 = vadd.f32 %v4642, %v4645
    %vm4647 = vweird.f32 %v4641
    %vm4648 = vweird.f32 %v4642
    %vm4649 = vmor %vm4647, %vm4648
    %v4650 = vsel %vm4649, %v4642, %v4646
    %v4651 = vand.u32 2147483647, %v4641
    %vm4652 = vcmp.eq.f32.partialorder %v4651, 8.507059e+37
    %v4653 = vand.u32 %v4641, 2147483648
    %v4654 = vor.u32 1.1754944e-38, %v4653
    %v4655 = vsel %vm4652, %v4654, %v4650
    %v4656 = vmul.f32 1.0, %v4655
    %v4657 = vtanh.pop %v4637
    %v4658 = vmul.f32 %v4656, %v4575
    %4660 = vrot.lane.b32.xlu0 %v4657, 64
    %v4661 = vpop.permute.xlu0 %4660
    %v4663 = vmul.f32 %v4656, %v4661
    %4665 = vrot.lane.b32.xlu0 %v4663, 32
    %v4666 = vpop.permute.xlu0 %4665
    %v4668 = vadd.f32 %v4658, %v4666
    %v4669 = vtanh.pop %v4668
    %4671 = vrot.lane.b32.xlu0 %v4669, 64
    %v4672 = vpop.permute.xlu0 %4671
    %v4674 = vmul.f32 %v4656, %v4672
    %4676 = vrot.lane.b32.xlu0 %v4674, 32
    %v4677 = vpop.permute.xlu0 %4676
    %4679 = vst.msk [vmem:[#allocation2] sm:$0xff] %vm100, %v4677
    %v4680 = vadd.f32 %v3993, %v4605
    %v4681 = vsel %vm100, %v4677, 0
    %4683 = vmatpush.msra.mxu0 0.0
    %4684 = vmatpush.msra.mxu0 0.0
    %4685 = vmatpush.msra.mxu0 0.0
    %4686 = vmatpush.msra.mxu0 0.0
    %4687 = vmatpush.msra.mxu0 0.0
    %4688 = vmatpush.msra.mxu0 0.0
    %4689 = vmatpush.msra.mxu0 0.0
    %4690 = vmatpush.msra.mxu0 0.0
    %4691 = vmatpush.msra.mxu0 0.0
    %4692 = vmatpush.msra.mxu0 0.0
    %4693 = vmatpush.msra.mxu0 0.0
    %4694 = vmatpush.msra.mxu0 0.0
    %4695 = vmatpush.msra.mxu0 %v4610
    %4696 = vmatpush.msra.mxu0 %v4609
    %4697 = vmatpush.msra.mxu0 %v4608
    %4698 = vmatpush.msra.mxu0 %v4607
    %4699 = vmatmul.f32.gmra.mxu0 %v4681
    %v4700 = vpop.f32.mrf.mxu0
    %v4701 = vadd.f32 0.0, %v4700
    %4702 = vdwg.mxu0
    %v4703 = vadd.f32 %v4680, %v4701
    %v4704 = vxor.u32 %v4703, 2147483648
    %v4705 = vmul.f32 %v4704, 1.442695
    %v4706 = vpow.pop %v4705
    %v4707 = vadd.f32 %v4706, 1.0
    %v4708 = vrcp.pop %v4707
    %v4709 = vmul.f32 %v4707, %v4708
    %v4710 = vsub.f32 1.0, %v4709
    %v4711 = vmul.f32 %v4708, %v4710
    %v4712 = vadd.f32 %v4708, %v4711
    %vm4713 = vweird.f32 %v4707
    %vm4714 = vweird.f32 %v4708
    %vm4715 = vmor %vm4713, %vm4714
    %v4716 = vsel %vm4715, %v4708, %v4712
    %v4717 = vand.u32 2147483647, %v4707
    %vm4718 = vcmp.eq.f32.partialorder %v4717, 8.507059e+37
    %v4719 = vand.u32 %v4707, 2147483648
    %v4720 = vor.u32 1.1754944e-38, %v4719
    %v4721 = vsel %vm4718, %v4720, %v4716
    %v4722 = vmul.f32 1.0, %v4721
    %v4723 = vtanh.pop %v4703
    %v4724 = vmul.f32 %v4722, %v4668
    %4726 = vrot.lane.b32.xlu0 %v4723, 64
    %v4727 = vpop.permute.xlu0 %4726
    %v4729 = vmul.f32 %v4722, %v4727
    %4731 = vrot.lane.b32.xlu0 %v4729, 32
    %v4732 = vpop.permute.xlu0 %4731
    %v4734 = vadd.f32 %v4724, %v4732
    %v4735 = vtanh.pop %v4734
    %4737 = vrot.lane.b32.xlu0 %v4735, 64
    %v4738 = vpop.permute.xlu0 %4737
    %v4740 = vmul.f32 %v4722, %v4738
    %4742 = vrot.lane.b32.xlu0 %v4740, 32
    %v4743 = vpop.permute.xlu0 %4742
    %4745 = vst.msk [vmem:[#allocation2 + $0x8] sm:$0xff] %vm100, %v4743
    %v4746 = vadd.f32 %v3996, %v4605
    %v4747 = vsel %vm100, %v4743, 0
    %4749 = vmatpush.msra.mxu0 0.0
    %4750 = vmatpush.msra.mxu0 0.0
    %4751 = vmatpush.msra.mxu0 0.0
    %4752 = vmatpush.msra.mxu0 0.0
    %4753 = vmatpush.msra.mxu0 0.0
    %4754 = vmatpush.msra.mxu0 0.0
    %4755 = vmatpush.msra.mxu0 0.0
    %4756 = vmatpush.msra.mxu0 0.0
    %4757 = vmatpush.msra.mxu0 0.0
    %4758 = vmatpush.msra.mxu0 0.0
    %4759 = vmatpush.msra.mxu0 0.0
    %4760 = vmatpush.msra.mxu0 0.0
    %4761 = vmatpush.msra.mxu0 %v4610
    %4762 = vmatpush.msra.mxu0 %v4609
    %4763 = vmatpush.msra.mxu0 %v4608
    %4764 = vmatpush.msra.mxu0 %v4607
    %4765 = vmatmul.f32.gmra.mxu0 %v4747
    %v4766 = vpop.f32.mrf.mxu0
    %v4767 = vadd.f32 0.0, %v4766
    %4768 = vdwg.mxu0
    %v4769 = vadd.f32 %v4746, %v4767
    %v4770 = vxor.u32 %v4769, 2147483648
    %v4771 = vmul.f32 %v4770, 1.442695
    %v4772 = vpow.pop %v4771
    %v4773 = vadd.f32 %v4772, 1.0
    %v4774 = vrcp.pop %v4773
    %v4775 = vmul.f32 %v4773, %v4774
    %v4776 = vsub.f32 1.0, %v4775
    %v4777 = vmul.f32 %v4774, %v4776
    %v4778 = vadd.f32 %v4774, %v4777
    %vm4779 = vweird.f32 %v4773
    %vm4780 = vweird.f32 %v4774
    %vm4781 = vmor %vm4779, %vm4780
    %v4782 = vsel %vm4781, %v4774, %v4778
    %v4783 = vand.u32 2147483647, %v4773
    %vm4784 = vcmp.eq.f32.partialorder %v4783, 8.507059e+37
    %v4785 = vand.u32 %v4773, 2147483648
    %v4786 = vor.u32 1.1754944e-38, %v4785
    %v4787 = vsel %vm4784, %v4786, %v4782
    %v4788 = vmul.f32 1.0, %v4787
    %v4789 = vtanh.pop %v4769
    %v4790 = vmul.f32 %v4788, %v4734
    %4792 = vrot.lane.b32.xlu0 %v4789, 64
    %v4793 = vpop.permute.xlu0 %4792
    %v4795 = vmul.f32 %v4788, %v4793
    %4797 = vrot.lane.b32.xlu0 %v4795, 32
    %v4798 = vpop.permute.xlu0 %4797
    %v4800 = vadd.f32 %v4790, %v4798
    %v4801 = vtanh.pop %v4800
    %4803 = vrot.lane.b32.xlu0 %v4801, 64
    %v4804 = vpop.permute.xlu0 %4803
    %v4806 = vmul.f32 %v4788, %v4804
    %4808 = vrot.lane.b32.xlu0 %v4806, 32
    %v4809 = vpop.permute.xlu0 %4808
    %4811 = vst.msk [vmem:[#allocation2 + $0x10] sm:$0xff] %vm100, %v4809
    %v4812 = vadd.f32 %v3999, %v4605
    %v4813 = vsel %vm100, %v4809, 0
    %4815 = vmatpush.msra.mxu0 0.0
    %4816 = vmatpush.msra.mxu0 0.0
    %4817 = vmatpush.msra.mxu0 0.0
    %4818 = vmatpush.msra.mxu0 0.0
    %4819 = vmatpush.msra.mxu0 0.0
    %4820 = vmatpush.msra.mxu0 0.0
    %4821 = vmatpush.msra.mxu0 0.0
    %4822 = vmatpush.msra.mxu0 0.0
    %4823 = vmatpush.msra.mxu0 0.0
    %4824 = vmatpush.msra.mxu0 0.0
    %4825 = vmatpush.msra.mxu0 0.0
    %4826 = vmatpush.msra.mxu0 0.0
    %4827 = vmatpush.msra.mxu0 %v4610
    %4828 = vmatpush.msra.mxu0 %v4609
    %4829 = vmatpush.msra.mxu0 %v4608
    %4830 = vmatpush.msra.mxu0 %v4607
    %4831 = vmatmul.f32.gmra.mxu0 %v4813
    %v4832 = vpop.f32.mrf.mxu0
    %v4833 = vadd.f32 0.0, %v4832
    %4834 = vdwg.mxu0
    %v4835 = vadd.f32 %v4812, %v4833
    %v4836 = vxor.u32 %v4835, 2147483648
    %v4837 = vmul.f32 %v4836, 1.442695
    %v4838 = vpow.pop %v4837
    %v4839 = vadd.f32 %v4838, 1.0
    %v4840 = vrcp.pop %v4839
    %v4841 = vmul.f32 %v4839, %v4840
    %v4842 = vsub.f32 1.0, %v4841
    %v4843 = vmul.f32 %v4840, %v4842
    %v4844 = vadd.f32 %v4840, %v4843
    %vm4845 = vweird.f32 %v4839
    %vm4846 = vweird.f32 %v4840
    %vm4847 = vmor %vm4845, %vm4846
    %v4848 = vsel %vm4847, %v4840, %v4844
    %v4849 = vand.u32 2147483647, %v4839
    %vm4850 = vcmp.eq.f32.partialorder %v4849, 8.507059e+37
    %v4851 = vand.u32 %v4839, 2147483648
    %v4852 = vor.u32 1.1754944e-38, %v4851
    %v4853 = vsel %vm4850, %v4852, %v4848
    %v4854 = vmul.f32 1.0, %v4853
    %v4855 = vtanh.pop %v4835
    %v4856 = vmul.f32 %v4854, %v4800
    %4858 = vrot.lane.b32.xlu0 %v4855, 64
    %v4859 = vpop.permute.xlu0 %4858
    %v4861 = vmul.f32 %v4854, %v4859
    %4863 = vrot.lane.b32.xlu0 %v4861, 32
    %v4864 = vpop.permute.xlu0 %4863
    %v4866 = vadd.f32 %v4856, %v4864
    %v4867 = vtanh.pop %v4866
    %4869 = vrot.lane.b32.xlu0 %v4867, 64
    %v4870 = vpop.permute.xlu0 %4869
    %v4872 = vmul.f32 %v4854, %v4870
    %4874 = vrot.lane.b32.xlu0 %v4872, 32
    %v4875 = vpop.permute.xlu0 %4874
    %4877 = vst.msk [vmem:[#allocation2 + $0x18] sm:$0xff] %vm100, %v4875
    %v4878 = vadd.f32 %v4002, %v4605
    %v4879 = vsel %vm100, %v4875, 0
    %4881 = vmatpush.msra.mxu0 0.0
    %4882 = vmatpush.msra.mxu0 0.0
    %4883 = vmatpush.msra.mxu0 0.0
    %4884 = vmatpush.msra.mxu0 0.0
    %4885 = vmatpush.msra.mxu0 0.0
    %4886 = vmatpush.msra.mxu0 0.0
    %4887 = vmatpush.msra.mxu0 0.0
    %4888 = vmatpush.msra.mxu0 0.0
    %4889 = vmatpush.msra.mxu0 0.0
    %4890 = vmatpush.msra.mxu0 0.0
    %4891 = vmatpush.msra.mxu0 0.0
    %4892 = vmatpush.msra.mxu0 0.0
    %4893 = vmatpush.msra.mxu0 %v4610
    %4894 = vmatpush.msra.mxu0 %v4609
    %4895 = vmatpush.msra.mxu0 %v4608
    %4896 = vmatpush.msra.mxu0 %v4607
    %4897 = vmatmul.f32.gmra.mxu0 %v4879
    %v4898 = vpop.f32.mrf.mxu0
    %v4899 = vadd.f32 0.0, %v4898
    %4900 = vdwg.mxu0
    %v4901 = vadd.f32 %v4878, %v4899
    %v4902 = vxor.u32 %v4901, 2147483648
    %v4903 = vmul.f32 %v4902, 1.442695
    %v4904 = vpow.pop %v4903
    %v4905 = vadd.f32 %v4904, 1.0
    %v4906 = vrcp.pop %v4905
    %v4907 = vmul.f32 %v4905, %v4906
    %v4908 = vsub.f32 1.0, %v4907
    %v4909 = vmul.f32 %v4906, %v4908
    %v4910 = vadd.f32 %v4906, %v4909
    %vm4911 = vweird.f32 %v4905
    %vm4912 = vweird.f32 %v4906
    %vm4913 = vmor %vm4911, %vm4912
    %v4914 = vsel %vm4913, %v4906, %v4910
    %v4915 = vand.u32 2147483647, %v4905
    %vm4916 = vcmp.eq.f32.partialorder %v4915, 8.507059e+37
    %v4917 = vand.u32 %v4905, 2147483648
    %v4918 = vor.u32 1.1754944e-38, %v4917
    %v4919 = vsel %vm4916, %v4918, %v4914
    %v4920 = vmul.f32 1.0, %v4919
    %v4921 = vtanh.pop %v4901
    %v4922 = vmul.f32 %v4920, %v4866
    %4924 = vrot.lane.b32.xlu0 %v4921, 64
    %v4925 = vpop.permute.xlu0 %4924
    %v4927 = vmul.f32 %v4920, %v4925
    %4929 = vrot.lane.b32.xlu0 %v4927, 32
    %v4930 = vpop.permute.xlu0 %4929
    %v4932 = vadd.f32 %v4922, %v4930
    %v4933 = vtanh.pop %v4932
    %4935 = vrot.lane.b32.xlu0 %v4933, 64
    %v4936 = vpop.permute.xlu0 %4935
    %v4938 = vmul.f32 %v4920, %v4936
    %4940 = vrot.lane.b32.xlu0 %v4938, 32
    %v4941 = vpop.permute.xlu0 %4940
    %4943 = vst.msk [vmem:[#allocation2 + $0x20] sm:$0xff] %vm100, %v4941
    %v4944 = vadd.f32 %v4005, %v4605
    %v4945 = vsel %vm100, %v4941, 0
    %4947 = vmatpush.msra.mxu0 0.0
    %4948 = vmatpush.msra.mxu0 0.0
    %4949 = vmatpush.msra.mxu0 0.0
    %4950 = vmatpush.msra.mxu0 0.0
    %4951 = vmatpush.msra.mxu0 0.0
    %4952 = vmatpush.msra.mxu0 0.0
    %4953 = vmatpush.msra.mxu0 0.0
    %4954 = vmatpush.msra.mxu0 0.0
    %4955 = vmatpush.msra.mxu0 0.0
    %4956 = vmatpush.msra.mxu0 0.0
    %4957 = vmatpush.msra.mxu0 0.0
    %4958 = vmatpush.msra.mxu0 0.0
    %4959 = vmatpush.msra.mxu0 %v4610
    %4960 = vmatpush.msra.mxu0 %v4609
    %4961 = vmatpush.msra.mxu0 %v4608
    %4962 = vmatpush.msra.mxu0 %v4607
    %4963 = vmatmul.f32.gmra.mxu0 %v4945
    %v4964 = vpop.f32.mrf.mxu0
    %v4965 = vadd.f32 0.0, %v4964
    %4966 = vdwg.mxu0
    %v4967 = vadd.f32 %v4944, %v4965
    %v4968 = vxor.u32 %v4967, 2147483648
    %v4969 = vmul.f32 %v4968, 1.442695
    %v4970 = vpow.pop %v4969
    %v4971 = vadd.f32 %v4970, 1.0
    %v4972 = vrcp.pop %v4971
    %v4973 = vmul.f32 %v4971, %v4972
    %v4974 = vsub.f32 1.0, %v4973
    %v4975 = vmul.f32 %v4972, %v4974
    %v4976 = vadd.f32 %v4972, %v4975
    %vm4977 = vweird.f32 %v4971
    %vm4978 = vweird.f32 %v4972
    %vm4979 = vmor %vm4977, %vm4978
    %v4980 = vsel %vm4979, %v4972, %v4976
    %v4981 = vand.u32 2147483647, %v4971
    %vm4982 = vcmp.eq.f32.partialorder %v4981, 8.507059e+37
    %v4983 = vand.u32 %v4971, 2147483648
    %v4984 = vor.u32 1.1754944e-38, %v4983
    %v4985 = vsel %vm4982, %v4984, %v4980
    %v4986 = vmul.f32 1.0, %v4985
    %v4987 = vtanh.pop %v4967
    %v4988 = vmul.f32 %v4986, %v4932
    %4990 = vrot.lane.b32.xlu0 %v4987, 64
    %v4991 = vpop.permute.xlu0 %4990
    %v4993 = vmul.f32 %v4986, %v4991
    %4995 = vrot.lane.b32.xlu0 %v4993, 32
    %v4996 = vpop.permute.xlu0 %4995
    %v4998 = vadd.f32 %v4988, %v4996
    %v4999 = vtanh.pop %v4998
    %5001 = vrot.lane.b32.xlu0 %v4999, 64
    %v5002 = vpop.permute.xlu0 %5001
    %v5004 = vmul.f32 %v4986, %v5002
    %5006 = vrot.lane.b32.xlu0 %v5004, 32
    %v5007 = vpop.permute.xlu0 %5006
    %5009 = vst.msk [vmem:[#allocation2 + $0x28] sm:$0xff] %vm100, %v5007
    %v5010 = vadd.f32 %v4008, %v4605
    %v5011 = vsel %vm100, %v5007, 0
    %5013 = vmatpush.msra.mxu0 0.0
    %5014 = vmatpush.msra.mxu0 0.0
    %5015 = vmatpush.msra.mxu0 0.0
    %5016 = vmatpush.msra.mxu0 0.0
    %5017 = vmatpush.msra.mxu0 0.0
    %5018 = vmatpush.msra.mxu0 0.0
    %5019 = vmatpush.msra.mxu0 0.0
    %5020 = vmatpush.msra.mxu0 0.0
    %5021 = vmatpush.msra.mxu0 0.0
    %5022 = vmatpush.msra.mxu0 0.0
    %5023 = vmatpush.msra.mxu0 0.0
    %5024 = vmatpush.msra.mxu0 0.0
    %5025 = vmatpush.msra.mxu0 %v4610
    %5026 = vmatpush.msra.mxu0 %v4609
    %5027 = vmatpush.msra.mxu0 %v4608
    %5028 = vmatpush.msra.mxu0 %v4607
    %5029 = vmatmul.f32.gmra.mxu0 %v5011
    %v5030 = vpop.f32.mrf.mxu0
    %v5031 = vadd.f32 0.0, %v5030
    %5032 = vdwg.mxu0
    %v5033 = vadd.f32 %v5010, %v5031
    %v5034 = vxor.u32 %v5033, 2147483648
    %v5035 = vmul.f32 %v5034, 1.442695
    %v5036 = vpow.pop %v5035
    %v5037 = vadd.f32 %v5036, 1.0
    %v5038 = vrcp.pop %v5037
    %v5039 = vmul.f32 %v5037, %v5038
    %v5040 = vsub.f32 1.0, %v5039
    %v5041 = vmul.f32 %v5038, %v5040
    %v5042 = vadd.f32 %v5038, %v5041
    %vm5043 = vweird.f32 %v5037
    %vm5044 = vweird.f32 %v5038
    %vm5045 = vmor %vm5043, %vm5044
    %v5046 = vsel %vm5045, %v5038, %v5042
    %v5047 = vand.u32 2147483647, %v5037
    %vm5048 = vcmp.eq.f32.partialorder %v5047, 8.507059e+37
    %v5049 = vand.u32 %v5037, 2147483648
    %v5050 = vor.u32 1.1754944e-38, %v5049
    %v5051 = vsel %vm5048, %v5050, %v5046
    %v5052 = vmul.f32 1.0, %v5051
    %v5053 = vtanh.pop %v5033
    %v5054 = vmul.f32 %v5052, %v4998
    %5056 = vrot.lane.b32.xlu0 %v5053, 64
    %v5057 = vpop.permute.xlu0 %5056
    %v5059 = vmul.f32 %v5052, %v5057
    %5061 = vrot.lane.b32.xlu0 %v5059, 32
    %v5062 = vpop.permute.xlu0 %5061
    %v5064 = vadd.f32 %v5054, %v5062
    %v5065 = vtanh.pop %v5064
    %5067 = vrot.lane.b32.xlu0 %v5065, 64
    %v5068 = vpop.permute.xlu0 %5067
    %v5070 = vmul.f32 %v5052, %v5068
    %5072 = vrot.lane.b32.xlu0 %v5070, 32
    %v5073 = vpop.permute.xlu0 %5072
    %5075 = vst.msk [vmem:[#allocation2 + $0x30] sm:$0xff] %vm100, %v5073
    %v5076 = vadd.f32 %v4011, %v4605
    %v5077 = vsel %vm100, %v5073, 0
    %5079 = vmatpush.msra.mxu0 0.0
    %5080 = vmatpush.msra.mxu0 0.0
    %5081 = vmatpush.msra.mxu0 0.0
    %5082 = vmatpush.msra.mxu0 0.0
    %5083 = vmatpush.msra.mxu0 0.0
    %5084 = vmatpush.msra.mxu0 0.0
    %5085 = vmatpush.msra.mxu0 0.0
    %5086 = vmatpush.msra.mxu0 0.0
    %5087 = vmatpush.msra.mxu0 0.0
    %5088 = vmatpush.msra.mxu0 0.0
    %5089 = vmatpush.msra.mxu0 0.0
    %5090 = vmatpush.msra.mxu0 0.0
    %5091 = vmatpush.msra.mxu0 %v4610
    %5092 = vmatpush.msra.mxu0 %v4609
    %5093 = vmatpush.msra.mxu0 %v4608
    %5094 = vmatpush.msra.mxu0 %v4607
    %5095 = vmatmul.f32.gmra.mxu0 %v5077
    %v5096 = vpop.f32.mrf.mxu0
    %v5097 = vadd.f32 0.0, %v5096
    %5098 = vdwg.mxu0
    %v5099 = vadd.f32 %v5076, %v5097
    %v5100 = vxor.u32 %v5099, 2147483648
    %v5101 = vmul.f32 %v5100, 1.442695
    %v5102 = vpow.pop %v5101
    %v5103 = vadd.f32 %v5102, 1.0
    %v5104 = vrcp.pop %v5103
    %v5105 = vmul.f32 %v5103, %v5104
    %v5106 = vsub.f32 1.0, %v5105
    %v5107 = vmul.f32 %v5104, %v5106
    %v5108 = vadd.f32 %v5104, %v5107
    %vm5109 = vweird.f32 %v5103
    %vm5110 = vweird.f32 %v5104
    %vm5111 = vmor %vm5109, %vm5110
    %v5112 = vsel %vm5111, %v5104, %v5108
    %v5113 = vand.u32 2147483647, %v5103
    %vm5114 = vcmp.eq.f32.partialorder %v5113, 8.507059e+37
    %v5115 = vand.u32 %v5103, 2147483648
    %v5116 = vor.u32 1.1754944e-38, %v5115
    %v5117 = vsel %vm5114, %v5116, %v5112
    %v5118 = vmul.f32 1.0, %v5117
    %v5119 = vtanh.pop %v5099
    %v5120 = vmul.f32 %v5118, %v5064
    %5122 = vrot.lane.b32.xlu0 %v5119, 64
    %v5123 = vpop.permute.xlu0 %5122
    %v5125 = vmul.f32 %v5118, %v5123
    %5127 = vrot.lane.b32.xlu0 %v5125, 32
    %v5128 = vpop.permute.xlu0 %5127
    %v5130 = vadd.f32 %v5120, %v5128
    %v5131 = vtanh.pop %v5130
    %5133 = vrot.lane.b32.xlu0 %v5131, 64
    %v5134 = vpop.permute.xlu0 %5133
    %v5136 = vmul.f32 %v5118, %v5134
    %5138 = vrot.lane.b32.xlu0 %v5136, 32
    %v5139 = vpop.permute.xlu0 %5138
    %5141 = vst.msk [vmem:[#allocation2 + $0x38] sm:$0xff] %vm100, %v5139
    %v5142 = vadd.f32 %v4014, %v4605
    %v5143 = vsel %vm100, %v5139, 0
    %5145 = vmatpush.msra.mxu0 0.0
    %5146 = vmatpush.msra.mxu0 0.0
    %5147 = vmatpush.msra.mxu0 0.0
    %5148 = vmatpush.msra.mxu0 0.0
    %5149 = vmatpush.msra.mxu0 0.0
    %5150 = vmatpush.msra.mxu0 0.0
    %5151 = vmatpush.msra.mxu0 0.0
    %5152 = vmatpush.msra.mxu0 0.0
    %5153 = vmatpush.msra.mxu0 0.0
    %5154 = vmatpush.msra.mxu0 0.0
    %5155 = vmatpush.msra.mxu0 0.0
    %5156 = vmatpush.msra.mxu0 0.0
    %5157 = vmatpush.msra.mxu0 %v4610
    %5158 = vmatpush.msra.mxu0 %v4609
    %5159 = vmatpush.msra.mxu0 %v4608
    %5160 = vmatpush.msra.mxu0 %v4607
    %5161 = vmatmul.f32.gmra.mxu0 %v5143
    %v5162 = vpop.f32.mrf.mxu0
    %v5163 = vadd.f32 0.0, %v5162
    %5164 = vdwg.mxu0
    %v5165 = vadd.f32 %v5142, %v5163
    %v5166 = vxor.u32 %v5165, 2147483648
    %v5167 = vmul.f32 %v5166, 1.442695
    %v5168 = vpow.pop %v5167
    %v5169 = vadd.f32 %v5168, 1.0
    %v5170 = vrcp.pop %v5169
    %v5171 = vmul.f32 %v5169, %v5170
    %v5172 = vsub.f32 1.0, %v5171
    %v5173 = vmul.f32 %v5170, %v5172
    %v5174 = vadd.f32 %v5170, %v5173
    %vm5175 = vweird.f32 %v5169
    %vm5176 = vweird.f32 %v5170
    %vm5177 = vmor %vm5175, %vm5176
    %v5178 = vsel %vm5177, %v5170, %v5174
    %v5179 = vand.u32 2147483647, %v5169
    %vm5180 = vcmp.eq.f32.partialorder %v5179, 8.507059e+37
    %v5181 = vand.u32 %v5169, 2147483648
    %v5182 = vor.u32 1.1754944e-38, %v5181
    %v5183 = vsel %vm5180, %v5182, %v5178
    %v5184 = vmul.f32 1.0, %v5183
    %v5185 = vtanh.pop %v5165
    %v5186 = vmul.f32 %v5184, %v5130
    %5188 = vrot.lane.b32.xlu0 %v5185, 64
    %v5189 = vpop.permute.xlu0 %5188
    %v5191 = vmul.f32 %v5184, %v5189
    %5193 = vrot.lane.b32.xlu0 %v5191, 32
    %v5194 = vpop.permute.xlu0 %5193
    %v5196 = vadd.f32 %v5186, %v5194
    %v5197 = vtanh.pop %v5196
    %5199 = vrot.lane.b32.xlu0 %v5197, 64
    %v5200 = vpop.permute.xlu0 %5199
    %v5202 = vmul.f32 %v5184, %v5200
    %5204 = vrot.lane.b32.xlu0 %v5202, 32
    %v5205 = vpop.permute.xlu0 %5204
    %5207 = vst.msk [vmem:[#allocation2 + $0x40] sm:$0xff] %vm100, %v5205
    %5208 = vst.msk [vmem:[%s17] sm:$0xff] %vm100, %v5205
    %5210 = vrot.lane.b32.xlu0 %v5196, 96
    %v5211 = vpop.permute.xlu0 %5210
    %5213 = vst.msk [vmem:[%s18] sm:$0xff] %vm100, %v5211
    %v5214 = vld [vmem:[#allocation2] sm:$0xff]
    %v5215 = vld [vmem:[#allocation2 + $0x8] sm:$0xff]
    %v5216 = vld [vmem:[#allocation2 + $0x10] sm:$0xff]
    %v5217 = vld [vmem:[#allocation2 + $0x18] sm:$0xff]
    %v5218 = vld [vmem:[#allocation2 + $0x20] sm:$0xff]
    %v5219 = vld [vmem:[#allocation2 + $0x28] sm:$0xff]
    %v5220 = vld [vmem:[#allocation2 + $0x30] sm:$0xff]
    %v5221 = vld [vmem:[#allocation2 + $0x38] sm:$0xff]
    %v5222 = vld [vmem:[#allocation2 + $0x40] sm:$0xff]
    %v5223 = vld [vmem:[%s14] sm:$0xff]
    %v5224 = vld [vmem:[%s14 + $0x8] sm:$0xff]
    %v5225 = vld [vmem:[%s14 + $0x10] sm:$0xff]
    %v5226 = vld [vmem:[%s14 + $0x18] sm:$0xff]
    %v5227 = vld [vmem:[%s15] sm:$0x1]
    %v5229 = vperm.slane %v5227, 0
    %v5232 = vsel %vm100, %v5214, 0
    %v5235 = vsel %vm100, %v5215, 0
    %v5238 = vsel %vm100, %v5216, 0
    %v5241 = vsel %vm100, %v5217, 0
    %v5244 = vsel %vm100, %v5218, 0
    %v5247 = vsel %vm100, %v5219, 0
    %v5250 = vsel %vm100, %v5220, 0
    %v5253 = vsel %vm100, %v5221, 0
    %v5256 = vsel %vm100, %v5222, 0
    %5258 = vmatpush.msra.mxu0 0.0
    %5259 = vmatpush.msra.mxu0 0.0
    %5260 = vmatpush.msra.mxu0 0.0
    %5261 = vmatpush.msra.mxu0 0.0
    %5262 = vmatpush.msra.mxu0 0.0
    %5263 = vmatpush.msra.mxu0 0.0
    %5264 = vmatpush.msra.mxu0 0.0
    %5265 = vmatpush.msra.mxu0 0.0
    %5266 = vmatpush.msra.mxu0 0.0
    %5267 = vmatpush.msra.mxu0 0.0
    %5268 = vmatpush.msra.mxu0 0.0
    %5269 = vmatpush.msra.mxu0 0.0
    %5270 = vmatpush.msra.mxu0 %v5226
    %5271 = vmatpush.msra.mxu0 %v5225
    %5272 = vmatpush.msra.mxu0 %v5224
    %5273 = vmatpush.msra.mxu0 %v5223
    %5274 = vmatmul.f32.gmra.mxu0 %v5232
    %v5275 = vpop.f32.mrf.mxu0
    %v5276 = vadd.f32 %v5229, %v5275
    %5277 = vmatmul.f32.gmra.mxu0 %v5235
    %v5278 = vpop.f32.mrf.mxu0
    %v5279 = vadd.f32 %v5229, %v5278
    %5280 = vmatmul.f32.gmra.mxu0 %v5238
    %v5281 = vpop.f32.mrf.mxu0
    %v5282 = vadd.f32 %v5229, %v5281
    %5283 = vmatmul.f32.gmra.mxu0 %v5241
    %v5284 = vpop.f32.mrf.mxu0
    %v5285 = vadd.f32 %v5229, %v5284
    %5286 = vmatmul.f32.gmra.mxu0 %v5244
    %v5287 = vpop.f32.mrf.mxu0
    %v5288 = vadd.f32 %v5229, %v5287
    %5289 = vmatmul.f32.gmra.mxu0 %v5247
    %v5290 = vpop.f32.mrf.mxu0
    %v5291 = vadd.f32 %v5229, %v5290
    %5292 = vmatmul.f32.gmra.mxu0 %v5250
    %v5293 = vpop.f32.mrf.mxu0
    %v5294 = vadd.f32 %v5229, %v5293
    %5295 = vmatmul.f32.gmra.mxu0 %v5253
    %v5296 = vpop.f32.mrf.mxu0
    %v5297 = vadd.f32 %v5229, %v5296
    %5298 = vmatmul.f32.gmra.mxu0 %v5256
    %v5299 = vpop.f32.mrf.mxu0
    %v5300 = vadd.f32 %v5229, %v5299
    %5301 = vdwg.mxu0
    %5302 = vst [vmem:[%s16] sm:$0xff] %v5276
    %5303 = vst [vmem:[%s16 + $0x8] sm:$0xff] %v5279
    %5304 = vst [vmem:[%s16 + $0x10] sm:$0xff] %v5282
    %5305 = vst [vmem:[%s16 + $0x18] sm:$0xff] %v5285
    %5306 = vst [vmem:[%s16 + $0x20] sm:$0xff] %v5288
    %5307 = vst [vmem:[%s16 + $0x28] sm:$0xff] %v5291
    %5308 = vst [vmem:[%s16 + $0x30] sm:$0xff] %v5294
    %5309 = vst [vmem:[%s16 + $0x38] sm:$0xff] %v5297
    %5310 = vst [vmem:[%s16 + $0x40] sm:$0xff] %v5300
    // Predicated region
    $region66: #{paraphraser_forward.3} parent=1 // pred_check
      _
    $region67: #{paraphraser_forward.3} parent=1 // pred_check_branch
      %5312 = sbr.rel (0) target = $region69
    $region68: #{paraphraser_forward.3} parent=1 // pred_region
      _
    $region69: #{paraphraser_forward.3} parent=1 // pred_fallthru
      _
    // Predicated region
    $region70: #{paraphraser_forward.3} parent=1 // pred_check
      _
    $region71: #{paraphraser_forward.3} parent=1 // pred_check_branch
      %5314 = sbr.rel (0) target = $region73
    $region72: #{paraphraser_forward.3} parent=1 // pred_region
      _
    $region73: #{paraphraser_forward.3} parent=1 // pred_fallthru
      _
    // Predicated region
    $region74: #{paraphraser_forward.3} parent=1 // pred_check
      _
    $region75: #{paraphraser_forward.3} parent=1 // pred_check_branch
      %5316 = sbr.rel (0) target = $region77
    $region76: #{paraphraser_forward.3} parent=1 // pred_region
      _
    $region77: #{paraphraser_forward.3} parent=1 // pred_fallthru
      _
    // Predicated region
    $region78: #{paraphraser_forward.3} parent=1 // pred_check
      _
    $region79: #{paraphraser_forward.3} parent=1 // pred_check_branch
      %5318 = sbr.rel (0) target = $region81
    $region80: #{paraphraser_forward.3} parent=1 // pred_region
      %5320 = vsyncadd [#allocation4], 0
      %s5322 = sshll.u32 [#allocation3], 4
      %s5323 = int_to_ptr.vmem [resolvable:$true] %s5322
      %s5324 = sshll.u32 %s19, 4
      %s5325 = int_to_ptr.hbm [resolvable:$true] %s5324
      %5327 = dma.vmem_to_hbm [thread:$0]  %s5323, 16, %s5325, [#allocation4]
    $region81: #{paraphraser_forward.3} parent=1 // pred_fallthru
      _
    // Predicated region
    $region82: #{paraphraser_forward.3} parent=1 // pred_check
      _
    $region83: #{paraphraser_forward.3} parent=1 // pred_check_branch
      %5329 = sbr.rel (0) target = $region85
    $region84: #{paraphraser_forward.3} parent=1 // pred_region
      _
    $region85: #{paraphraser_forward.3} parent=1 // pred_fallthru
      _
    // Predicated region
    $region86: #{paraphraser_forward.3} parent=1 // pred_check
      _
    $region87: #{paraphraser_forward.3} parent=1 // pred_check_branch
      %5331 = sbr.rel (0) target = $region89
    $region88: #{paraphraser_forward.3} parent=1 // pred_region
      _
    $region89: #{paraphraser_forward.3} parent=1 // pred_fallthru
      _
    // Predicated region
    $region90: #{paraphraser_forward.3} parent=1 // pred_check
      _
    $region91: #{paraphraser_forward.3} parent=1 // pred_check_branch
      %5333 = sbr.rel (0) target = $region93
    $region92: #{paraphraser_forward.3} parent=1 // pred_region
      _
    $region93: #{paraphraser_forward.3} parent=1 // pred_fallthru
      _
    // Predicated region
    $region94: #{paraphraser_forward.3} parent=1 // pred_check
      _
    $region95: #{paraphraser_forward.3} parent=1 // pred_check_branch
      %5335 = sbr.rel (0) target = $region97
    $region96: #{paraphraser_forward.3} parent=1 // pred_region
      %5337 = dma.done [#allocation4], 16
    $region97: #{paraphraser_forward.3} parent=1 // pred_fallthru
      _
    %5338 = vsyncpa [#allocation4], 1

</llo_original>
